<compile_context>
chip_gen: v5e
topology: v5e:2x2
jax: 0.10.0
libtpu: 0.0.40
codegen_flags: <defaults>
</compile_context>

<pallas_src>
import functools

import jax
import jax.numpy as jnp
from jax import lax
from jax.experimental import pallas as pl
from jax.experimental.pallas import tpu as pltpu


# ============================================================================
# Fused kernel factory (all shapes/offsets are static Python ints).
# ============================================================================
def _make_fused_kernel(B, H, W, chans, n_fc, final_pool):
    n_conv = len(chans) - 1
    Wp = W + 2                         # padded row pitch
    PADN = (H + 2) * Wp                # flattened padded image length
    Q = (H - 1) * Wp + W               # conv-output columns per image (incl. wrap junk)
    if final_pool:
        Ph, Pw, stride = H // 2, W // 2, 2
        pool_offs = (0, 1, Wp, Wp + 1)
    else:
        Ph, Pw, stride = H, W, 1
        pool_offs = (0,)
    L = stride * (Ph - 1) * Wp + stride * (Pw - 1) + 1   # classifier window length

    def kernel(*refs):
        x_ref, mask_ref = refs[0], refs[1]
        conv_refs = refs[2:2 + 2 * n_conv]
        fc_refs = refs[2 + 2 * n_conv:2 + 2 * n_conv + 2 * n_fc]
        o_ref = refs[2 + 2 * n_conv + 2 * n_fc]
        scratch = refs[2 + 2 * n_conv + 2 * n_fc + 1:]
        pad_refs = scratch[:n_conv]
        slab_refs = scratch[n_conv:2 * n_conv]
        ys_refs = scratch[2 * n_conv:3 * n_conv]

        # ---- place the NCHW input into the first zero-padded flat buffer ----
        pad_refs[0][...] = jnp.zeros(pad_refs[0].shape, pad_refs[0].dtype)
        for hh in range(H):
            pad_refs[0][:, :, pl.ds((hh + 1) * Wp + 1, W)] = x_ref[:, :, hh, :]

        # ---- conv stack: each layer is ONE im2col GEMM on the MXU ------------
        for l in range(n_conv):
            cin, cout = chans[l], chans[l + 1]
            wt_ref, cb_ref = conv_refs[2 * l], conv_refs[2 * l + 1]
            pad_ref, slab_ref, ys_ref = pad_refs[l], slab_refs[l], ys_refs[l]

            # im2col: the 9 halo taps are contiguous lane windows of the flat
            # padded image -> (9*cin, B*Q) slab (K on sublanes, spatial on lanes).
            for dy in range(3):
                for dx in range(3):
                    tap = dy * 3 + dx
                    off = dy * Wp + dx
                    for b in range(B):
                        slab_ref[pl.ds(tap * cin, cin), pl.ds(b * Q, Q)] = (
                            pad_ref[b, :, pl.ds(off, Q)])

            # (cout, 9*cin) @ (9*cin, B*Q): lane axis = B*Q -> dense vregs.
            y = jnp.dot(wt_ref[...], slab_ref[...],
                        preferred_element_type=jnp.float32)
            y = jnp.maximum(y + cb_ref[...], 0.0)            # bias + fused ReLU

            if l + 1 < n_conv:
                # kill wrap-around columns, scatter into next padded buffer
                y = y * mask_ref[...]
                ys_ref[...] = y
                nxt = pad_refs[l + 1]
                nxt[...] = jnp.zeros(nxt.shape, nxt.dtype)
                for b in range(B):
                    nxt[b, :, pl.ds(Wp + 1, Q)] = ys_ref[:, pl.ds(b * Q, Q)]
            else:
                ys_ref[...] = y

        # ---- fused MaxPool2x2 + classifier (per image) -----------------------
        y_last = ys_refs[-1]
        c_last = chans[-1]
        for b in range(B):
            base = b * Q
            # max over the 4 pooling offsets; un-pooled columns are ignored by
            # the zero rows of the expanded FC1 weight.
            p = y_last[:, pl.ds(base + pool_offs[0], L)]
            for s in pool_offs[1:]:
                p = jnp.maximum(p, y_last[:, pl.ds(base + s, L)])

            # FC1: contraction over (channel, spatial) split per channel so it
            # stays a plain 2-D MXU GEMM; NCHW flatten order is in the weight.
            w1_ref, b1_ref = fc_refs[0], fc_refs[1]
            act = b1_ref[...]                                # (1, hidden)
            for c in range(c_last):
                act = act + jnp.dot(p[c:c + 1, :], w1_ref[c],
                                    preferred_element_type=jnp.float32)
            if n_fc > 1:
                act = jnp.maximum(act, 0.0)
            for i in range(1, n_fc):
                wi_ref, bi_ref = fc_refs[2 * i], fc_refs[2 * i + 1]
                act = jnp.dot(act, wi_ref[...],
                              preferred_element_type=jnp.float32) + bi_ref[...]
                if i < n_fc - 1:
                    act = jnp.maximum(act, 0.0)
            o_ref[pl.ds(b, 1), :] = act.astype(o_ref.dtype)

    return kernel, dict(Wp=Wp, PADN=PADN, Q=Q, L=L)


# ============================================================================
# Wrapper: one pallas_call, zero XLA glue on the activation path.
# ============================================================================
def conv_classifier_forward(kparams, x, *, final_pool):
    B, C0, H, W = x.shape
    conv_k, fc_k = kparams["conv"], kparams["fc"]
    n_conv, n_fc = len(conv_k), len(fc_k)
    chans = [C0] + [wt.shape[0] for wt, _ in conv_k]
    out_dim = fc_k[-1][0].shape[-1]

    kernel, dims = _make_fused_kernel(B, H, W, chans, n_fc, final_pool)
    Wp, PADN, Q = dims["Wp"], dims["PADN"], dims["Q"]
    NCOLS = B * Q

    # constant validity mask for wrap-around columns (constant-folded by XLA)
    col = jnp.arange(NCOLS, dtype=jnp.int32)
    colmask = (((col % Q) % Wp) < W).astype(x.dtype)[None, :]

    flat = [x, colmask]
    for wt, bc in conv_k:
        flat += [wt, bc]
    for w, bb in fc_k:
        flat += [w, bb]

    scratch = (
        [pltpu.VMEM((B, chans[l], PADN), jnp.float32) for l in range(n_conv)]     # padded acts
        + [pltpu.VMEM((9 * chans[l], NCOLS), jnp.float32) for l in range(n_conv)]  # im2col slabs
        + [pltpu.VMEM((chans[l + 1], NCOLS), jnp.float32) for l in range(n_conv)]  # conv outputs
    )

    return pl.pallas_call(
        kernel,
        out_shape=jax.ShapeDtypeStruct((B, out_dim), x.dtype),
        scratch_shapes=scratch,
    )(*flat)


# ============================================================================
# Parameters: PyTorch-native layouts + one-time re-layout for the kernel.
# ============================================================================
def init_params(key, in_size, out_classes, filters, pool_every, hidden_dims):
    C, H, W = in_size
    params = {"conv": [], "fc": []}
    prev_c, h, w = C, H, W
    for idx, nc in enumerate(filters, 1):
        key, k1, k2 = jax.random.split(key, 3)
        wc = jax.random.normal(k1, (nc, prev_c, 3, 3), jnp.float32) * 0.1
        bc = jax.random.normal(k2, (nc,), jnp.float32) * 0.1
        params["conv"].append((wc, bc))
        prev_c = nc
        if idx % pool_every == 0:
            h, w = h // 2, w // 2
    prev_d = prev_c * h * w                      # features_num
    for d in list(hidden_dims) + [out_classes]:
        key, k1, k2 = jax.random.split(key, 3)
        wl = jax.random.normal(k1, (d, prev_d), jnp.float32) * 0.05
        bl = jax.random.normal(k2, (d,), jnp.float32) * 0.05
        params["fc"].append((wl, bl))
        prev_d = d
    return params


def prepare_params(params, in_size, pool_every):
    """One-time re-layout of PyTorch-shaped parameters for the fused kernel."""
    C0, H, W = in_size
    n_conv = len(params["conv"])
    n_pool = n_conv // pool_every
    assert n_pool == 0 or n_conv == pool_every, "unsupported conv/pool layout"
    final_pool = n_pool == 1
    Wp = W + 2

    conv_k = []
    for w, b in params["conv"]:
        cout, cin = w.shape[0], w.shape[1]
        # taps on the K axis, ordered (dy, dx, cin) to match the im2col slab
        wt = jnp.transpose(w, (0, 2, 3, 1)).reshape(cout, 9 * cin)
        conv_k.append((wt, b.reshape(cout, 1)))

    c_last = params["conv"][-1][0].shape[0]
    if final_pool:
        Ph, Pw, stride = H // 2, W // 2, 2
    else:
        Ph, Pw, stride = H, W, 1
    L = stride * (Ph - 1) * Wp + stride * (Pw - 1) + 1

    # Expanded FC1 weight: nonzero rows only at pooled-window positions; folds
    # the pooled-column selection and PyTorch's NCHW flatten order into a weight.
    w1, b1 = params["fc"][0]
    hid = w1.shape[0]
    w1_t = w1.T.reshape(c_last, Ph, Pw, hid)                 # (c, i, j, n)
    q_idx = (stride * jnp.arange(Ph) * Wp)[:, None] + (stride * jnp.arange(Pw))[None, :]
    w1e = (jnp.zeros((c_last, L, hid), jnp.float32)
           .at[:, q_idx.reshape(-1), :]
           .set(w1_t.reshape(c_last, Ph * Pw, hid)))
    fc_k = [(w1e, b1.reshape(1, -1))]
    for w, b in params["fc"][1:]:
        fc_k.append((w.T, b.reshape(1, -1)))

    return {"conv": conv_k, "fc": fc_k}, final_pool


# ============================================================================
# Pure-JAX reference (mirrors the PyTorch module) for a numerical self-check.
# ============================================================================
def reference_forward(params, x, pool_every):
    y = x
    for idx, (w, b) in enumerate(params["conv"], 1):
        y = lax.conv_general_dilated(
            y, w, (1, 1), [(1, 1), (1, 1)],
            dimension_numbers=("NCHW", "OIHW", "NCHW"),
            precision=lax.Precision.HIGHEST)
        y = jnp.maximum(y + b.reshape(1, -1, 1, 1), 0.0)
        if idx % pool_every == 0:
            y = lax.reduce_window(y, -jnp.inf, lax.max,
                                  (1, 1, 2, 2), (1, 1, 2, 2), "VALID")
    feats = y.reshape(y.shape[0], -1)                         # NCHW flatten
    n_fc = len(params["fc"])
    for i, (w, b) in enumerate(params["fc"]):
        feats = jnp.dot(feats, w.T, precision=lax.Precision.HIGHEST) + b
        if i < n_fc - 1:
            feats = jnp.maximum(feats, 0.0)
    return feats


if __name__ == "__main__":
    in_size = (4, 16, 16)        # (C, H, W)
    out_classes = 10
    filters = [8, 8]
    pool_every = 2
    hidden_dims = [32]
    batch = 2

    key = jax.random.PRNGKey(0)
    kx, kp = jax.random.split(key)
    x = jax.random.normal(kx, (batch,) + in_size, jnp.float32)   # NCHW like PyTorch
    params = init_params(kp, in_size, out_classes, filters, pool_every, hidden_dims)
    kparams, final_pool = prepare_params(params, in_size, pool_every)

    fwd = jax.jit(functools.partial(conv_classifier_forward, final_pool=final_pool))
    out = fwd(kparams, x)
    jax.block_until_ready(out)

    assert out.shape == (batch, out_classes)
    assert bool(jnp.all(jnp.isfinite(out)))

    ref = jax.jit(functools.partial(reference_forward, pool_every=pool_every))(params, x)
    assert bool(jnp.allclose(out, ref, atol=1e-2, rtol=1e-2)), (
        f"mismatch vs reference, max abs err = {float(jnp.max(jnp.abs(out - ref)))}")
    print("KERNEL_OK")
</pallas_src>

<mosaic_0001>
module attributes {stable_mosaic.version = 11 : i64} {
  func.func @kernel(%arg0: memref<2x4x16x16xf32, #tpu.memory_space<vmem>>, %arg1: memref<1x572xf32, #tpu.memory_space<vmem>>, %arg2: memref<8x36xf32, #tpu.memory_space<vmem>>, %arg3: memref<8x1xf32, #tpu.memory_space<vmem>>, %arg4: memref<8x72xf32, #tpu.memory_space<vmem>>, %arg5: memref<8x1xf32, #tpu.memory_space<vmem>>, %arg6: memref<8x267x32xf32, #tpu.memory_space<vmem>>, %arg7: memref<1x32xf32, #tpu.memory_space<vmem>>, %arg8: memref<32x10xf32, #tpu.memory_space<vmem>>, %arg9: memref<1x10xf32, #tpu.memory_space<vmem>>, %arg10: memref<2x10xf32, #tpu.memory_space<vmem>>, %arg11: memref<2x4x324xf32, #tpu.memory_space<vmem>>, %arg12: memref<2x8x324xf32, #tpu.memory_space<vmem>>, %arg13: memref<36x572xf32, #tpu.memory_space<vmem>>, %arg14: memref<72x572xf32, #tpu.memory_space<vmem>>, %arg15: memref<8x572xf32, #tpu.memory_space<vmem>>, %arg16: memref<8x572xf32, #tpu.memory_space<vmem>>) attributes {dimension_semantics = [], scalar_prefetch = 0 : i64, scratch_operands = 6 : i64, tpu.core_type = #tpu.core_type<tc>} {
    %cst = arith.constant 0.000000e+00 : f32
    %0 = vector.broadcast %cst : f32 to vector<2x4x324xf32>
    %c0 = arith.constant 0 : index
    %c0_0 = arith.constant 0 : index
    %c0_1 = arith.constant 0 : index
    %1 = vector.load %arg11[%c0, %c0_0, %c0_1] : memref<2x4x324xf32, #tpu.memory_space<vmem>>, vector<2x4x324xf32>
    tpu.vector_store %arg11[%c0, %c0_0, %c0_1], %0 {strides = array<i32>} : memref<2x4x324xf32, #tpu.memory_space<vmem>>, vector<2x4x324xf32>,
    %c0_2 = arith.constant 0 : index
    %c0_3 = arith.constant 0 : index
    %c0_4 = arith.constant 0 : index
    %c0_5 = arith.constant 0 : index
    %2 = vector.load %arg0[%c0_2, %c0_3, %c0_4, %c0_5] : memref<2x4x16x16xf32, #tpu.memory_space<vmem>>, vector<2x4x1x16xf32>
    %3 = vector.shape_cast %2 : vector<2x4x1x16xf32> to vector<2x4x16xf32>
    %c0_6 = arith.constant 0 : index
    %c0_7 = arith.constant 0 : index
    %c19 = arith.constant 19 : index
    %4 = vector.load %arg11[%c0_6, %c0_7, %c19] : memref<2x4x324xf32, #tpu.memory_space<vmem>>, vector<2x4x16xf32>
    tpu.vector_store %arg11[%c0_6, %c0_7, %c19], %3 {strides = array<i32>} : memref<2x4x324xf32, #tpu.memory_space<vmem>>, vector<2x4x16xf32>,
    %c0_8 = arith.constant 0 : index
    %c0_9 = arith.constant 0 : index
    %c1 = arith.constant 1 : index
    %c0_10 = arith.constant 0 : index
    %5 = vector.load %arg0[%c0_8, %c0_9, %c1, %c0_10] : memref<2x4x16x16xf32, #tpu.memory_space<vmem>>, vector<2x4x1x16xf32>
    %6 = vector.shape_cast %5 : vector<2x4x1x16xf32> to vector<2x4x16xf32>
    %c0_11 = arith.constant 0 : index
    %c0_12 = arith.constant 0 : index
    %c37 = arith.constant 37 : index
    %7 = vector.load %arg11[%c0_11, %c0_12, %c37] : memref<2x4x324xf32, #tpu.memory_space<vmem>>, vector<2x4x16xf32>
    tpu.vector_store %arg11[%c0_11, %c0_12, %c37], %6 {strides = array<i32>} : memref<2x4x324xf32, #tpu.memory_space<vmem>>, vector<2x4x16xf32>,
    %c0_13 = arith.constant 0 : index
    %c0_14 = arith.constant 0 : index
    %c2 = arith.constant 2 : index
    %c0_15 = arith.constant 0 : index
    %8 = vector.load %arg0[%c0_13, %c0_14, %c2, %c0_15] : memref<2x4x16x16xf32, #tpu.memory_space<vmem>>, vector<2x4x1x16xf32>
    %9 = vector.shape_cast %8 : vector<2x4x1x16xf32> to vector<2x4x16xf32>
    %c0_16 = arith.constant 0 : index
    %c0_17 = arith.constant 0 : index
    %c55 = arith.constant 55 : index
    %10 = vector.load %arg11[%c0_16, %c0_17, %c55] : memref<2x4x324xf32, #tpu.memory_space<vmem>>, vector<2x4x16xf32>
    tpu.vector_store %arg11[%c0_16, %c0_17, %c55], %9 {strides = array<i32>} : memref<2x4x324xf32, #tpu.memory_space<vmem>>, vector<2x4x16xf32>,
    %c0_18 = arith.constant 0 : index
    %c0_19 = arith.constant 0 : index
    %c3 = arith.constant 3 : index
    %c0_20 = arith.constant 0 : index
    %11 = vector.load %arg0[%c0_18, %c0_19, %c3, %c0_20] : memref<2x4x16x16xf32, #tpu.memory_space<vmem>>, vector<2x4x1x16xf32>
    %12 = vector.shape_cast %11 : vector<2x4x1x16xf32> to vector<2x4x16xf32>
    %c0_21 = arith.constant 0 : index
    %c0_22 = arith.constant 0 : index
    %c73 = arith.constant 73 : index
    %13 = vector.load %arg11[%c0_21, %c0_22, %c73] : memref<2x4x324xf32, #tpu.memory_space<vmem>>, vector<2x4x16xf32>
    tpu.vector_store %arg11[%c0_21, %c0_22, %c73], %12 {strides = array<i32>} : memref<2x4x324xf32, #tpu.memory_space<vmem>>, vector<2x4x16xf32>,
    %c0_23 = arith.constant 0 : index
    %c0_24 = arith.constant 0 : index
    %c4 = arith.constant 4 : index
    %c0_25 = arith.constant 0 : index
    %14 = vector.load %arg0[%c0_23, %c0_24, %c4, %c0_25] : memref<2x4x16x16xf32, #tpu.memory_space<vmem>>, vector<2x4x1x16xf32>
    %15 = vector.shape_cast %14 : vector<2x4x1x16xf32> to vector<2x4x16xf32>
    %c0_26 = arith.constant 0 : index
    %c0_27 = arith.constant 0 : index
    %c91 = arith.constant 91 : index
    %16 = vector.load %arg11[%c0_26, %c0_27, %c91] : memref<2x4x324xf32, #tpu.memory_space<vmem>>, vector<2x4x16xf32>
    tpu.vector_store %arg11[%c0_26, %c0_27, %c91], %15 {strides = array<i32>} : memref<2x4x324xf32, #tpu.memory_space<vmem>>, vector<2x4x16xf32>,
    %c0_28 = arith.constant 0 : index
    %c0_29 = arith.constant 0 : index
    %c5 = arith.constant 5 : index
    %c0_30 = arith.constant 0 : index
    %17 = vector.load %arg0[%c0_28, %c0_29, %c5, %c0_30] : memref<2x4x16x16xf32, #tpu.memory_space<vmem>>, vector<2x4x1x16xf32>
    %18 = vector.shape_cast %17 : vector<2x4x1x16xf32> to vector<2x4x16xf32>
    %c0_31 = arith.constant 0 : index
    %c0_32 = arith.constant 0 : index
    %c109 = arith.constant 109 : index
    %19 = vector.load %arg11[%c0_31, %c0_32, %c109] : memref<2x4x324xf32, #tpu.memory_space<vmem>>, vector<2x4x16xf32>
    tpu.vector_store %arg11[%c0_31, %c0_32, %c109], %18 {strides = array<i32>} : memref<2x4x324xf32, #tpu.memory_space<vmem>>, vector<2x4x16xf32>,
    %c0_33 = arith.constant 0 : index
    %c0_34 = arith.constant 0 : index
    %c6 = arith.constant 6 : index
    %c0_35 = arith.constant 0 : index
    %20 = vector.load %arg0[%c0_33, %c0_34, %c6, %c0_35] : memref<2x4x16x16xf32, #tpu.memory_space<vmem>>, vector<2x4x1x16xf32>
    %21 = vector.shape_cast %20 : vector<2x4x1x16xf32> to vector<2x4x16xf32>
    %c0_36 = arith.constant 0 : index
    %c0_37 = arith.constant 0 : index
    %c127 = arith.constant 127 : index
    %22 = vector.load %arg11[%c0_36, %c0_37, %c127] : memref<2x4x324xf32, #tpu.memory_space<vmem>>, vector<2x4x16xf32>
    tpu.vector_store %arg11[%c0_36, %c0_37, %c127], %21 {strides = array<i32>} : memref<2x4x324xf32, #tpu.memory_space<vmem>>, vector<2x4x16xf32>,
    %c0_38 = arith.constant 0 : index
    %c0_39 = arith.constant 0 : index
    %c7 = arith.constant 7 : index
    %c0_40 = arith.constant 0 : index
    %23 = vector.load %arg0[%c0_38, %c0_39, %c7, %c0_40] : memref<2x4x16x16xf32, #tpu.memory_space<vmem>>, vector<2x4x1x16xf32>
    %24 = vector.shape_cast %23 : vector<2x4x1x16xf32> to vector<2x4x16xf32>
    %c0_41 = arith.constant 0 : index
    %c0_42 = arith.constant 0 : index
    %c145 = arith.constant 145 : index
    %25 = vector.load %arg11[%c0_41, %c0_42, %c145] : memref<2x4x324xf32, #tpu.memory_space<vmem>>, vector<2x4x16xf32>
    tpu.vector_store %arg11[%c0_41, %c0_42, %c145], %24 {strides = array<i32>} : memref<2x4x324xf32, #tpu.memory_space<vmem>>, vector<2x4x16xf32>,
    %c0_43 = arith.constant 0 : index
    %c0_44 = arith.constant 0 : index
    %c8 = arith.constant 8 : index
    %c0_45 = arith.constant 0 : index
    %26 = vector.load %arg0[%c0_43, %c0_44, %c8, %c0_45] : memref<2x4x16x16xf32, #tpu.memory_space<vmem>>, vector<2x4x1x16xf32>
    %27 = vector.shape_cast %26 : vector<2x4x1x16xf32> to vector<2x4x16xf32>
    %c0_46 = arith.constant 0 : index
    %c0_47 = arith.constant 0 : index
    %c163 = arith.constant 163 : index
    %28 = vector.load %arg11[%c0_46, %c0_47, %c163] : memref<2x4x324xf32, #tpu.memory_space<vmem>>, vector<2x4x16xf32>
    tpu.vector_store %arg11[%c0_46, %c0_47, %c163], %27 {strides = array<i32>} : memref<2x4x324xf32, #tpu.memory_space<vmem>>, vector<2x4x16xf32>,
    %c0_48 = arith.constant 0 : index
    %c0_49 = arith.constant 0 : index
    %c9 = arith.constant 9 : index
    %c0_50 = arith.constant 0 : index
    %29 = vector.load %arg0[%c0_48, %c0_49, %c9, %c0_50] : memref<2x4x16x16xf32, #tpu.memory_space<vmem>>, vector<2x4x1x16xf32>
    %30 = vector.shape_cast %29 : vector<2x4x1x16xf32> to vector<2x4x16xf32>
    %c0_51 = arith.constant 0 : index
    %c0_52 = arith.constant 0 : index
    %c181 = arith.constant 181 : index
    %31 = vector.load %arg11[%c0_51, %c0_52, %c181] : memref<2x4x324xf32, #tpu.memory_space<vmem>>, vector<2x4x16xf32>
    tpu.vector_store %arg11[%c0_51, %c0_52, %c181], %30 {strides = array<i32>} : memref<2x4x324xf32, #tpu.memory_space<vmem>>, vector<2x4x16xf32>,
    %c0_53 = arith.constant 0 : index
    %c0_54 = arith.constant 0 : index
    %c10 = arith.constant 10 : index
    %c0_55 = arith.constant 0 : index
    %32 = vector.load %arg0[%c0_53, %c0_54, %c10, %c0_55] : memref<2x4x16x16xf32, #tpu.memory_space<vmem>>, vector<2x4x1x16xf32>
    %33 = vector.shape_cast %32 : vector<2x4x1x16xf32> to vector<2x4x16xf32>
    %c0_56 = arith.constant 0 : index
    %c0_57 = arith.constant 0 : index
    %c199 = arith.constant 199 : index
    %34 = vector.load %arg11[%c0_56, %c0_57, %c199] : memref<2x4x324xf32, #tpu.memory_space<vmem>>, vector<2x4x16xf32>
    tpu.vector_store %arg11[%c0_56, %c0_57, %c199], %33 {strides = array<i32>} : memref<2x4x324xf32, #tpu.memory_space<vmem>>, vector<2x4x16xf32>,
    %c0_58 = arith.constant 0 : index
    %c0_59 = arith.constant 0 : index
    %c11 = arith.constant 11 : index
    %c0_60 = arith.constant 0 : index
    %35 = vector.load %arg0[%c0_58, %c0_59, %c11, %c0_60] : memref<2x4x16x16xf32, #tpu.memory_space<vmem>>, vector<2x4x1x16xf32>
    %36 = vector.shape_cast %35 : vector<2x4x1x16xf32> to vector<2x4x16xf32>
    %c0_61 = arith.constant 0 : index
    %c0_62 = arith.constant 0 : index
    %c217 = arith.constant 217 : index
    %37 = vector.load %arg11[%c0_61, %c0_62, %c217] : memref<2x4x324xf32, #tpu.memory_space<vmem>>, vector<2x4x16xf32>
    tpu.vector_store %arg11[%c0_61, %c0_62, %c217], %36 {strides = array<i32>} : memref<2x4x324xf32, #tpu.memory_space<vmem>>, vector<2x4x16xf32>,
    %c0_63 = arith.constant 0 : index
    %c0_64 = arith.constant 0 : index
    %c12 = arith.constant 12 : index
    %c0_65 = arith.constant 0 : index
    %38 = vector.load %arg0[%c0_63, %c0_64, %c12, %c0_65] : memref<2x4x16x16xf32, #tpu.memory_space<vmem>>, vector<2x4x1x16xf32>
    %39 = vector.shape_cast %38 : vector<2x4x1x16xf32> to vector<2x4x16xf32>
    %c0_66 = arith.constant 0 : index
    %c0_67 = arith.constant 0 : index
    %c235 = arith.constant 235 : index
    %40 = vector.load %arg11[%c0_66, %c0_67, %c235] : memref<2x4x324xf32, #tpu.memory_space<vmem>>, vector<2x4x16xf32>
    tpu.vector_store %arg11[%c0_66, %c0_67, %c235], %39 {strides = array<i32>} : memref<2x4x324xf32, #tpu.memory_space<vmem>>, vector<2x4x16xf32>,
    %c0_68 = arith.constant 0 : index
    %c0_69 = arith.constant 0 : index
    %c13 = arith.constant 13 : index
    %c0_70 = arith.constant 0 : index
    %41 = vector.load %arg0[%c0_68, %c0_69, %c13, %c0_70] : memref<2x4x16x16xf32, #tpu.memory_space<vmem>>, vector<2x4x1x16xf32>
    %42 = vector.shape_cast %41 : vector<2x4x1x16xf32> to vector<2x4x16xf32>
    %c0_71 = arith.constant 0 : index
    %c0_72 = arith.constant 0 : index
    %c253 = arith.constant 253 : index
    %43 = vector.load %arg11[%c0_71, %c0_72, %c253] : memref<2x4x324xf32, #tpu.memory_space<vmem>>, vector<2x4x16xf32>
    tpu.vector_store %arg11[%c0_71, %c0_72, %c253], %42 {strides = array<i32>} : memref<2x4x324xf32, #tpu.memory_space<vmem>>, vector<2x4x16xf32>,
    %c0_73 = arith.constant 0 : index
    %c0_74 = arith.constant 0 : index
    %c14 = arith.constant 14 : index
    %c0_75 = arith.constant 0 : index
    %44 = vector.load %arg0[%c0_73, %c0_74, %c14, %c0_75] : memref<2x4x16x16xf32, #tpu.memory_space<vmem>>, vector<2x4x1x16xf32>
    %45 = vector.shape_cast %44 : vector<2x4x1x16xf32> to vector<2x4x16xf32>
    %c0_76 = arith.constant 0 : index
    %c0_77 = arith.constant 0 : index
    %c271 = arith.constant 271 : index
    %46 = vector.load %arg11[%c0_76, %c0_77, %c271] : memref<2x4x324xf32, #tpu.memory_space<vmem>>, vector<2x4x16xf32>
    tpu.vector_store %arg11[%c0_76, %c0_77, %c271], %45 {strides = array<i32>} : memref<2x4x324xf32, #tpu.memory_space<vmem>>, vector<2x4x16xf32>,
    %c0_78 = arith.constant 0 : index
    %c0_79 = arith.constant 0 : index
    %c15 = arith.constant 15 : index
    %c0_80 = arith.constant 0 : index
    %47 = vector.load %arg0[%c0_78, %c0_79, %c15, %c0_80] : memref<2x4x16x16xf32, #tpu.memory_space<vmem>>, vector<2x4x1x16xf32>
    %48 = vector.shape_cast %47 : vector<2x4x1x16xf32> to vector<2x4x16xf32>
    %c0_81 = arith.constant 0 : index
    %c0_82 = arith.constant 0 : index
    %c289 = arith.constant 289 : index
    %49 = vector.load %arg11[%c0_81, %c0_82, %c289] : memref<2x4x324xf32, #tpu.memory_space<vmem>>, vector<2x4x16xf32>
    tpu.vector_store %arg11[%c0_81, %c0_82, %c289], %48 {strides = array<i32>} : memref<2x4x324xf32, #tpu.memory_space<vmem>>, vector<2x4x16xf32>,
    %c0_83 = arith.constant 0 : index
    %c0_84 = arith.constant 0 : index
    %c0_85 = arith.constant 0 : index
    %50 = vector.load %arg11[%c0_83, %c0_84, %c0_85] : memref<2x4x324xf32, #tpu.memory_space<vmem>>, vector<1x4x286xf32>
    %51 = vector.shape_cast %50 : vector<1x4x286xf32> to vector<4x286xf32>
    %c0_86 = arith.constant 0 : index
    %c0_87 = arith.constant 0 : index
    %52 = vector.load %arg13[%c0_86, %c0_87] : memref<36x572xf32, #tpu.memory_space<vmem>>, vector<4x286xf32>
    tpu.vector_store %arg13[%c0_86, %c0_87], %51 {strides = array<i32>} : memref<36x572xf32, #tpu.memory_space<vmem>>, vector<4x286xf32>,
    %c1_88 = arith.constant 1 : index
    %c0_89 = arith.constant 0 : index
    %c0_90 = arith.constant 0 : index
    %53 = vector.load %arg11[%c1_88, %c0_89, %c0_90] : memref<2x4x324xf32, #tpu.memory_space<vmem>>, vector<1x4x286xf32>
    %54 = vector.shape_cast %53 : vector<1x4x286xf32> to vector<4x286xf32>
    %c0_91 = arith.constant 0 : index
    %c286 = arith.constant 286 : index
    %55 = vector.load %arg13[%c0_91, %c286] : memref<36x572xf32, #tpu.memory_space<vmem>>, vector<4x286xf32>
    tpu.vector_store %arg13[%c0_91, %c286], %54 {strides = array<i32>} : memref<36x572xf32, #tpu.memory_space<vmem>>, vector<4x286xf32>,
    %c0_92 = arith.constant 0 : index
    %c0_93 = arith.constant 0 : index
    %c1_94 = arith.constant 1 : index
    %56 = vector.load %arg11[%c0_92, %c0_93, %c1_94] : memref<2x4x324xf32, #tpu.memory_space<vmem>>, vector<1x4x286xf32>
    %57 = vector.shape_cast %56 : vector<1x4x286xf32> to vector<4x286xf32>
    %c4_95 = arith.constant 4 : index
    %c0_96 = arith.constant 0 : index
    %58 = vector.load %arg13[%c4_95, %c0_96] : memref<36x572xf32, #tpu.memory_space<vmem>>, vector<4x286xf32>
    tpu.vector_store %arg13[%c4_95, %c0_96], %57 {strides = array<i32>} : memref<36x572xf32, #tpu.memory_space<vmem>>, vector<4x286xf32>,
    %c1_97 = arith.constant 1 : index
    %c0_98 = arith.constant 0 : index
    %c1_99 = arith.constant 1 : index
    %59 = vector.load %arg11[%c1_97, %c0_98, %c1_99] : memref<2x4x324xf32, #tpu.memory_space<vmem>>, vector<1x4x286xf32>
    %60 = vector.shape_cast %59 : vector<1x4x286xf32> to vector<4x286xf32>
    %c4_100 = arith.constant 4 : index
    %c286_101 = arith.constant 286 : index
    %61 = vector.load %arg13[%c4_100, %c286_101] : memref<36x572xf32, #tpu.memory_space<vmem>>, vector<4x286xf32>
    tpu.vector_store %arg13[%c4_100, %c286_101], %60 {strides = array<i32>} : memref<36x572xf32, #tpu.memory_space<vmem>>, vector<4x286xf32>,
    %c0_102 = arith.constant 0 : index
    %c0_103 = arith.constant 0 : index
    %c2_104 = arith.constant 2 : index
    %62 = vector.load %arg11[%c0_102, %c0_103, %c2_104] : memref<2x4x324xf32, #tpu.memory_space<vmem>>, vector<1x4x286xf32>
    %63 = vector.shape_cast %62 : vector<1x4x286xf32> to vector<4x286xf32>
    %c8_105 = arith.constant 8 : index
    %c0_106 = arith.constant 0 : index
    %64 = vector.load %arg13[%c8_105, %c0_106] : memref<36x572xf32, #tpu.memory_space<vmem>>, vector<4x286xf32>
    tpu.vector_store %arg13[%c8_105, %c0_106], %63 {strides = array<i32>} : memref<36x572xf32, #tpu.memory_space<vmem>>, vector<4x286xf32>,
    %c1_107 = arith.constant 1 : index
    %c0_108 = arith.constant 0 : index
    %c2_109 = arith.constant 2 : index
    %65 = vector.load %arg11[%c1_107, %c0_108, %c2_109] : memref<2x4x324xf32, #tpu.memory_space<vmem>>, vector<1x4x286xf32>
    %66 = vector.shape_cast %65 : vector<1x4x286xf32> to vector<4x286xf32>
    %c8_110 = arith.constant 8 : index
    %c286_111 = arith.constant 286 : index
    %67 = vector.load %arg13[%c8_110, %c286_111] : memref<36x572xf32, #tpu.memory_space<vmem>>, vector<4x286xf32>
    tpu.vector_store %arg13[%c8_110, %c286_111], %66 {strides = array<i32>} : memref<36x572xf32, #tpu.memory_space<vmem>>, vector<4x286xf32>,
    %c0_112 = arith.constant 0 : index
    %c0_113 = arith.constant 0 : index
    %c18 = arith.constant 18 : index
    %68 = vector.load %arg11[%c0_112, %c0_113, %c18] : memref<2x4x324xf32, #tpu.memory_space<vmem>>, vector<1x4x286xf32>
    %69 = vector.shape_cast %68 : vector<1x4x286xf32> to vector<4x286xf32>
    %c12_114 = arith.constant 12 : index
    %c0_115 = arith.constant 0 : index
    %70 = vector.load %arg13[%c12_114, %c0_115] : memref<36x572xf32, #tpu.memory_space<vmem>>, vector<4x286xf32>
    tpu.vector_store %arg13[%c12_114, %c0_115], %69 {strides = array<i32>} : memref<36x572xf32, #tpu.memory_space<vmem>>, vector<4x286xf32>,
    %c1_116 = arith.constant 1 : index
    %c0_117 = arith.constant 0 : index
    %c18_118 = arith.constant 18 : index
    %71 = vector.load %arg11[%c1_116, %c0_117, %c18_118] : memref<2x4x324xf32, #tpu.memory_space<vmem>>, vector<1x4x286xf32>
    %72 = vector.shape_cast %71 : vector<1x4x286xf32> to vector<4x286xf32>
    %c12_119 = arith.constant 12 : index
    %c286_120 = arith.constant 286 : index
    %73 = vector.load %arg13[%c12_119, %c286_120] : memref<36x572xf32, #tpu.memory_space<vmem>>, vector<4x286xf32>
    tpu.vector_store %arg13[%c12_119, %c286_120], %72 {strides = array<i32>} : memref<36x572xf32, #tpu.memory_space<vmem>>, vector<4x286xf32>,
    %c0_121 = arith.constant 0 : index
    %c0_122 = arith.constant 0 : index
    %c19_123 = arith.constant 19 : index
    %74 = vector.load %arg11[%c0_121, %c0_122, %c19_123] : memref<2x4x324xf32, #tpu.memory_space<vmem>>, vector<1x4x286xf32>
    %75 = vector.shape_cast %74 : vector<1x4x286xf32> to vector<4x286xf32>
    %c16 = arith.constant 16 : index
    %c0_124 = arith.constant 0 : index
    %76 = vector.load %arg13[%c16, %c0_124] : memref<36x572xf32, #tpu.memory_space<vmem>>, vector<4x286xf32>
    tpu.vector_store %arg13[%c16, %c0_124], %75 {strides = array<i32>} : memref<36x572xf32, #tpu.memory_space<vmem>>, vector<4x286xf32>,
    %c1_125 = arith.constant 1 : index
    %c0_126 = arith.constant 0 : index
    %c19_127 = arith.constant 19 : index
    %77 = vector.load %arg11[%c1_125, %c0_126, %c19_127] : memref<2x4x324xf32, #tpu.memory_space<vmem>>, vector<1x4x286xf32>
    %78 = vector.shape_cast %77 : vector<1x4x286xf32> to vector<4x286xf32>
    %c16_128 = arith.constant 16 : index
    %c286_129 = arith.constant 286 : index
    %79 = vector.load %arg13[%c16_128, %c286_129] : memref<36x572xf32, #tpu.memory_space<vmem>>, vector<4x286xf32>
    tpu.vector_store %arg13[%c16_128, %c286_129], %78 {strides = array<i32>} : memref<36x572xf32, #tpu.memory_space<vmem>>, vector<4x286xf32>,
    %c0_130 = arith.constant 0 : index
    %c0_131 = arith.constant 0 : index
    %c20 = arith.constant 20 : index
    %80 = vector.load %arg11[%c0_130, %c0_131, %c20] : memref<2x4x324xf32, #tpu.memory_space<vmem>>, vector<1x4x286xf32>
    %81 = vector.shape_cast %80 : vector<1x4x286xf32> to vector<4x286xf32>
    %c20_132 = arith.constant 20 : index
    %c0_133 = arith.constant 0 : index
    %82 = vector.load %arg13[%c20_132, %c0_133] : memref<36x572xf32, #tpu.memory_space<vmem>>, vector<4x286xf32>
    tpu.vector_store %arg13[%c20_132, %c0_133], %81 {strides = array<i32>} : memref<36x572xf32, #tpu.memory_space<vmem>>, vector<4x286xf32>,
    %c1_134 = arith.constant 1 : index
    %c0_135 = arith.constant 0 : index
    %c20_136 = arith.constant 20 : index
    %83 = vector.load %arg11[%c1_134, %c0_135, %c20_136] : memref<2x4x324xf32, #tpu.memory_space<vmem>>, vector<1x4x286xf32>
    %84 = vector.shape_cast %83 : vector<1x4x286xf32> to vector<4x286xf32>
    %c20_137 = arith.constant 20 : index
    %c286_138 = arith.constant 286 : index
    %85 = vector.load %arg13[%c20_137, %c286_138] : memref<36x572xf32, #tpu.memory_space<vmem>>, vector<4x286xf32>
    tpu.vector_store %arg13[%c20_137, %c286_138], %84 {strides = array<i32>} : memref<36x572xf32, #tpu.memory_space<vmem>>, vector<4x286xf32>,
    %c0_139 = arith.constant 0 : index
    %c0_140 = arith.constant 0 : index
    %c36 = arith.constant 36 : index
    %86 = vector.load %arg11[%c0_139, %c0_140, %c36] : memref<2x4x324xf32, #tpu.memory_space<vmem>>, vector<1x4x286xf32>
    %87 = vector.shape_cast %86 : vector<1x4x286xf32> to vector<4x286xf32>
    %c24 = arith.constant 24 : index
    %c0_141 = arith.constant 0 : index
    %88 = vector.load %arg13[%c24, %c0_141] : memref<36x572xf32, #tpu.memory_space<vmem>>, vector<4x286xf32>
    tpu.vector_store %arg13[%c24, %c0_141], %87 {strides = array<i32>} : memref<36x572xf32, #tpu.memory_space<vmem>>, vector<4x286xf32>,
    %c1_142 = arith.constant 1 : index
    %c0_143 = arith.constant 0 : index
    %c36_144 = arith.constant 36 : index
    %89 = vector.load %arg11[%c1_142, %c0_143, %c36_144] : memref<2x4x324xf32, #tpu.memory_space<vmem>>, vector<1x4x286xf32>
    %90 = vector.shape_cast %89 : vector<1x4x286xf32> to vector<4x286xf32>
    %c24_145 = arith.constant 24 : index
    %c286_146 = arith.constant 286 : index
    %91 = vector.load %arg13[%c24_145, %c286_146] : memref<36x572xf32, #tpu.memory_space<vmem>>, vector<4x286xf32>
    tpu.vector_store %arg13[%c24_145, %c286_146], %90 {strides = array<i32>} : memref<36x572xf32, #tpu.memory_space<vmem>>, vector<4x286xf32>,
    %c0_147 = arith.constant 0 : index
    %c0_148 = arith.constant 0 : index
    %c37_149 = arith.constant 37 : index
    %92 = vector.load %arg11[%c0_147, %c0_148, %c37_149] : memref<2x4x324xf32, #tpu.memory_space<vmem>>, vector<1x4x286xf32>
    %93 = vector.shape_cast %92 : vector<1x4x286xf32> to vector<4x286xf32>
    %c28 = arith.constant 28 : index
    %c0_150 = arith.constant 0 : index
    %94 = vector.load %arg13[%c28, %c0_150] : memref<36x572xf32, #tpu.memory_space<vmem>>, vector<4x286xf32>
    tpu.vector_store %arg13[%c28, %c0_150], %93 {strides = array<i32>} : memref<36x572xf32, #tpu.memory_space<vmem>>, vector<4x286xf32>,
    %c1_151 = arith.constant 1 : index
    %c0_152 = arith.constant 0 : index
    %c37_153 = arith.constant 37 : index
    %95 = vector.load %arg11[%c1_151, %c0_152, %c37_153] : memref<2x4x324xf32, #tpu.memory_space<vmem>>, vector<1x4x286xf32>
    %96 = vector.shape_cast %95 : vector<1x4x286xf32> to vector<4x286xf32>
    %c28_154 = arith.constant 28 : index
    %c286_155 = arith.constant 286 : index
    %97 = vector.load %arg13[%c28_154, %c286_155] : memref<36x572xf32, #tpu.memory_space<vmem>>, vector<4x286xf32>
    tpu.vector_store %arg13[%c28_154, %c286_155], %96 {strides = array<i32>} : memref<36x572xf32, #tpu.memory_space<vmem>>, vector<4x286xf32>,
    %c0_156 = arith.constant 0 : index
    %c0_157 = arith.constant 0 : index
    %c38 = arith.constant 38 : index
    %98 = vector.load %arg11[%c0_156, %c0_157, %c38] : memref<2x4x324xf32, #tpu.memory_space<vmem>>, vector<1x4x286xf32>
    %99 = vector.shape_cast %98 : vector<1x4x286xf32> to vector<4x286xf32>
    %c32 = arith.constant 32 : index
    %c0_158 = arith.constant 0 : index
    %100 = vector.load %arg13[%c32, %c0_158] : memref<36x572xf32, #tpu.memory_space<vmem>>, vector<4x286xf32>
    tpu.vector_store %arg13[%c32, %c0_158], %99 {strides = array<i32>} : memref<36x572xf32, #tpu.memory_space<vmem>>, vector<4x286xf32>,
    %c1_159 = arith.constant 1 : index
    %c0_160 = arith.constant 0 : index
    %c38_161 = arith.constant 38 : index
    %101 = vector.load %arg11[%c1_159, %c0_160, %c38_161] : memref<2x4x324xf32, #tpu.memory_space<vmem>>, vector<1x4x286xf32>
    %102 = vector.shape_cast %101 : vector<1x4x286xf32> to vector<4x286xf32>
    %c32_162 = arith.constant 32 : index
    %c286_163 = arith.constant 286 : index
    %103 = vector.load %arg13[%c32_162, %c286_163] : memref<36x572xf32, #tpu.memory_space<vmem>>, vector<4x286xf32>
    tpu.vector_store %arg13[%c32_162, %c286_163], %102 {strides = array<i32>} : memref<36x572xf32, #tpu.memory_space<vmem>>, vector<4x286xf32>,
    %c0_164 = arith.constant 0 : index
    %c0_165 = arith.constant 0 : index
    %104 = vector.load %arg2[%c0_164, %c0_165] : memref<8x36xf32, #tpu.memory_space<vmem>>, vector<8x36xf32>
    %c0_166 = arith.constant 0 : index
    %c0_167 = arith.constant 0 : index
    %105 = vector.load %arg13[%c0_166, %c0_167] : memref<36x572xf32, #tpu.memory_space<vmem>>, vector<36x572xf32>
    %cst_168 = arith.constant dense<0.000000e+00> : vector<8x572xf32>
    %106 = tpu.matmul %104, %105, %cst_168 {dimension_numbers = #tpu.dot_dimension_numbers<[1], [0], [0], [1], [0, 0, 1, 1], [], []>} : vector<8x36xf32>, vector<36x572xf32>, vector<8x572xf32> -> vector<8x572xf32>
    %c0_169 = arith.constant 0 : index
    %c0_170 = arith.constant 0 : index
    %107 = vector.load %arg3[%c0_169, %c0_170] : memref<8x1xf32, #tpu.memory_space<vmem>>, vector<8x1xf32>
    %108 = vector.broadcast %107 : vector<8x1xf32> to vector<8x572xf32>
    %109 = arith.addf %106, %108 : vector<8x572xf32>
    %cst_171 = arith.constant 0.000000e+00 : f32
    %110 = vector.broadcast %cst_171 : f32 to vector<8x572xf32>
    %111 = arith.maximumf %109, %110 : vector<8x572xf32>
    %c0_172 = arith.constant 0 : index
    %c0_173 = arith.constant 0 : index
    %112 = vector.load %arg1[%c0_172, %c0_173] : memref<1x572xf32, #tpu.memory_space<vmem>>, vector<1x572xf32>
    %113 = vector.broadcast %112 : vector<1x572xf32> to vector<8x572xf32>
    %114 = arith.mulf %111, %113 : vector<8x572xf32>
    %c0_174 = arith.constant 0 : index
    %c0_175 = arith.constant 0 : index
    %115 = vector.load %arg15[%c0_174, %c0_175] : memref<8x572xf32, #tpu.memory_space<vmem>>, vector<8x572xf32>
    tpu.vector_store %arg15[%c0_174, %c0_175], %114 {strides = array<i32>} : memref<8x572xf32, #tpu.memory_space<vmem>>, vector<8x572xf32>,
    %cst_176 = arith.constant 0.000000e+00 : f32
    %116 = vector.broadcast %cst_176 : f32 to vector<2x8x324xf32>
    %c0_177 = arith.constant 0 : index
    %c0_178 = arith.constant 0 : index
    %c0_179 = arith.constant 0 : index
    %117 = vector.load %arg12[%c0_177, %c0_178, %c0_179] : memref<2x8x324xf32, #tpu.memory_space<vmem>>, vector<2x8x324xf32>
    tpu.vector_store %arg12[%c0_177, %c0_178, %c0_179], %116 {strides = array<i32>} : memref<2x8x324xf32, #tpu.memory_space<vmem>>, vector<2x8x324xf32>,
    %c0_180 = arith.constant 0 : index
    %c0_181 = arith.constant 0 : index
    %118 = vector.load %arg15[%c0_180, %c0_181] : memref<8x572xf32, #tpu.memory_space<vmem>>, vector<8x286xf32>
    %c0_182 = arith.constant 0 : index
    %c0_183 = arith.constant 0 : index
    %c19_184 = arith.constant 19 : index
    %119 = vector.load %arg12[%c0_182, %c0_183, %c19_184] : memref<2x8x324xf32, #tpu.memory_space<vmem>>, vector<1x8x286xf32>
    %120 = vector.shape_cast %119 : vector<1x8x286xf32> to vector<8x286xf32>
    %121 = vector.shape_cast %118 : vector<8x286xf32> to vector<1x8x286xf32>
    tpu.vector_store %arg12[%c0_182, %c0_183, %c19_184], %121 {strides = array<i32>} : memref<2x8x324xf32, #tpu.memory_space<vmem>>, vector<1x8x286xf32>,
    %c0_185 = arith.constant 0 : index
    %c286_186 = arith.constant 286 : index
    %122 = vector.load %arg15[%c0_185, %c286_186] : memref<8x572xf32, #tpu.memory_space<vmem>>, vector<8x286xf32>
    %c1_187 = arith.constant 1 : index
    %c0_188 = arith.constant 0 : index
    %c19_189 = arith.constant 19 : index
    %123 = vector.load %arg12[%c1_187, %c0_188, %c19_189] : memref<2x8x324xf32, #tpu.memory_space<vmem>>, vector<1x8x286xf32>
    %124 = vector.shape_cast %123 : vector<1x8x286xf32> to vector<8x286xf32>
    %125 = vector.shape_cast %122 : vector<8x286xf32> to vector<1x8x286xf32>
    tpu.vector_store %arg12[%c1_187, %c0_188, %c19_189], %125 {strides = array<i32>} : memref<2x8x324xf32, #tpu.memory_space<vmem>>, vector<1x8x286xf32>,
    %c0_190 = arith.constant 0 : index
    %c0_191 = arith.constant 0 : index
    %c0_192 = arith.constant 0 : index
    %126 = vector.load %arg12[%c0_190, %c0_191, %c0_192] : memref<2x8x324xf32, #tpu.memory_space<vmem>>, vector<1x8x286xf32>
    %127 = vector.shape_cast %126 : vector<1x8x286xf32> to vector<8x286xf32>
    %c0_193 = arith.constant 0 : index
    %c0_194 = arith.constant 0 : index
    %128 = vector.load %arg14[%c0_193, %c0_194] : memref<72x572xf32, #tpu.memory_space<vmem>>, vector<8x286xf32>
    tpu.vector_store %arg14[%c0_193, %c0_194], %127 {strides = array<i32>} : memref<72x572xf32, #tpu.memory_space<vmem>>, vector<8x286xf32>,
    %c1_195 = arith.constant 1 : index
    %c0_196 = arith.constant 0 : index
    %c0_197 = arith.constant 0 : index
    %129 = vector.load %arg12[%c1_195, %c0_196, %c0_197] : memref<2x8x324xf32, #tpu.memory_space<vmem>>, vector<1x8x286xf32>
    %130 = vector.shape_cast %129 : vector<1x8x286xf32> to vector<8x286xf32>
    %c0_198 = arith.constant 0 : index
    %c286_199 = arith.constant 286 : index
    %131 = vector.load %arg14[%c0_198, %c286_199] : memref<72x572xf32, #tpu.memory_space<vmem>>, vector<8x286xf32>
    tpu.vector_store %arg14[%c0_198, %c286_199], %130 {strides = array<i32>} : memref<72x572xf32, #tpu.memory_space<vmem>>, vector<8x286xf32>,
    %c0_200 = arith.constant 0 : index
    %c0_201 = arith.constant 0 : index
    %c1_202 = arith.constant 1 : index
    %132 = vector.load %arg12[%c0_200, %c0_201, %c1_202] : memref<2x8x324xf32, #tpu.memory_space<vmem>>, vector<1x8x286xf32>
    %133 = vector.shape_cast %132 : vector<1x8x286xf32> to vector<8x286xf32>
    %c8_203 = arith.constant 8 : index
    %c0_204 = arith.constant 0 : index
    %134 = vector.load %arg14[%c8_203, %c0_204] : memref<72x572xf32, #tpu.memory_space<vmem>>, vector<8x286xf32>
    tpu.vector_store %arg14[%c8_203, %c0_204], %133 {strides = array<i32>} : memref<72x572xf32, #tpu.memory_space<vmem>>, vector<8x286xf32>,
    %c1_205 = arith.constant 1 : index
    %c0_206 = arith.constant 0 : index
    %c1_207 = arith.constant 1 : index
    %135 = vector.load %arg12[%c1_205, %c0_206, %c1_207] : memref<2x8x324xf32, #tpu.memory_space<vmem>>, vector<1x8x286xf32>
    %136 = vector.shape_cast %135 : vector<1x8x286xf32> to vector<8x286xf32>
    %c8_208 = arith.constant 8 : index
    %c286_209 = arith.constant 286 : index
    %137 = vector.load %arg14[%c8_208, %c286_209] : memref<72x572xf32, #tpu.memory_space<vmem>>, vector<8x286xf32>
    tpu.vector_store %arg14[%c8_208, %c286_209], %136 {strides = array<i32>} : memref<72x572xf32, #tpu.memory_space<vmem>>, vector<8x286xf32>,
    %c0_210 = arith.constant 0 : index
    %c0_211 = arith.constant 0 : index
    %c2_212 = arith.constant 2 : index
    %138 = vector.load %arg12[%c0_210, %c0_211, %c2_212] : memref<2x8x324xf32, #tpu.memory_space<vmem>>, vector<1x8x286xf32>
    %139 = vector.shape_cast %138 : vector<1x8x286xf32> to vector<8x286xf32>
    %c16_213 = arith.constant 16 : index
    %c0_214 = arith.constant 0 : index
    %140 = vector.load %arg14[%c16_213, %c0_214] : memref<72x572xf32, #tpu.memory_space<vmem>>, vector<8x286xf32>
    tpu.vector_store %arg14[%c16_213, %c0_214], %139 {strides = array<i32>} : memref<72x572xf32, #tpu.memory_space<vmem>>, vector<8x286xf32>,
    %c1_215 = arith.constant 1 : index
    %c0_216 = arith.constant 0 : index
    %c2_217 = arith.constant 2 : index
    %141 = vector.load %arg12[%c1_215, %c0_216, %c2_217] : memref<2x8x324xf32, #tpu.memory_space<vmem>>, vector<1x8x286xf32>
    %142 = vector.shape_cast %141 : vector<1x8x286xf32> to vector<8x286xf32>
    %c16_218 = arith.constant 16 : index
    %c286_219 = arith.constant 286 : index
    %143 = vector.load %arg14[%c16_218, %c286_219] : memref<72x572xf32, #tpu.memory_space<vmem>>, vector<8x286xf32>
    tpu.vector_store %arg14[%c16_218, %c286_219], %142 {strides = array<i32>} : memref<72x572xf32, #tpu.memory_space<vmem>>, vector<8x286xf32>,
    %c0_220 = arith.constant 0 : index
    %c0_221 = arith.constant 0 : index
    %c18_222 = arith.constant 18 : index
    %144 = vector.load %arg12[%c0_220, %c0_221, %c18_222] : memref<2x8x324xf32, #tpu.memory_space<vmem>>, vector<1x8x286xf32>
    %145 = vector.shape_cast %144 : vector<1x8x286xf32> to vector<8x286xf32>
    %c24_223 = arith.constant 24 : index
    %c0_224 = arith.constant 0 : index
    %146 = vector.load %arg14[%c24_223, %c0_224] : memref<72x572xf32, #tpu.memory_space<vmem>>, vector<8x286xf32>
    tpu.vector_store %arg14[%c24_223, %c0_224], %145 {strides = array<i32>} : memref<72x572xf32, #tpu.memory_space<vmem>>, vector<8x286xf32>,
    %c1_225 = arith.constant 1 : index
    %c0_226 = arith.constant 0 : index
    %c18_227 = arith.constant 18 : index
    %147 = vector.load %arg12[%c1_225, %c0_226, %c18_227] : memref<2x8x324xf32, #tpu.memory_space<vmem>>, vector<1x8x286xf32>
    %148 = vector.shape_cast %147 : vector<1x8x286xf32> to vector<8x286xf32>
    %c24_228 = arith.constant 24 : index
    %c286_229 = arith.constant 286 : index
    %149 = vector.load %arg14[%c24_228, %c286_229] : memref<72x572xf32, #tpu.memory_space<vmem>>, vector<8x286xf32>
    tpu.vector_store %arg14[%c24_228, %c286_229], %148 {strides = array<i32>} : memref<72x572xf32, #tpu.memory_space<vmem>>, vector<8x286xf32>,
    %c0_230 = arith.constant 0 : index
    %c0_231 = arith.constant 0 : index
    %c19_232 = arith.constant 19 : index
    %150 = vector.load %arg12[%c0_230, %c0_231, %c19_232] : memref<2x8x324xf32, #tpu.memory_space<vmem>>, vector<1x8x286xf32>
    %151 = vector.shape_cast %150 : vector<1x8x286xf32> to vector<8x286xf32>
    %c32_233 = arith.constant 32 : index
    %c0_234 = arith.constant 0 : index
    %152 = vector.load %arg14[%c32_233, %c0_234] : memref<72x572xf32, #tpu.memory_space<vmem>>, vector<8x286xf32>
    tpu.vector_store %arg14[%c32_233, %c0_234], %151 {strides = array<i32>} : memref<72x572xf32, #tpu.memory_space<vmem>>, vector<8x286xf32>,
    %c1_235 = arith.constant 1 : index
    %c0_236 = arith.constant 0 : index
    %c19_237 = arith.constant 19 : index
    %153 = vector.load %arg12[%c1_235, %c0_236, %c19_237] : memref<2x8x324xf32, #tpu.memory_space<vmem>>, vector<1x8x286xf32>
    %154 = vector.shape_cast %153 : vector<1x8x286xf32> to vector<8x286xf32>
    %c32_238 = arith.constant 32 : index
    %c286_239 = arith.constant 286 : index
    %155 = vector.load %arg14[%c32_238, %c286_239] : memref<72x572xf32, #tpu.memory_space<vmem>>, vector<8x286xf32>
    tpu.vector_store %arg14[%c32_238, %c286_239], %154 {strides = array<i32>} : memref<72x572xf32, #tpu.memory_space<vmem>>, vector<8x286xf32>,
    %c0_240 = arith.constant 0 : index
    %c0_241 = arith.constant 0 : index
    %c20_242 = arith.constant 20 : index
    %156 = vector.load %arg12[%c0_240, %c0_241, %c20_242] : memref<2x8x324xf32, #tpu.memory_space<vmem>>, vector<1x8x286xf32>
    %157 = vector.shape_cast %156 : vector<1x8x286xf32> to vector<8x286xf32>
    %c40 = arith.constant 40 : index
    %c0_243 = arith.constant 0 : index
    %158 = vector.load %arg14[%c40, %c0_243] : memref<72x572xf32, #tpu.memory_space<vmem>>, vector<8x286xf32>
    tpu.vector_store %arg14[%c40, %c0_243], %157 {strides = array<i32>} : memref<72x572xf32, #tpu.memory_space<vmem>>, vector<8x286xf32>,
    %c1_244 = arith.constant 1 : index
    %c0_245 = arith.constant 0 : index
    %c20_246 = arith.constant 20 : index
    %159 = vector.load %arg12[%c1_244, %c0_245, %c20_246] : memref<2x8x324xf32, #tpu.memory_space<vmem>>, vector<1x8x286xf32>
    %160 = vector.shape_cast %159 : vector<1x8x286xf32> to vector<8x286xf32>
    %c40_247 = arith.constant 40 : index
    %c286_248 = arith.constant 286 : index
    %161 = vector.load %arg14[%c40_247, %c286_248] : memref<72x572xf32, #tpu.memory_space<vmem>>, vector<8x286xf32>
    tpu.vector_store %arg14[%c40_247, %c286_248], %160 {strides = array<i32>} : memref<72x572xf32, #tpu.memory_space<vmem>>, vector<8x286xf32>,
    %c0_249 = arith.constant 0 : index
    %c0_250 = arith.constant 0 : index
    %c36_251 = arith.constant 36 : index
    %162 = vector.load %arg12[%c0_249, %c0_250, %c36_251] : memref<2x8x324xf32, #tpu.memory_space<vmem>>, vector<1x8x286xf32>
    %163 = vector.shape_cast %162 : vector<1x8x286xf32> to vector<8x286xf32>
    %c48 = arith.constant 48 : index
    %c0_252 = arith.constant 0 : index
    %164 = vector.load %arg14[%c48, %c0_252] : memref<72x572xf32, #tpu.memory_space<vmem>>, vector<8x286xf32>
    tpu.vector_store %arg14[%c48, %c0_252], %163 {strides = array<i32>} : memref<72x572xf32, #tpu.memory_space<vmem>>, vector<8x286xf32>,
    %c1_253 = arith.constant 1 : index
    %c0_254 = arith.constant 0 : index
    %c36_255 = arith.constant 36 : index
    %165 = vector.load %arg12[%c1_253, %c0_254, %c36_255] : memref<2x8x324xf32, #tpu.memory_space<vmem>>, vector<1x8x286xf32>
    %166 = vector.shape_cast %165 : vector<1x8x286xf32> to vector<8x286xf32>
    %c48_256 = arith.constant 48 : index
    %c286_257 = arith.constant 286 : index
    %167 = vector.load %arg14[%c48_256, %c286_257] : memref<72x572xf32, #tpu.memory_space<vmem>>, vector<8x286xf32>
    tpu.vector_store %arg14[%c48_256, %c286_257], %166 {strides = array<i32>} : memref<72x572xf32, #tpu.memory_space<vmem>>, vector<8x286xf32>,
    %c0_258 = arith.constant 0 : index
    %c0_259 = arith.constant 0 : index
    %c37_260 = arith.constant 37 : index
    %168 = vector.load %arg12[%c0_258, %c0_259, %c37_260] : memref<2x8x324xf32, #tpu.memory_space<vmem>>, vector<1x8x286xf32>
    %169 = vector.shape_cast %168 : vector<1x8x286xf32> to vector<8x286xf32>
    %c56 = arith.constant 56 : index
    %c0_261 = arith.constant 0 : index
    %170 = vector.load %arg14[%c56, %c0_261] : memref<72x572xf32, #tpu.memory_space<vmem>>, vector<8x286xf32>
    tpu.vector_store %arg14[%c56, %c0_261], %169 {strides = array<i32>} : memref<72x572xf32, #tpu.memory_space<vmem>>, vector<8x286xf32>,
    %c1_262 = arith.constant 1 : index
    %c0_263 = arith.constant 0 : index
    %c37_264 = arith.constant 37 : index
    %171 = vector.load %arg12[%c1_262, %c0_263, %c37_264] : memref<2x8x324xf32, #tpu.memory_space<vmem>>, vector<1x8x286xf32>
    %172 = vector.shape_cast %171 : vector<1x8x286xf32> to vector<8x286xf32>
    %c56_265 = arith.constant 56 : index
    %c286_266 = arith.constant 286 : index
    %173 = vector.load %arg14[%c56_265, %c286_266] : memref<72x572xf32, #tpu.memory_space<vmem>>, vector<8x286xf32>
    tpu.vector_store %arg14[%c56_265, %c286_266], %172 {strides = array<i32>} : memref<72x572xf32, #tpu.memory_space<vmem>>, vector<8x286xf32>,
    %c0_267 = arith.constant 0 : index
    %c0_268 = arith.constant 0 : index
    %c38_269 = arith.constant 38 : index
    %174 = vector.load %arg12[%c0_267, %c0_268, %c38_269] : memref<2x8x324xf32, #tpu.memory_space<vmem>>, vector<1x8x286xf32>
    %175 = vector.shape_cast %174 : vector<1x8x286xf32> to vector<8x286xf32>
    %c64 = arith.constant 64 : index
    %c0_270 = arith.constant 0 : index
    %176 = vector.load %arg14[%c64, %c0_270] : memref<72x572xf32, #tpu.memory_space<vmem>>, vector<8x286xf32>
    tpu.vector_store %arg14[%c64, %c0_270], %175 {strides = array<i32>} : memref<72x572xf32, #tpu.memory_space<vmem>>, vector<8x286xf32>,
    %c1_271 = arith.constant 1 : index
    %c0_272 = arith.constant 0 : index
    %c38_273 = arith.constant 38 : index
    %177 = vector.load %arg12[%c1_271, %c0_272, %c38_273] : memref<2x8x324xf32, #tpu.memory_space<vmem>>, vector<1x8x286xf32>
    %178 = vector.shape_cast %177 : vector<1x8x286xf32> to vector<8x286xf32>
    %c64_274 = arith.constant 64 : index
    %c286_275 = arith.constant 286 : index
    %179 = vector.load %arg14[%c64_274, %c286_275] : memref<72x572xf32, #tpu.memory_space<vmem>>, vector<8x286xf32>
    tpu.vector_store %arg14[%c64_274, %c286_275], %178 {strides = array<i32>} : memref<72x572xf32, #tpu.memory_space<vmem>>, vector<8x286xf32>,
    %c0_276 = arith.constant 0 : index
    %c0_277 = arith.constant 0 : index
    %180 = vector.load %arg4[%c0_276, %c0_277] : memref<8x72xf32, #tpu.memory_space<vmem>>, vector<8x72xf32>
    %c0_278 = arith.constant 0 : index
    %c0_279 = arith.constant 0 : index
    %181 = vector.load %arg14[%c0_278, %c0_279] : memref<72x572xf32, #tpu.memory_space<vmem>>, vector<72x572xf32>
    %cst_280 = arith.constant dense<0.000000e+00> : vector<8x572xf32>
    %182 = tpu.matmul %180, %181, %cst_280 {dimension_numbers = #tpu.dot_dimension_numbers<[1], [0], [0], [1], [0, 0, 1, 1], [], []>} : vector<8x72xf32>, vector<72x572xf32>, vector<8x572xf32> -> vector<8x572xf32>
    %c0_281 = arith.constant 0 : index
    %c0_282 = arith.constant 0 : index
    %183 = vector.load %arg5[%c0_281, %c0_282] : memref<8x1xf32, #tpu.memory_space<vmem>>, vector<8x1xf32>
    %184 = vector.broadcast %183 : vector<8x1xf32> to vector<8x572xf32>
    %185 = arith.addf %182, %184 : vector<8x572xf32>
    %cst_283 = arith.constant 0.000000e+00 : f32
    %186 = vector.broadcast %cst_283 : f32 to vector<8x572xf32>
    %187 = arith.maximumf %185, %186 : vector<8x572xf32>
    %c0_284 = arith.constant 0 : index
    %c0_285 = arith.constant 0 : index
    %188 = vector.load %arg16[%c0_284, %c0_285] : memref<8x572xf32, #tpu.memory_space<vmem>>, vector<8x572xf32>
    tpu.vector_store %arg16[%c0_284, %c0_285], %187 {strides = array<i32>} : memref<8x572xf32, #tpu.memory_space<vmem>>, vector<8x572xf32>,
    %c0_286 = arith.constant 0 : index
    %c0_287 = arith.constant 0 : index
    %189 = vector.load %arg16[%c0_286, %c0_287] : memref<8x572xf32, #tpu.memory_space<vmem>>, vector<8x267xf32>
    %c0_288 = arith.constant 0 : index
    %c1_289 = arith.constant 1 : index
    %190 = vector.load %arg16[%c0_288, %c1_289] : memref<8x572xf32, #tpu.memory_space<vmem>>, vector<8x267xf32>
    %191 = arith.maximumf %189, %190 : vector<8x267xf32>
    %c0_290 = arith.constant 0 : index
    %c18_291 = arith.constant 18 : index
    %192 = vector.load %arg16[%c0_290, %c18_291] : memref<8x572xf32, #tpu.memory_space<vmem>>, vector<8x267xf32>
    %193 = arith.maximumf %191, %192 : vector<8x267xf32>
    %c0_292 = arith.constant 0 : index
    %c19_293 = arith.constant 19 : index
    %194 = vector.load %arg16[%c0_292, %c19_293] : memref<8x572xf32, #tpu.memory_space<vmem>>, vector<8x267xf32>
    %195 = arith.maximumf %193, %194 : vector<8x267xf32>
    %c0_294 = arith.constant 0 : index
    %c0_295 = arith.constant 0 : index
    %196 = vector.load %arg7[%c0_294, %c0_295] : memref<1x32xf32, #tpu.memory_space<vmem>>, vector<1x32xf32>
    %197 = vector.extract_strided_slice %195 {offsets = [0, 0], sizes = [1, 267], strides = [1, 1]} : vector<8x267xf32> to vector<1x267xf32>
    %c0_296 = arith.constant 0 : index
    %c0_297 = arith.constant 0 : index
    %c0_298 = arith.constant 0 : index
    %198 = vector.load %arg6[%c0_296, %c0_297, %c0_298] : memref<8x267x32xf32, #tpu.memory_space<vmem>>, vector<1x267x32xf32>
    %199 = vector.shape_cast %198 : vector<1x267x32xf32> to vector<267x32xf32>
    %cst_299 = arith.constant dense<0.000000e+00> : vector<1x32xf32>
    %200 = tpu.matmul %197, %199, %cst_299 {dimension_numbers = #tpu.dot_dimension_numbers<[1], [0], [0], [1], [0, 0, 1, 1], [], []>} : vector<1x267xf32>, vector<267x32xf32>, vector<1x32xf32> -> vector<1x32xf32>
    %201 = arith.addf %196, %200 : vector<1x32xf32>
    %202 = vector.extract_strided_slice %195 {offsets = [1, 0], sizes = [1, 267], strides = [1, 1]} : vector<8x267xf32> to vector<1x267xf32>
    %c1_300 = arith.constant 1 : index
    %c0_301 = arith.constant 0 : index
    %c0_302 = arith.constant 0 : index
    %203 = vector.load %arg6[%c1_300, %c0_301, %c0_302] : memref<8x267x32xf32, #tpu.memory_space<vmem>>, vector<1x267x32xf32>
    %204 = vector.shape_cast %203 : vector<1x267x32xf32> to vector<267x32xf32>
    %cst_303 = arith.constant dense<0.000000e+00> : vector<1x32xf32>
    %205 = tpu.matmul %202, %204, %cst_303 {dimension_numbers = #tpu.dot_dimension_numbers<[1], [0], [0], [1], [0, 0, 1, 1], [], []>} : vector<1x267xf32>, vector<267x32xf32>, vector<1x32xf32> -> vector<1x32xf32>
    %206 = arith.addf %201, %205 : vector<1x32xf32>
    %207 = vector.extract_strided_slice %195 {offsets = [2, 0], sizes = [1, 267], strides = [1, 1]} : vector<8x267xf32> to vector<1x267xf32>
    %c2_304 = arith.constant 2 : index
    %c0_305 = arith.constant 0 : index
    %c0_306 = arith.constant 0 : index
    %208 = vector.load %arg6[%c2_304, %c0_305, %c0_306] : memref<8x267x32xf32, #tpu.memory_space<vmem>>, vector<1x267x32xf32>
    %209 = vector.shape_cast %208 : vector<1x267x32xf32> to vector<267x32xf32>
    %cst_307 = arith.constant dense<0.000000e+00> : vector<1x32xf32>
    %210 = tpu.matmul %207, %209, %cst_307 {dimension_numbers = #tpu.dot_dimension_numbers<[1], [0], [0], [1], [0, 0, 1, 1], [], []>} : vector<1x267xf32>, vector<267x32xf32>, vector<1x32xf32> -> vector<1x32xf32>
    %211 = arith.addf %206, %210 : vector<1x32xf32>
    %212 = vector.extract_strided_slice %195 {offsets = [3, 0], sizes = [1, 267], strides = [1, 1]} : vector<8x267xf32> to vector<1x267xf32>
    %c3_308 = arith.constant 3 : index
    %c0_309 = arith.constant 0 : index
    %c0_310 = arith.constant 0 : index
    %213 = vector.load %arg6[%c3_308, %c0_309, %c0_310] : memref<8x267x32xf32, #tpu.memory_space<vmem>>, vector<1x267x32xf32>
    %214 = vector.shape_cast %213 : vector<1x267x32xf32> to vector<267x32xf32>
    %cst_311 = arith.constant dense<0.000000e+00> : vector<1x32xf32>
    %215 = tpu.matmul %212, %214, %cst_311 {dimension_numbers = #tpu.dot_dimension_numbers<[1], [0], [0], [1], [0, 0, 1, 1], [], []>} : vector<1x267xf32>, vector<267x32xf32>, vector<1x32xf32> -> vector<1x32xf32>
    %216 = arith.addf %211, %215 : vector<1x32xf32>
    %217 = vector.extract_strided_slice %195 {offsets = [4, 0], sizes = [1, 267], strides = [1, 1]} : vector<8x267xf32> to vector<1x267xf32>
    %c4_312 = arith.constant 4 : index
    %c0_313 = arith.constant 0 : index
    %c0_314 = arith.constant 0 : index
    %218 = vector.load %arg6[%c4_312, %c0_313, %c0_314] : memref<8x267x32xf32, #tpu.memory_space<vmem>>, vector<1x267x32xf32>
    %219 = vector.shape_cast %218 : vector<1x267x32xf32> to vector<267x32xf32>
    %cst_315 = arith.constant dense<0.000000e+00> : vector<1x32xf32>
    %220 = tpu.matmul %217, %219, %cst_315 {dimension_numbers = #tpu.dot_dimension_numbers<[1], [0], [0], [1], [0, 0, 1, 1], [], []>} : vector<1x267xf32>, vector<267x32xf32>, vector<1x32xf32> -> vector<1x32xf32>
    %221 = arith.addf %216, %220 : vector<1x32xf32>
    %222 = vector.extract_strided_slice %195 {offsets = [5, 0], sizes = [1, 267], strides = [1, 1]} : vector<8x267xf32> to vector<1x267xf32>
    %c5_316 = arith.constant 5 : index
    %c0_317 = arith.constant 0 : index
    %c0_318 = arith.constant 0 : index
    %223 = vector.load %arg6[%c5_316, %c0_317, %c0_318] : memref<8x267x32xf32, #tpu.memory_space<vmem>>, vector<1x267x32xf32>
    %224 = vector.shape_cast %223 : vector<1x267x32xf32> to vector<267x32xf32>
    %cst_319 = arith.constant dense<0.000000e+00> : vector<1x32xf32>
    %225 = tpu.matmul %222, %224, %cst_319 {dimension_numbers = #tpu.dot_dimension_numbers<[1], [0], [0], [1], [0, 0, 1, 1], [], []>} : vector<1x267xf32>, vector<267x32xf32>, vector<1x32xf32> -> vector<1x32xf32>
    %226 = arith.addf %221, %225 : vector<1x32xf32>
    %227 = vector.extract_strided_slice %195 {offsets = [6, 0], sizes = [1, 267], strides = [1, 1]} : vector<8x267xf32> to vector<1x267xf32>
    %c6_320 = arith.constant 6 : index
    %c0_321 = arith.constant 0 : index
    %c0_322 = arith.constant 0 : index
    %228 = vector.load %arg6[%c6_320, %c0_321, %c0_322] : memref<8x267x32xf32, #tpu.memory_space<vmem>>, vector<1x267x32xf32>
    %229 = vector.shape_cast %228 : vector<1x267x32xf32> to vector<267x32xf32>
    %cst_323 = arith.constant dense<0.000000e+00> : vector<1x32xf32>
    %230 = tpu.matmul %227, %229, %cst_323 {dimension_numbers = #tpu.dot_dimension_numbers<[1], [0], [0], [1], [0, 0, 1, 1], [], []>} : vector<1x267xf32>, vector<267x32xf32>, vector<1x32xf32> -> vector<1x32xf32>
    %231 = arith.addf %226, %230 : vector<1x32xf32>
    %232 = vector.extract_strided_slice %195 {offsets = [7, 0], sizes = [1, 267], strides = [1, 1]} : vector<8x267xf32> to vector<1x267xf32>
    %c7_324 = arith.constant 7 : index
    %c0_325 = arith.constant 0 : index
    %c0_326 = arith.constant 0 : index
    %233 = vector.load %arg6[%c7_324, %c0_325, %c0_326] : memref<8x267x32xf32, #tpu.memory_space<vmem>>, vector<1x267x32xf32>
    %234 = vector.shape_cast %233 : vector<1x267x32xf32> to vector<267x32xf32>
    %cst_327 = arith.constant dense<0.000000e+00> : vector<1x32xf32>
    %235 = tpu.matmul %232, %234, %cst_327 {dimension_numbers = #tpu.dot_dimension_numbers<[1], [0], [0], [1], [0, 0, 1, 1], [], []>} : vector<1x267xf32>, vector<267x32xf32>, vector<1x32xf32> -> vector<1x32xf32>
    %236 = arith.addf %231, %235 : vector<1x32xf32>
    %cst_328 = arith.constant 0.000000e+00 : f32
    %237 = vector.broadcast %cst_328 : f32 to vector<1x32xf32>
    %238 = arith.maximumf %236, %237 : vector<1x32xf32>
    %c0_329 = arith.constant 0 : index
    %c0_330 = arith.constant 0 : index
    %239 = vector.load %arg8[%c0_329, %c0_330] : memref<32x10xf32, #tpu.memory_space<vmem>>, vector<32x10xf32>
    %cst_331 = arith.constant dense<0.000000e+00> : vector<1x10xf32>
    %240 = tpu.matmul %238, %239, %cst_331 {dimension_numbers = #tpu.dot_dimension_numbers<[1], [0], [0], [1], [0, 0, 1, 1], [], []>} : vector<1x32xf32>, vector<32x10xf32>, vector<1x10xf32> -> vector<1x10xf32>
    %c0_332 = arith.constant 0 : index
    %c0_333 = arith.constant 0 : index
    %241 = vector.load %arg9[%c0_332, %c0_333] : memref<1x10xf32, #tpu.memory_space<vmem>>, vector<1x10xf32>
    %242 = arith.addf %240, %241 : vector<1x10xf32>
    %c0_334 = arith.constant 0 : index
    %c0_335 = arith.constant 0 : index
    %243 = vector.load %arg10[%c0_334, %c0_335] : memref<2x10xf32, #tpu.memory_space<vmem>>, vector<1x10xf32>
    tpu.vector_store %arg10[%c0_334, %c0_335], %242 {strides = array<i32>} : memref<2x10xf32, #tpu.memory_space<vmem>>, vector<1x10xf32>,
    %c0_336 = arith.constant 0 : index
    %c286_337 = arith.constant 286 : index
    %244 = vector.load %arg16[%c0_336, %c286_337] : memref<8x572xf32, #tpu.memory_space<vmem>>, vector<8x267xf32>
    %c0_338 = arith.constant 0 : index
    %c287 = arith.constant 287 : index
    %245 = vector.load %arg16[%c0_338, %c287] : memref<8x572xf32, #tpu.memory_space<vmem>>, vector<8x267xf32>
    %246 = arith.maximumf %244, %245 : vector<8x267xf32>
    %c0_339 = arith.constant 0 : index
    %c304 = arith.constant 304 : index
    %247 = vector.load %arg16[%c0_339, %c304] : memref<8x572xf32, #tpu.memory_space<vmem>>, vector<8x267xf32>
    %248 = arith.maximumf %246, %247 : vector<8x267xf32>
    %c0_340 = arith.constant 0 : index
    %c305 = arith.constant 305 : index
    %249 = vector.load %arg16[%c0_340, %c305] : memref<8x572xf32, #tpu.memory_space<vmem>>, vector<8x267xf32>
    %250 = arith.maximumf %248, %249 : vector<8x267xf32>
    %c0_341 = arith.constant 0 : index
    %c0_342 = arith.constant 0 : index
    %251 = vector.load %arg7[%c0_341, %c0_342] : memref<1x32xf32, #tpu.memory_space<vmem>>, vector<1x32xf32>
    %252 = vector.extract_strided_slice %250 {offsets = [0, 0], sizes = [1, 267], strides = [1, 1]} : vector<8x267xf32> to vector<1x267xf32>
    %c0_343 = arith.constant 0 : index
    %c0_344 = arith.constant 0 : index
    %c0_345 = arith.constant 0 : index
    %253 = vector.load %arg6[%c0_343, %c0_344, %c0_345] : memref<8x267x32xf32, #tpu.memory_space<vmem>>, vector<1x267x32xf32>
    %254 = vector.shape_cast %253 : vector<1x267x32xf32> to vector<267x32xf32>
    %cst_346 = arith.constant dense<0.000000e+00> : vector<1x32xf32>
    %255 = tpu.matmul %252, %254, %cst_346 {dimension_numbers = #tpu.dot_dimension_numbers<[1], [0], [0], [1], [0, 0, 1, 1], [], []>} : vector<1x267xf32>, vector<267x32xf32>, vector<1x32xf32> -> vector<1x32xf32>
    %256 = arith.addf %251, %255 : vector<1x32xf32>
    %257 = vector.extract_strided_slice %250 {offsets = [1, 0], sizes = [1, 267], strides = [1, 1]} : vector<8x267xf32> to vector<1x267xf32>
    %c1_347 = arith.constant 1 : index
    %c0_348 = arith.constant 0 : index
    %c0_349 = arith.constant 0 : index
    %258 = vector.load %arg6[%c1_347, %c0_348, %c0_349] : memref<8x267x32xf32, #tpu.memory_space<vmem>>, vector<1x267x32xf32>
    %259 = vector.shape_cast %258 : vector<1x267x32xf32> to vector<267x32xf32>
    %cst_350 = arith.constant dense<0.000000e+00> : vector<1x32xf32>
    %260 = tpu.matmul %257, %259, %cst_350 {dimension_numbers = #tpu.dot_dimension_numbers<[1], [0], [0], [1], [0, 0, 1, 1], [], []>} : vector<1x267xf32>, vector<267x32xf32>, vector<1x32xf32> -> vector<1x32xf32>
    %261 = arith.addf %256, %260 : vector<1x32xf32>
    %262 = vector.extract_strided_slice %250 {offsets = [2, 0], sizes = [1, 267], strides = [1, 1]} : vector<8x267xf32> to vector<1x267xf32>
    %c2_351 = arith.constant 2 : index
    %c0_352 = arith.constant 0 : index
    %c0_353 = arith.constant 0 : index
    %263 = vector.load %arg6[%c2_351, %c0_352, %c0_353] : memref<8x267x32xf32, #tpu.memory_space<vmem>>, vector<1x267x32xf32>
    %264 = vector.shape_cast %263 : vector<1x267x32xf32> to vector<267x32xf32>
    %cst_354 = arith.constant dense<0.000000e+00> : vector<1x32xf32>
    %265 = tpu.matmul %262, %264, %cst_354 {dimension_numbers = #tpu.dot_dimension_numbers<[1], [0], [0], [1], [0, 0, 1, 1], [], []>} : vector<1x267xf32>, vector<267x32xf32>, vector<1x32xf32> -> vector<1x32xf32>
    %266 = arith.addf %261, %265 : vector<1x32xf32>
    %267 = vector.extract_strided_slice %250 {offsets = [3, 0], sizes = [1, 267], strides = [1, 1]} : vector<8x267xf32> to vector<1x267xf32>
    %c3_355 = arith.constant 3 : index
    %c0_356 = arith.constant 0 : index
    %c0_357 = arith.constant 0 : index
    %268 = vector.load %arg6[%c3_355, %c0_356, %c0_357] : memref<8x267x32xf32, #tpu.memory_space<vmem>>, vector<1x267x32xf32>
    %269 = vector.shape_cast %268 : vector<1x267x32xf32> to vector<267x32xf32>
    %cst_358 = arith.constant dense<0.000000e+00> : vector<1x32xf32>
    %270 = tpu.matmul %267, %269, %cst_358 {dimension_numbers = #tpu.dot_dimension_numbers<[1], [0], [0], [1], [0, 0, 1, 1], [], []>} : vector<1x267xf32>, vector<267x32xf32>, vector<1x32xf32> -> vector<1x32xf32>
    %271 = arith.addf %266, %270 : vector<1x32xf32>
    %272 = vector.extract_strided_slice %250 {offsets = [4, 0], sizes = [1, 267], strides = [1, 1]} : vector<8x267xf32> to vector<1x267xf32>
    %c4_359 = arith.constant 4 : index
    %c0_360 = arith.constant 0 : index
    %c0_361 = arith.constant 0 : index
    %273 = vector.load %arg6[%c4_359, %c0_360, %c0_361] : memref<8x267x32xf32, #tpu.memory_space<vmem>>, vector<1x267x32xf32>
    %274 = vector.shape_cast %273 : vector<1x267x32xf32> to vector<267x32xf32>
    %cst_362 = arith.constant dense<0.000000e+00> : vector<1x32xf32>
    %275 = tpu.matmul %272, %274, %cst_362 {dimension_numbers = #tpu.dot_dimension_numbers<[1], [0], [0], [1], [0, 0, 1, 1], [], []>} : vector<1x267xf32>, vector<267x32xf32>, vector<1x32xf32> -> vector<1x32xf32>
    %276 = arith.addf %271, %275 : vector<1x32xf32>
    %277 = vector.extract_strided_slice %250 {offsets = [5, 0], sizes = [1, 267], strides = [1, 1]} : vector<8x267xf32> to vector<1x267xf32>
    %c5_363 = arith.constant 5 : index
    %c0_364 = arith.constant 0 : index
    %c0_365 = arith.constant 0 : index
    %278 = vector.load %arg6[%c5_363, %c0_364, %c0_365] : memref<8x267x32xf32, #tpu.memory_space<vmem>>, vector<1x267x32xf32>
    %279 = vector.shape_cast %278 : vector<1x267x32xf32> to vector<267x32xf32>
    %cst_366 = arith.constant dense<0.000000e+00> : vector<1x32xf32>
    %280 = tpu.matmul %277, %279, %cst_366 {dimension_numbers = #tpu.dot_dimension_numbers<[1], [0], [0], [1], [0, 0, 1, 1], [], []>} : vector<1x267xf32>, vector<267x32xf32>, vector<1x32xf32> -> vector<1x32xf32>
    %281 = arith.addf %276, %280 : vector<1x32xf32>
    %282 = vector.extract_strided_slice %250 {offsets = [6, 0], sizes = [1, 267], strides = [1, 1]} : vector<8x267xf32> to vector<1x267xf32>
    %c6_367 = arith.constant 6 : index
    %c0_368 = arith.constant 0 : index
    %c0_369 = arith.constant 0 : index
    %283 = vector.load %arg6[%c6_367, %c0_368, %c0_369] : memref<8x267x32xf32, #tpu.memory_space<vmem>>, vector<1x267x32xf32>
    %284 = vector.shape_cast %283 : vector<1x267x32xf32> to vector<267x32xf32>
    %cst_370 = arith.constant dense<0.000000e+00> : vector<1x32xf32>
    %285 = tpu.matmul %282, %284, %cst_370 {dimension_numbers = #tpu.dot_dimension_numbers<[1], [0], [0], [1], [0, 0, 1, 1], [], []>} : vector<1x267xf32>, vector<267x32xf32>, vector<1x32xf32> -> vector<1x32xf32>
    %286 = arith.addf %281, %285 : vector<1x32xf32>
    %287 = vector.extract_strided_slice %250 {offsets = [7, 0], sizes = [1, 267], strides = [1, 1]} : vector<8x267xf32> to vector<1x267xf32>
    %c7_371 = arith.constant 7 : index
    %c0_372 = arith.constant 0 : index
    %c0_373 = arith.constant 0 : index
    %288 = vector.load %arg6[%c7_371, %c0_372, %c0_373] : memref<8x267x32xf32, #tpu.memory_space<vmem>>, vector<1x267x32xf32>
    %289 = vector.shape_cast %288 : vector<1x267x32xf32> to vector<267x32xf32>
    %cst_374 = arith.constant dense<0.000000e+00> : vector<1x32xf32>
    %290 = tpu.matmul %287, %289, %cst_374 {dimension_numbers = #tpu.dot_dimension_numbers<[1], [0], [0], [1], [0, 0, 1, 1], [], []>} : vector<1x267xf32>, vector<267x32xf32>, vector<1x32xf32> -> vector<1x32xf32>
    %291 = arith.addf %286, %290 : vector<1x32xf32>
    %cst_375 = arith.constant 0.000000e+00 : f32
    %292 = vector.broadcast %cst_375 : f32 to vector<1x32xf32>
    %293 = arith.maximumf %291, %292 : vector<1x32xf32>
    %c0_376 = arith.constant 0 : index
    %c0_377 = arith.constant 0 : index
    %294 = vector.load %arg8[%c0_376, %c0_377] : memref<32x10xf32, #tpu.memory_space<vmem>>, vector<32x10xf32>
    %cst_378 = arith.constant dense<0.000000e+00> : vector<1x10xf32>
    %295 = tpu.matmul %293, %294, %cst_378 {dimension_numbers = #tpu.dot_dimension_numbers<[1], [0], [0], [1], [0, 0, 1, 1], [], []>} : vector<1x32xf32>, vector<32x10xf32>, vector<1x10xf32> -> vector<1x10xf32>
    %c0_379 = arith.constant 0 : index
    %c0_380 = arith.constant 0 : index
    %296 = vector.load %arg9[%c0_379, %c0_380] : memref<1x10xf32, #tpu.memory_space<vmem>>, vector<1x10xf32>
    %297 = arith.addf %295, %296 : vector<1x10xf32>
    %c1_381 = arith.constant 1 : index
    %c0_382 = arith.constant 0 : index
    %298 = vector.load %arg10[%c1_381, %c0_382] : memref<2x10xf32, #tpu.memory_space<vmem>>, vector<1x10xf32>
    tpu.vector_store %arg10[%c1_381, %c0_382], %297 {strides = array<i32>} : memref<2x10xf32, #tpu.memory_space<vmem>>, vector<1x10xf32>,
    return
  }
}

</mosaic_0001>

<llo_original>
// kernel: conv_classifier_forward.1
$region0: #{conv_classifier_forward.1}
  #allocation0 [shape = 'u32[]', space=smem, size = 0x4, offset = 0x4, fixed_abs, tag = 'smem constant byte address 0x4 - core index']
  #allocation1 [shape = 'u32[72,128]{1,0:T(1,128)}', space=vmem, size = 0x9000, scoped, tag = 'internal scratch']
  #allocation2 [shape = 'f32[2,4,324]{2,1,0:T(4,128)}', space=vmem, size = 0x3000, scoped, tag = 'scratch operand']
  #allocation3 [shape = 'f32[2,8,324]{2,1,0:T(8,128)}', space=vmem, size = 0x6000, scoped, tag = 'scratch operand']
  #allocation4 [shape = 'f32[36,572]{1,0:T(8,128)}', space=vmem, size = 0x19000, scoped, tag = 'scratch operand']
  #allocation5 [shape = 'f32[72,572]{1,0:T(8,128)}', space=vmem, size = 0x2d000, scoped, tag = 'scratch operand']
  #allocation6 [shape = 'f32[8,572]{1,0:T(8,128)}', space=vmem, size = 0x5000, scoped, tag = 'scratch operand']
  #allocation7 [shape = 'f32[8,572]{1,0:T(8,128)}', space=vmem, size = 0x5000, scoped, tag = 'scratch operand']
  %s0 = inlined_call_operand.vmem [shape: f32[2,4,16,16], index: 0, kind: input, shape index: {}]
  %s1 = inlined_call_operand.vmem [shape: f32[1,572], index: 1, kind: input, shape index: {}]
  %s2 = inlined_call_operand.vmem [shape: f32[8,36], index: 2, kind: input, shape index: {}]
  %s3 = inlined_call_operand.vmem [shape: f32[8,1], index: 3, kind: input, shape index: {}]
  %s4 = inlined_call_operand.vmem [shape: f32[8,72], index: 4, kind: input, shape index: {}]
  %s5 = inlined_call_operand.vmem [shape: f32[8,1], index: 5, kind: input, shape index: {}]
  %s6 = inlined_call_operand.vmem [shape: f32[8,267,32], index: 6, kind: input, shape index: {}]
  %s7 = inlined_call_operand.vmem [shape: f32[1,32], index: 7, kind: input, shape index: {}]
  %s8 = inlined_call_operand.vmem [shape: f32[32,10], index: 8, kind: input, shape index: {}]
  %s9 = inlined_call_operand.vmem [shape: f32[1,10], index: 9, kind: input, shape index: {}]
  %s10 = inlined_call_operand.hbm [shape: f32[2,10], index: 10, kind: output, shape index: {}]
  %s11 = sld [smem:[#allocation0]]
  $region50: #{conv_classifier_forward.1} parent=0
    _
  %s13 = ssub.s32 1, %s11
  %s14 = scalar_select 0, %s13, %s11
  $region1: #{conv_classifier_forward.1} parent=0
    #allocation8 [shape = 'u8[1024]{0}', space=vmem, size = 0x400, scoped, tag = 'output window, operand 0, single buffered']
    #allocation9 [shape = 's32[1]{0}', space=sflag, size = 0x4, scoped, tag = 'scoped memory for conv_classifier_forward.1']
    %15 = vsyncpa [#allocation9], 0
    // Predicated region
    $region2: #{conv_classifier_forward.1} parent=1 // pred_check
      _
    $region3: #{conv_classifier_forward.1} parent=1 // pred_check_branch
      %17 = sbr.rel (0) target = $region5
    $region4: #{conv_classifier_forward.1} parent=1 // pred_region
      _
    $region5: #{conv_classifier_forward.1} parent=1 // pred_fallthru
      _
    // Predicated region
    $region6: #{conv_classifier_forward.1} parent=1 // pred_check
      _
    $region7: #{conv_classifier_forward.1} parent=1 // pred_check_branch
      %19 = sbr.rel (0) target = $region9
    $region8: #{conv_classifier_forward.1} parent=1 // pred_region
      _
    $region9: #{conv_classifier_forward.1} parent=1 // pred_fallthru
      _
    // Predicated region
    $region10: #{conv_classifier_forward.1} parent=1 // pred_check
      _
    $region11: #{conv_classifier_forward.1} parent=1 // pred_check_branch
      %21 = sbr.rel (0) target = $region13
    $region12: #{conv_classifier_forward.1} parent=1 // pred_region
      _
    $region13: #{conv_classifier_forward.1} parent=1 // pred_fallthru
      _
    // Predicated region
    $region14: #{conv_classifier_forward.1} parent=1 // pred_check
      _
    $region15: #{conv_classifier_forward.1} parent=1 // pred_check_branch
      %23 = sbr.rel (0) target = $region17
    $region16: #{conv_classifier_forward.1} parent=1 // pred_region
      _
    $region17: #{conv_classifier_forward.1} parent=1 // pred_fallthru
      _
    // Predicated region
    $region18: #{conv_classifier_forward.1} parent=1 // pred_check
      _
    $region19: #{conv_classifier_forward.1} parent=1 // pred_check_branch
      %25 = sbr.rel (0) target = $region21
    $region20: #{conv_classifier_forward.1} parent=1 // pred_region
      _
    $region21: #{conv_classifier_forward.1} parent=1 // pred_fallthru
      _
    // Predicated region
    $region22: #{conv_classifier_forward.1} parent=1 // pred_check
      _
    $region23: #{conv_classifier_forward.1} parent=1 // pred_check_branch
      %27 = sbr.rel (0) target = $region25
    $region24: #{conv_classifier_forward.1} parent=1 // pred_region
      _
    $region25: #{conv_classifier_forward.1} parent=1 // pred_fallthru
      _
    // Predicated region
    $region26: #{conv_classifier_forward.1} parent=1 // pred_check
      _
    $region27: #{conv_classifier_forward.1} parent=1 // pred_check_branch
      %29 = sbr.rel (0) target = $region29
    $region28: #{conv_classifier_forward.1} parent=1 // pred_region
      _
    $region29: #{conv_classifier_forward.1} parent=1 // pred_fallthru
      _
    // Predicated region
    $region30: #{conv_classifier_forward.1} parent=1 // pred_check
      _
    $region31: #{conv_classifier_forward.1} parent=1 // pred_check_branch
      %31 = sbr.rel (0) target = $region33
    $region32: #{conv_classifier_forward.1} parent=1 // pred_region
      _
    $region33: #{conv_classifier_forward.1} parent=1 // pred_fallthru
      _
    // Predicated region
    $region34: #{conv_classifier_forward.1} parent=1 // pred_check
      _
    $region35: #{conv_classifier_forward.1} parent=1 // pred_check_branch
      %33 = sbr.rel (0) target = $region37
    $region36: #{conv_classifier_forward.1} parent=1 // pred_region
      _
    $region37: #{conv_classifier_forward.1} parent=1 // pred_fallthru
      _
    // Predicated region
    $region38: #{conv_classifier_forward.1} parent=1 // pred_check
      _
    $region39: #{conv_classifier_forward.1} parent=1 // pred_check_branch
      %35 = sbr.rel (0) target = $region41
    $region40: #{conv_classifier_forward.1} parent=1 // pred_region
      _
    $region41: #{conv_classifier_forward.1} parent=1 // pred_fallthru
      _
    %36 = vst [vmem:[#allocation2] sm:$0xff] 0.0
    %vm37 = vcmask 551936
    %38 = vst.msk [vmem:[#allocation2 + $0x8] sm:$0xf] %vm37, 0.0
    %39 = vst [vmem:[#allocation2 + $0xc] sm:$0xff] 0.0
    %40 = vst.msk [vmem:[#allocation2 + $0x14] sm:$0xf] %vm37, 0.0
    %v41 = vld [vmem:[%s0] sm:$0x1]
    %v42 = vld [vmem:[%s0 + $0x10] sm:$0x1]
    %v43 = vld [vmem:[%s0 + $0x20] sm:$0x1]
    %v44 = vld [vmem:[%s0 + $0x30] sm:$0x1]
    %v45 = vld [vmem:[%s0 + $0x40] sm:$0x1]
    %v46 = vld [vmem:[%s0 + $0x50] sm:$0x1]
    %v47 = vld [vmem:[%s0 + $0x60] sm:$0x1]
    %v48 = vld [vmem:[%s0 + $0x70] sm:$0x1]
    %v57 = vrot.slane %v42, 7
    %vm58 = vcmask 1041409
    %v59 = vsel %vm58, %v57, %v41
    %vm60 = vcmask 1045509
    %v61 = vsel %vm60, %v57, %v59
    %v62 = vrot.slane %v43, 6
    %vm63 = vcmask 1042434
    %v64 = vsel %vm63, %v62, %v61
    %vm65 = vcmask 1046534
    %v66 = vsel %vm65, %v62, %v64
    %v67 = vrot.slane %v44, 5
    %vm68 = vcmask 1043459
    %v69 = vsel %vm68, %v67, %v66
    %vm70 = vcmask 1047559
    %v71 = vsel %vm70, %v67, %v69
    %v72 = vrot.slane %v46, 7
    %v73 = vsel %vm58, %v72, %v45
    %v74 = vsel %vm60, %v72, %v73
    %v75 = vrot.slane %v47, 6
    %v76 = vsel %vm63, %v75, %v74
    %v77 = vsel %vm65, %v75, %v76
    %v78 = vrot.slane %v48, 5
    %v79 = vsel %vm68, %v78, %v77
    %v80 = vsel %vm70, %v78, %v79
    %81 = vrot.lane.b32.xlu0 %v71, 19
    %v82 = vpop.permute.xlu0 %81
    %83 = vrot.lane.b32.xlu0 %v80, 19
    %v84 = vpop.permute.xlu0 %83
    %vm87 = vcmask 281752
    %88 = vst.msk [vmem:[#allocation2] sm:$0xf] %vm87, %v82
    %89 = vst.msk [vmem:[#allocation2 + $0xc] sm:$0xf] %vm87, %v84
    %v90 = vld [vmem:[%s0 + $0x1] sm:$0x1]
    %v91 = vld [vmem:[%s0 + $0x11] sm:$0x1]
    %v92 = vld [vmem:[%s0 + $0x21] sm:$0x1]
    %v93 = vld [vmem:[%s0 + $0x31] sm:$0x1]
    %v94 = vld [vmem:[%s0 + $0x41] sm:$0x1]
    %v95 = vld [vmem:[%s0 + $0x51] sm:$0x1]
    %v96 = vld [vmem:[%s0 + $0x61] sm:$0x1]
    %v97 = vld [vmem:[%s0 + $0x71] sm:$0x1]
    %v106 = vrot.slane %v91, 7
    %v107 = vsel %vm58, %v106, %v90
    %v108 = vsel %vm60, %v106, %v107
    %v109 = vrot.slane %v92, 6
    %v110 = vsel %vm63, %v109, %v108
    %v111 = vsel %vm65, %v109, %v110
    %v112 = vrot.slane %v93, 5
    %v113 = vsel %vm68, %v112, %v111
    %v114 = vsel %vm70, %v112, %v113
    %v115 = vrot.slane %v95, 7
    %v116 = vsel %vm58, %v115, %v94
    %v117 = vsel %vm60, %v115, %v116
    %v118 = vrot.slane %v96, 6
    %v119 = vsel %vm63, %v118, %v117
    %v120 = vsel %vm65, %v118, %v119
    %v121 = vrot.slane %v97, 5
    %v122 = vsel %vm68, %v121, %v120
    %v123 = vsel %vm70, %v121, %v122
    %124 = vrot.lane.b32.xlu0 %v114, 37
    %v125 = vpop.permute.xlu0 %124
    %126 = vrot.lane.b32.xlu0 %v123, 37
    %v127 = vpop.permute.xlu0 %126
    %vm130 = vcmask 429352
    %131 = vst.msk [vmem:[#allocation2] sm:$0xf] %vm130, %v125
    %132 = vst.msk [vmem:[#allocation2 + $0xc] sm:$0xf] %vm130, %v127
    %v133 = vld [vmem:[%s0 + $0x2] sm:$0x1]
    %v134 = vld [vmem:[%s0 + $0x12] sm:$0x1]
    %v135 = vld [vmem:[%s0 + $0x22] sm:$0x1]
    %v136 = vld [vmem:[%s0 + $0x32] sm:$0x1]
    %v137 = vld [vmem:[%s0 + $0x42] sm:$0x1]
    %v138 = vld [vmem:[%s0 + $0x52] sm:$0x1]
    %v139 = vld [vmem:[%s0 + $0x62] sm:$0x1]
    %v140 = vld [vmem:[%s0 + $0x72] sm:$0x1]
    %v149 = vrot.slane %v134, 7
    %v150 = vsel %vm58, %v149, %v133
    %v151 = vsel %vm60, %v149, %v150
    %v152 = vrot.slane %v135, 6
    %v153 = vsel %vm63, %v152, %v151
    %v154 = vsel %vm65, %v152, %v153
    %v155 = vrot.slane %v136, 5
    %v156 = vsel %vm68, %v155, %v154
    %v157 = vsel %vm70, %v155, %v156
    %v158 = vrot.slane %v138, 7
    %v159 = vsel %vm58, %v158, %v137
    %v160 = vsel %vm60, %v158, %v159
    %v161 = vrot.slane %v139, 6
    %v162 = vsel %vm63, %v161, %v160
    %v163 = vsel %vm65, %v161, %v162
    %v164 = vrot.slane %v140, 5
    %v165 = vsel %vm68, %v164, %v163
    %v166 = vsel %vm70, %v164, %v165
    %167 = vrot.lane.b32.xlu0 %v157, 55
    %v168 = vpop.permute.xlu0 %167
    %169 = vrot.lane.b32.xlu0 %v166, 55
    %v170 = vpop.permute.xlu0 %169
    %vm173 = vcmask 576952
    %174 = vst.msk [vmem:[#allocation2] sm:$0xf] %vm173, %v168
    %175 = vst.msk [vmem:[#allocation2 + $0xc] sm:$0xf] %vm173, %v170
    %v176 = vld [vmem:[%s0 + $0x3] sm:$0x1]
    %v177 = vld [vmem:[%s0 + $0x13] sm:$0x1]
    %v178 = vld [vmem:[%s0 + $0x23] sm:$0x1]
    %v179 = vld [vmem:[%s0 + $0x33] sm:$0x1]
    %v180 = vld [vmem:[%s0 + $0x43] sm:$0x1]
    %v181 = vld [vmem:[%s0 + $0x53] sm:$0x1]
    %v182 = vld [vmem:[%s0 + $0x63] sm:$0x1]
    %v183 = vld [vmem:[%s0 + $0x73] sm:$0x1]
    %v192 = vrot.slane %v177, 7
    %v193 = vsel %vm58, %v192, %v176
    %v194 = vsel %vm60, %v192, %v193
    %v195 = vrot.slane %v178, 6
    %v196 = vsel %vm63, %v195, %v194
    %v197 = vsel %vm65, %v195, %v196
    %v198 = vrot.slane %v179, 5
    %v199 = vsel %vm68, %v198, %v197
    %v200 = vsel %vm70, %v198, %v199
    %v201 = vrot.slane %v181, 7
    %v202 = vsel %vm58, %v201, %v180
    %v203 = vsel %vm60, %v201, %v202
    %v204 = vrot.slane %v182, 6
    %v205 = vsel %vm63, %v204, %v203
    %v206 = vsel %vm65, %v204, %v205
    %v207 = vrot.slane %v183, 5
    %v208 = vsel %vm68, %v207, %v206
    %v209 = vsel %vm70, %v207, %v208
    %210 = vrot.lane.b32.xlu0 %v200, 73
    %v211 = vpop.permute.xlu0 %210
    %212 = vrot.lane.b32.xlu0 %v209, 73
    %v213 = vpop.permute.xlu0 %212
    %vm216 = vcmask 724552
    %217 = vst.msk [vmem:[#allocation2] sm:$0xf] %vm216, %v211
    %218 = vst.msk [vmem:[#allocation2 + $0xc] sm:$0xf] %vm216, %v213
    %v219 = vld [vmem:[%s0 + $0x4] sm:$0x1]
    %v220 = vld [vmem:[%s0 + $0x14] sm:$0x1]
    %v221 = vld [vmem:[%s0 + $0x24] sm:$0x1]
    %v222 = vld [vmem:[%s0 + $0x34] sm:$0x1]
    %v223 = vld [vmem:[%s0 + $0x44] sm:$0x1]
    %v224 = vld [vmem:[%s0 + $0x54] sm:$0x1]
    %v225 = vld [vmem:[%s0 + $0x64] sm:$0x1]
    %v226 = vld [vmem:[%s0 + $0x74] sm:$0x1]
    %v235 = vrot.slane %v220, 7
    %v236 = vsel %vm58, %v235, %v219
    %v237 = vsel %vm60, %v235, %v236
    %v238 = vrot.slane %v221, 6
    %v239 = vsel %vm63, %v238, %v237
    %v240 = vsel %vm65, %v238, %v239
    %v241 = vrot.slane %v222, 5
    %v242 = vsel %vm68, %v241, %v240
    %v243 = vsel %vm70, %v241, %v242
    %v244 = vrot.slane %v224, 7
    %v245 = vsel %vm58, %v244, %v223
    %v246 = vsel %vm60, %v244, %v245
    %v247 = vrot.slane %v225, 6
    %v248 = vsel %vm63, %v247, %v246
    %v249 = vsel %vm65, %v247, %v248
    %v250 = vrot.slane %v226, 5
    %v251 = vsel %vm68, %v250, %v249
    %v252 = vsel %vm70, %v250, %v251
    %253 = vrot.lane.b32.xlu0 %v243, 91
    %v254 = vpop.permute.xlu0 %253
    %255 = vrot.lane.b32.xlu0 %v252, 91
    %v256 = vpop.permute.xlu0 %255
    %vm259 = vcmask 872152
    %260 = vst.msk [vmem:[#allocation2] sm:$0xf] %vm259, %v254
    %261 = vst.msk [vmem:[#allocation2 + $0xc] sm:$0xf] %vm259, %v256
    %v262 = vld [vmem:[%s0 + $0x5] sm:$0x1]
    %v263 = vld [vmem:[%s0 + $0x15] sm:$0x1]
    %v264 = vld [vmem:[%s0 + $0x25] sm:$0x1]
    %v265 = vld [vmem:[%s0 + $0x35] sm:$0x1]
    %v266 = vld [vmem:[%s0 + $0x45] sm:$0x1]
    %v267 = vld [vmem:[%s0 + $0x55] sm:$0x1]
    %v268 = vld [vmem:[%s0 + $0x65] sm:$0x1]
    %v269 = vld [vmem:[%s0 + $0x75] sm:$0x1]
    %v278 = vrot.slane %v263, 7
    %v279 = vsel %vm58, %v278, %v262
    %v280 = vsel %vm60, %v278, %v279
    %v281 = vrot.slane %v264, 6
    %v282 = vsel %vm63, %v281, %v280
    %v283 = vsel %vm65, %v281, %v282
    %v284 = vrot.slane %v265, 5
    %v285 = vsel %vm68, %v284, %v283
    %v286 = vsel %vm70, %v284, %v285
    %v287 = vrot.slane %v267, 7
    %v288 = vsel %vm58, %v287, %v266
    %v289 = vsel %vm60, %v287, %v288
    %v290 = vrot.slane %v268, 6
    %v291 = vsel %vm63, %v290, %v289
    %v292 = vsel %vm65, %v290, %v291
    %v293 = vrot.slane %v269, 5
    %v294 = vsel %vm68, %v293, %v292
    %v295 = vsel %vm70, %v293, %v294
    %296 = vrot.lane.b32.xlu0 %v286, 109
    %v297 = vpop.permute.xlu0 %296
    %298 = vrot.lane.b32.xlu0 %v295, 109
    %v299 = vpop.permute.xlu0 %298
    %vm302 = vcmask 1019752
    %303 = vst.msk [vmem:[#allocation2] sm:$0xf] %vm302, %v297
    %304 = vst.msk [vmem:[#allocation2 + $0xc] sm:$0xf] %vm302, %v299
    %v305 = vld [vmem:[%s0 + $0x6] sm:$0x1]
    %v306 = vld [vmem:[%s0 + $0x16] sm:$0x1]
    %v307 = vld [vmem:[%s0 + $0x26] sm:$0x1]
    %v308 = vld [vmem:[%s0 + $0x36] sm:$0x1]
    %v309 = vld [vmem:[%s0 + $0x46] sm:$0x1]
    %v310 = vld [vmem:[%s0 + $0x56] sm:$0x1]
    %v311 = vld [vmem:[%s0 + $0x66] sm:$0x1]
    %v312 = vld [vmem:[%s0 + $0x76] sm:$0x1]
    %v321 = vrot.slane %v306, 7
    %v322 = vsel %vm58, %v321, %v305
    %v323 = vsel %vm60, %v321, %v322
    %v324 = vrot.slane %v307, 6
    %v325 = vsel %vm63, %v324, %v323
    %v326 = vsel %vm65, %v324, %v325
    %v327 = vrot.slane %v308, 5
    %v328 = vsel %vm68, %v327, %v326
    %v329 = vsel %vm70, %v327, %v328
    %v330 = vrot.slane %v310, 7
    %v331 = vsel %vm58, %v330, %v309
    %v332 = vsel %vm60, %v330, %v331
    %v333 = vrot.slane %v311, 6
    %v334 = vsel %vm63, %v333, %v332
    %v335 = vsel %vm65, %v333, %v334
    %v336 = vrot.slane %v312, 5
    %v337 = vsel %vm68, %v336, %v335
    %v338 = vsel %vm70, %v336, %v337
    %339 = vrot.lane.b32.xlu0 %v329, 127
    %v340 = vpop.permute.xlu0 %339
    %341 = vrot.lane.b32.xlu0 %v338, 127
    %v342 = vpop.permute.xlu0 %341
    %v343 = vrot.slane %v340, 4
    %v344 = vrot.slane %v342, 4
    %vm345 = vcmask 1039360
    %v346 = vsel %vm345, %v343, %v340
    %v347 = vsel %vm345, %v344, %v342
    %vm350 = vcmask 1044472
    %vm351 = vcmask 121860
    %vm352 = vmor %vm351, %vm350
    %353 = vst.msk [vmem:[#allocation2] sm:$0xff] %vm352, %v346
    %354 = vst.msk [vmem:[#allocation2 + $0xc] sm:$0xff] %vm352, %v347
    %v355 = vld [vmem:[%s0 + $0x7] sm:$0x1]
    %v356 = vld [vmem:[%s0 + $0x17] sm:$0x1]
    %v357 = vld [vmem:[%s0 + $0x27] sm:$0x1]
    %v358 = vld [vmem:[%s0 + $0x37] sm:$0x1]
    %v359 = vld [vmem:[%s0 + $0x47] sm:$0x1]
    %v360 = vld [vmem:[%s0 + $0x57] sm:$0x1]
    %v361 = vld [vmem:[%s0 + $0x67] sm:$0x1]
    %v362 = vld [vmem:[%s0 + $0x77] sm:$0x1]
    %v371 = vrot.slane %v356, 7
    %v372 = vsel %vm58, %v371, %v355
    %v373 = vsel %vm60, %v371, %v372
    %v374 = vrot.slane %v357, 6
    %v375 = vsel %vm63, %v374, %v373
    %v376 = vsel %vm65, %v374, %v375
    %v377 = vrot.slane %v358, 5
    %v378 = vsel %vm68, %v377, %v376
    %v379 = vsel %vm70, %v377, %v378
    %v380 = vrot.slane %v360, 7
    %v381 = vsel %vm58, %v380, %v359
    %v382 = vsel %vm60, %v380, %v381
    %v383 = vrot.slane %v361, 6
    %v384 = vsel %vm63, %v383, %v382
    %v385 = vsel %vm65, %v383, %v384
    %v386 = vrot.slane %v362, 5
    %v387 = vsel %vm68, %v386, %v385
    %v388 = vsel %vm70, %v386, %v387
    %389 = vrot.lane.b32.xlu0 %v379, 17
    %v390 = vpop.permute.xlu0 %389
    %391 = vrot.lane.b32.xlu0 %v388, 17
    %v392 = vpop.permute.xlu0 %391
    %vm395 = vcmask 265352
    %396 = vst.msk [vmem:[#allocation2 + $0x4] sm:$0xf] %vm395, %v390
    %397 = vst.msk [vmem:[#allocation2 + $0x10] sm:$0xf] %vm395, %v392
    %v398 = vld [vmem:[%s0 + $0x8] sm:$0x1]
    %v399 = vld [vmem:[%s0 + $0x18] sm:$0x1]
    %v400 = vld [vmem:[%s0 + $0x28] sm:$0x1]
    %v401 = vld [vmem:[%s0 + $0x38] sm:$0x1]
    %v402 = vld [vmem:[%s0 + $0x48] sm:$0x1]
    %v403 = vld [vmem:[%s0 + $0x58] sm:$0x1]
    %v404 = vld [vmem:[%s0 + $0x68] sm:$0x1]
    %v405 = vld [vmem:[%s0 + $0x78] sm:$0x1]
    %v414 = vrot.slane %v399, 7
    %v415 = vsel %vm58, %v414, %v398
    %v416 = vsel %vm60, %v414, %v415
    %v417 = vrot.slane %v400, 6
    %v418 = vsel %vm63, %v417, %v416
    %v419 = vsel %vm65, %v417, %v418
    %v420 = vrot.slane %v401, 5
    %v421 = vsel %vm68, %v420, %v419
    %v422 = vsel %vm70, %v420, %v421
    %v423 = vrot.slane %v403, 7
    %v424 = vsel %vm58, %v423, %v402
    %v425 = vsel %vm60, %v423, %v424
    %v426 = vrot.slane %v404, 6
    %v427 = vsel %vm63, %v426, %v425
    %v428 = vsel %vm65, %v426, %v427
    %v429 = vrot.slane %v405, 5
    %v430 = vsel %vm68, %v429, %v428
    %v431 = vsel %vm70, %v429, %v430
    %432 = vrot.lane.b32.xlu0 %v422, 35
    %v433 = vpop.permute.xlu0 %432
    %434 = vrot.lane.b32.xlu0 %v431, 35
    %v435 = vpop.permute.xlu0 %434
    %vm438 = vcmask 412952
    %439 = vst.msk [vmem:[#allocation2 + $0x4] sm:$0xf] %vm438, %v433
    %440 = vst.msk [vmem:[#allocation2 + $0x10] sm:$0xf] %vm438, %v435
    %v441 = vld [vmem:[%s0 + $0x9] sm:$0x1]
    %v442 = vld [vmem:[%s0 + $0x19] sm:$0x1]
    %v443 = vld [vmem:[%s0 + $0x29] sm:$0x1]
    %v444 = vld [vmem:[%s0 + $0x39] sm:$0x1]
    %v445 = vld [vmem:[%s0 + $0x49] sm:$0x1]
    %v446 = vld [vmem:[%s0 + $0x59] sm:$0x1]
    %v447 = vld [vmem:[%s0 + $0x69] sm:$0x1]
    %v448 = vld [vmem:[%s0 + $0x79] sm:$0x1]
    %v457 = vrot.slane %v442, 7
    %v458 = vsel %vm58, %v457, %v441
    %v459 = vsel %vm60, %v457, %v458
    %v460 = vrot.slane %v443, 6
    %v461 = vsel %vm63, %v460, %v459
    %v462 = vsel %vm65, %v460, %v461
    %v463 = vrot.slane %v444, 5
    %v464 = vsel %vm68, %v463, %v462
    %v465 = vsel %vm70, %v463, %v464
    %v466 = vrot.slane %v446, 7
    %v467 = vsel %vm58, %v466, %v445
    %v468 = vsel %vm60, %v466, %v467
    %v469 = vrot.slane %v447, 6
    %v470 = vsel %vm63, %v469, %v468
    %v471 = vsel %vm65, %v469, %v470
    %v472 = vrot.slane %v448, 5
    %v473 = vsel %vm68, %v472, %v471
    %v474 = vsel %vm70, %v472, %v473
    %475 = vrot.lane.b32.xlu0 %v465, 53
    %v476 = vpop.permute.xlu0 %475
    %477 = vrot.lane.b32.xlu0 %v474, 53
    %v478 = vpop.permute.xlu0 %477
    %vm481 = vcmask 560552
    %482 = vst.msk [vmem:[#allocation2 + $0x4] sm:$0xf] %vm481, %v476
    %483 = vst.msk [vmem:[#allocation2 + $0x10] sm:$0xf] %vm481, %v478
    %v484 = vld [vmem:[%s0 + $0xa] sm:$0x1]
    %v485 = vld [vmem:[%s0 + $0x1a] sm:$0x1]
    %v486 = vld [vmem:[%s0 + $0x2a] sm:$0x1]
    %v487 = vld [vmem:[%s0 + $0x3a] sm:$0x1]
    %v488 = vld [vmem:[%s0 + $0x4a] sm:$0x1]
    %v489 = vld [vmem:[%s0 + $0x5a] sm:$0x1]
    %v490 = vld [vmem:[%s0 + $0x6a] sm:$0x1]
    %v491 = vld [vmem:[%s0 + $0x7a] sm:$0x1]
    %v500 = vrot.slane %v485, 7
    %v501 = vsel %vm58, %v500, %v484
    %v502 = vsel %vm60, %v500, %v501
    %v503 = vrot.slane %v486, 6
    %v504 = vsel %vm63, %v503, %v502
    %v505 = vsel %vm65, %v503, %v504
    %v506 = vrot.slane %v487, 5
    %v507 = vsel %vm68, %v506, %v505
    %v508 = vsel %vm70, %v506, %v507
    %v509 = vrot.slane %v489, 7
    %v510 = vsel %vm58, %v509, %v488
    %v511 = vsel %vm60, %v509, %v510
    %v512 = vrot.slane %v490, 6
    %v513 = vsel %vm63, %v512, %v511
    %v514 = vsel %vm65, %v512, %v513
    %v515 = vrot.slane %v491, 5
    %v516 = vsel %vm68, %v515, %v514
    %v517 = vsel %vm70, %v515, %v516
    %518 = vrot.lane.b32.xlu0 %v508, 71
    %v519 = vpop.permute.xlu0 %518
    %520 = vrot.lane.b32.xlu0 %v517, 71
    %v521 = vpop.permute.xlu0 %520
    %vm524 = vcmask 708152
    %525 = vst.msk [vmem:[#allocation2 + $0x4] sm:$0xf] %vm524, %v519
    %526 = vst.msk [vmem:[#allocation2 + $0x10] sm:$0xf] %vm524, %v521
    %v527 = vld [vmem:[%s0 + $0xb] sm:$0x1]
    %v528 = vld [vmem:[%s0 + $0x1b] sm:$0x1]
    %v529 = vld [vmem:[%s0 + $0x2b] sm:$0x1]
    %v530 = vld [vmem:[%s0 + $0x3b] sm:$0x1]
    %v531 = vld [vmem:[%s0 + $0x4b] sm:$0x1]
    %v532 = vld [vmem:[%s0 + $0x5b] sm:$0x1]
    %v533 = vld [vmem:[%s0 + $0x6b] sm:$0x1]
    %v534 = vld [vmem:[%s0 + $0x7b] sm:$0x1]
    %v543 = vrot.slane %v528, 7
    %v544 = vsel %vm58, %v543, %v527
    %v545 = vsel %vm60, %v543, %v544
    %v546 = vrot.slane %v529, 6
    %v547 = vsel %vm63, %v546, %v545
    %v548 = vsel %vm65, %v546, %v547
    %v549 = vrot.slane %v530, 5
    %v550 = vsel %vm68, %v549, %v548
    %v551 = vsel %vm70, %v549, %v550
    %v552 = vrot.slane %v532, 7
    %v553 = vsel %vm58, %v552, %v531
    %v554 = vsel %vm60, %v552, %v553
    %v555 = vrot.slane %v533, 6
    %v556 = vsel %vm63, %v555, %v554
    %v557 = vsel %vm65, %v555, %v556
    %v558 = vrot.slane %v534, 5
    %v559 = vsel %vm68, %v558, %v557
    %v560 = vsel %vm70, %v558, %v559
    %561 = vrot.lane.b32.xlu0 %v551, 89
    %v562 = vpop.permute.xlu0 %561
    %563 = vrot.lane.b32.xlu0 %v560, 89
    %v564 = vpop.permute.xlu0 %563
    %vm567 = vcmask 855752
    %568 = vst.msk [vmem:[#allocation2 + $0x4] sm:$0xf] %vm567, %v562
    %569 = vst.msk [vmem:[#allocation2 + $0x10] sm:$0xf] %vm567, %v564
    %v570 = vld [vmem:[%s0 + $0xc] sm:$0x1]
    %v571 = vld [vmem:[%s0 + $0x1c] sm:$0x1]
    %v572 = vld [vmem:[%s0 + $0x2c] sm:$0x1]
    %v573 = vld [vmem:[%s0 + $0x3c] sm:$0x1]
    %v574 = vld [vmem:[%s0 + $0x4c] sm:$0x1]
    %v575 = vld [vmem:[%s0 + $0x5c] sm:$0x1]
    %v576 = vld [vmem:[%s0 + $0x6c] sm:$0x1]
    %v577 = vld [vmem:[%s0 + $0x7c] sm:$0x1]
    %v586 = vrot.slane %v571, 7
    %v587 = vsel %vm58, %v586, %v570
    %v588 = vsel %vm60, %v586, %v587
    %v589 = vrot.slane %v572, 6
    %v590 = vsel %vm63, %v589, %v588
    %v591 = vsel %vm65, %v589, %v590
    %v592 = vrot.slane %v573, 5
    %v593 = vsel %vm68, %v592, %v591
    %v594 = vsel %vm70, %v592, %v593
    %v595 = vrot.slane %v575, 7
    %v596 = vsel %vm58, %v595, %v574
    %v597 = vsel %vm60, %v595, %v596
    %v598 = vrot.slane %v576, 6
    %v599 = vsel %vm63, %v598, %v597
    %v600 = vsel %vm65, %v598, %v599
    %v601 = vrot.slane %v577, 5
    %v602 = vsel %vm68, %v601, %v600
    %v603 = vsel %vm70, %v601, %v602
    %604 = vrot.lane.b32.xlu0 %v594, 107
    %v605 = vpop.permute.xlu0 %604
    %606 = vrot.lane.b32.xlu0 %v603, 107
    %v607 = vpop.permute.xlu0 %606
    %vm610 = vcmask 1003352
    %611 = vst.msk [vmem:[#allocation2 + $0x4] sm:$0xf] %vm610, %v605
    %612 = vst.msk [vmem:[#allocation2 + $0x10] sm:$0xf] %vm610, %v607
    %v613 = vld [vmem:[%s0 + $0xd] sm:$0x1]
    %v614 = vld [vmem:[%s0 + $0x1d] sm:$0x1]
    %v615 = vld [vmem:[%s0 + $0x2d] sm:$0x1]
    %v616 = vld [vmem:[%s0 + $0x3d] sm:$0x1]
    %v617 = vld [vmem:[%s0 + $0x4d] sm:$0x1]
    %v618 = vld [vmem:[%s0 + $0x5d] sm:$0x1]
    %v619 = vld [vmem:[%s0 + $0x6d] sm:$0x1]
    %v620 = vld [vmem:[%s0 + $0x7d] sm:$0x1]
    %v629 = vrot.slane %v614, 7
    %v630 = vsel %vm58, %v629, %v613
    %v631 = vsel %vm60, %v629, %v630
    %v632 = vrot.slane %v615, 6
    %v633 = vsel %vm63, %v632, %v631
    %v634 = vsel %vm65, %v632, %v633
    %v635 = vrot.slane %v616, 5
    %v636 = vsel %vm68, %v635, %v634
    %v637 = vsel %vm70, %v635, %v636
    %v638 = vrot.slane %v618, 7
    %v639 = vsel %vm58, %v638, %v617
    %v640 = vsel %vm60, %v638, %v639
    %v641 = vrot.slane %v619, 6
    %v642 = vsel %vm63, %v641, %v640
    %v643 = vsel %vm65, %v641, %v642
    %v644 = vrot.slane %v620, 5
    %v645 = vsel %vm68, %v644, %v643
    %v646 = vsel %vm70, %v644, %v645
    %647 = vrot.lane.b32.xlu0 %v637, 125
    %v648 = vpop.permute.xlu0 %647
    %649 = vrot.lane.b32.xlu0 %v646, 125
    %v650 = vpop.permute.xlu0 %649
    %v651 = vrot.slane %v648, 4
    %v652 = vrot.slane %v650, 4
    %vm653 = vcmask 1022976
    %v654 = vsel %vm653, %v651, %v648
    %v655 = vsel %vm653, %v652, %v650
    %vm658 = vcmask 1044456
    %vm659 = vcmask 105476
    %vm660 = vmor %vm659, %vm658
    %661 = vst.msk [vmem:[#allocation2 + $0x4] sm:$0xff] %vm660, %v654
    %662 = vst.msk [vmem:[#allocation2 + $0x10] sm:$0xff] %vm660, %v655
    %v663 = vld [vmem:[%s0 + $0xe] sm:$0x1]
    %v664 = vld [vmem:[%s0 + $0x1e] sm:$0x1]
    %v665 = vld [vmem:[%s0 + $0x2e] sm:$0x1]
    %v666 = vld [vmem:[%s0 + $0x3e] sm:$0x1]
    %v667 = vld [vmem:[%s0 + $0x4e] sm:$0x1]
    %v668 = vld [vmem:[%s0 + $0x5e] sm:$0x1]
    %v669 = vld [vmem:[%s0 + $0x6e] sm:$0x1]
    %v670 = vld [vmem:[%s0 + $0x7e] sm:$0x1]
    %v679 = vrot.slane %v664, 7
    %v680 = vsel %vm58, %v679, %v663
    %v681 = vsel %vm60, %v679, %v680
    %v682 = vrot.slane %v665, 6
    %v683 = vsel %vm63, %v682, %v681
    %v684 = vsel %vm65, %v682, %v683
    %v685 = vrot.slane %v666, 5
    %v686 = vsel %vm68, %v685, %v684
    %v687 = vsel %vm70, %v685, %v686
    %v688 = vrot.slane %v668, 7
    %v689 = vsel %vm58, %v688, %v667
    %v690 = vsel %vm60, %v688, %v689
    %v691 = vrot.slane %v669, 6
    %v692 = vsel %vm63, %v691, %v690
    %v693 = vsel %vm65, %v691, %v692
    %v694 = vrot.slane %v670, 5
    %v695 = vsel %vm68, %v694, %v693
    %v696 = vsel %vm70, %v694, %v695
    %697 = vrot.lane.b32.xlu0 %v687, 15
    %v698 = vpop.permute.xlu0 %697
    %699 = vrot.lane.b32.xlu0 %v696, 15
    %v700 = vpop.permute.xlu0 %699
    %vm703 = vcmask 248952
    %704 = vst.msk [vmem:[#allocation2 + $0x8] sm:$0xf] %vm703, %v698
    %705 = vst.msk [vmem:[#allocation2 + $0x14] sm:$0xf] %vm703, %v700
    %v706 = vld [vmem:[%s0 + $0xf] sm:$0x1]
    %v707 = vld [vmem:[%s0 + $0x1f] sm:$0x1]
    %v708 = vld [vmem:[%s0 + $0x2f] sm:$0x1]
    %v709 = vld [vmem:[%s0 + $0x3f] sm:$0x1]
    %v710 = vld [vmem:[%s0 + $0x4f] sm:$0x1]
    %v711 = vld [vmem:[%s0 + $0x5f] sm:$0x1]
    %v712 = vld [vmem:[%s0 + $0x6f] sm:$0x1]
    %v713 = vld [vmem:[%s0 + $0x7f] sm:$0x1]
    %v722 = vrot.slane %v707, 7
    %v723 = vsel %vm58, %v722, %v706
    %v724 = vsel %vm60, %v722, %v723
    %v725 = vrot.slane %v708, 6
    %v726 = vsel %vm63, %v725, %v724
    %v727 = vsel %vm65, %v725, %v726
    %v728 = vrot.slane %v709, 5
    %v729 = vsel %vm68, %v728, %v727
    %v730 = vsel %vm70, %v728, %v729
    %v731 = vrot.slane %v711, 7
    %v732 = vsel %vm58, %v731, %v710
    %v733 = vsel %vm60, %v731, %v732
    %v734 = vrot.slane %v712, 6
    %v735 = vsel %vm63, %v734, %v733
    %v736 = vsel %vm65, %v734, %v735
    %v737 = vrot.slane %v713, 5
    %v738 = vsel %vm68, %v737, %v736
    %v739 = vsel %vm70, %v737, %v738
    %740 = vrot.lane.b32.xlu0 %v730, 33
    %v741 = vpop.permute.xlu0 %740
    %742 = vrot.lane.b32.xlu0 %v739, 33
    %v743 = vpop.permute.xlu0 %742
    %vm746 = vcmask 396552
    %747 = vst.msk [vmem:[#allocation2 + $0x8] sm:$0xf] %vm746, %v741
    %748 = vst.msk [vmem:[#allocation2 + $0x14] sm:$0xf] %vm746, %v743
    %v749 = vld [vmem:[#allocation2] sm:$0xff]
    %v750 = vld [vmem:[#allocation2 + $0x8] sm:$0xf]
    %753 = vst [vmem:[#allocation1] ss:$2 sm:$0xff] %v749
    %s754 = scalar_lea.vmem [#allocation1], 16
    %755 = vst [vmem:[%s754] ss:$2 sm:$0xff] %v750
    %v756 = vld.sshfl [vmem:[#allocation1] sm:$0xff pattern:$0x75316420]
    %v757 = vld.sshfl [vmem:[#allocation1 + $0x8] sm:$0xff pattern:$0x75316420]
    %v758 = vld.sshfl [vmem:[#allocation1 + $0x10] sm:$0xff pattern:$0x75316420]
    %762 = vst [vmem:[#allocation4] sm:$0xf] %v756
    %763 = vst [vmem:[#allocation4 + $0x8] sm:$0xf] %v757
    %vm764 = vcmask 240640
    %765 = vst.msk [vmem:[#allocation4 + $0x10] sm:$0xf] %vm764, %v758
    %s766 = scalar_lea.vmem [#allocation2], 12
    %v767 = vld [vmem:[%s766] sm:$0xff]
    %v768 = vld [vmem:[%s766 + $0x8] sm:$0xf]
    %771 = vst [vmem:[#allocation1] ss:$2 sm:$0xff] %v767
    %s772 = scalar_lea.vmem [#allocation1], 16
    %773 = vst [vmem:[%s772] ss:$2 sm:$0xff] %v768
    %v774 = vld.sshfl [vmem:[#allocation1] sm:$0xff pattern:$0x75316420]
    %v775 = vld.sshfl [vmem:[#allocation1 + $0x8] sm:$0xff pattern:$0x75316420]
    %v776 = vld.sshfl [vmem:[#allocation1 + $0x10] sm:$0xff pattern:$0x75316420]
    %777 = vrot.lane.b32.xlu0 %v774, 30
    %v778 = vpop.permute.xlu0 %777
    %779 = vrot.lane.b32.xlu0 %v775, 30
    %v780 = vpop.permute.xlu0 %779
    %781 = vrot.lane.b32.xlu0 %v776, 30
    %v782 = vpop.permute.xlu0 %781
    %vm783 = vcmask 244736
    %v784 = vsel %vm783, %v778, %v780
    %v785 = vsel %vm783, %v780, %v782
    %vm789 = vcmask 1043696
    %790 = vst.msk [vmem:[#allocation4 + $0x10] sm:$0xf] %vm789, %v778
    %791 = vst [vmem:[#allocation4 + $0x18] sm:$0xf] %v784
    %vm792 = vcmask 486400
    %793 = vst.msk [vmem:[#allocation4 + $0x20] sm:$0xf] %vm792, %v785
    %v794 = vld [vmem:[#allocation2] sm:$0xff]
    %v795 = vld [vmem:[#allocation2 + $0x8] sm:$0xf]
    %s798 = scalar_lea.vmem [#allocation1], 1
    %799 = vst [vmem:[%s798] ss:$2 sm:$0xff] %v794
    %s800 = scalar_lea.vmem [#allocation1], 17
    %801 = vst [vmem:[%s800] ss:$2 sm:$0xff] %v795
    %v802 = vld.sshfl [vmem:[#allocation1] sm:$0xff pattern:$0x75316420]
    %v803 = vld.sshfl [vmem:[#allocation1 + $0x8] sm:$0xff pattern:$0x75316420]
    %v804 = vld.sshfl [vmem:[#allocation1 + $0x10] sm:$0xff pattern:$0x75316420]
    %805 = vrot.lane.b32.xlu0 %v802, 127
    %v806 = vpop.permute.xlu0 %805
    %807 = vrot.lane.b32.xlu0 %v803, 127
    %v808 = vpop.permute.xlu0 %807
    %809 = vrot.lane.b32.xlu0 %v804, 127
    %v810 = vpop.permute.xlu0 %809
    %v811 = vsel %vm345, %v806, %v808
    %v812 = vsel %vm345, %v808, %v810
    %816 = vst [vmem:[#allocation4] sm:$0xf0] %v811
    %817 = vst [vmem:[#allocation4 + $0x8] sm:$0xf0] %v812
    %vm818 = vcmask 244740
    %819 = vst.msk [vmem:[#allocation4 + $0x10] sm:$0xf0] %vm818, %v810
    %v820 = vld [vmem:[%s766] sm:$0xff]
    %v821 = vld [vmem:[%s766 + $0x8] sm:$0xf]
    %s824 = scalar_lea.vmem [#allocation1], 1
    %825 = vst [vmem:[%s824] ss:$2 sm:$0xff] %v820
    %s826 = scalar_lea.vmem [#allocation1], 17
    %827 = vst [vmem:[%s826] ss:$2 sm:$0xff] %v821
    %v828 = vld.sshfl [vmem:[#allocation1] sm:$0xff pattern:$0x75316420]
    %v829 = vld.sshfl [vmem:[#allocation1 + $0x8] sm:$0xff pattern:$0x75316420]
    %v830 = vld.sshfl [vmem:[#allocation1 + $0x10] sm:$0xff pattern:$0x75316420]
    %831 = vrot.lane.b32.xlu0 %v828, 29
    %v832 = vpop.permute.xlu0 %831
    %833 = vrot.lane.b32.xlu0 %v829, 29
    %v834 = vpop.permute.xlu0 %833
    %835 = vrot.lane.b32.xlu0 %v830, 29
    %v836 = vpop.permute.xlu0 %835
    %vm837 = vcmask 236544
    %v838 = vsel %vm837, %v832, %v834
    %v839 = vsel %vm837, %v834, %v836
    %vm843 = vcmask 1047796
    %844 = vst.msk [vmem:[#allocation4 + $0x10] sm:$0xf0] %vm843, %v832
    %845 = vst [vmem:[#allocation4 + $0x18] sm:$0xf0] %v838
    %vm846 = vcmask 490500
    %847 = vst.msk [vmem:[#allocation4 + $0x20] sm:$0xf0] %vm846, %v839
    %v848 = vld [vmem:[#allocation2] sm:$0xff]
    %v849 = vld [vmem:[#allocation2 + $0x8] sm:$0xf]
    %852 = vst [vmem:[#allocation1] ss:$2 sm:$0xff] %v848
    %s853 = scalar_lea.vmem [#allocation1], 16
    %854 = vst [vmem:[%s853] ss:$2 sm:$0xff] %v849
    %v855 = vld.sshfl [vmem:[#allocation1] sm:$0xff pattern:$0x75316420]
    %v856 = vld.sshfl [vmem:[#allocation1 + $0x8] sm:$0xff pattern:$0x75316420]
    %v857 = vld.sshfl [vmem:[#allocation1 + $0x10] sm:$0xff pattern:$0x75316420]
    %858 = vrot.lane.b32.xlu0 %v855, 126
    %v859 = vpop.permute.xlu0 %858
    %860 = vrot.lane.b32.xlu0 %v856, 126
    %v861 = vpop.permute.xlu0 %860
    %862 = vrot.lane.b32.xlu0 %v857, 126
    %v863 = vpop.permute.xlu0 %862
    %vm864 = vcmask 1031168
    %v865 = vsel %vm864, %v859, %v861
    %v866 = vsel %vm864, %v861, %v863
    %870 = vst [vmem:[#allocation4 + $0x28] sm:$0xf] %v865
    %871 = vst [vmem:[#allocation4 + $0x30] sm:$0xf] %v866
    %872 = vst.msk [vmem:[#allocation4 + $0x38] sm:$0xf] %vm764, %v863
    %v873 = vld [vmem:[%s766] sm:$0xff]
    %v874 = vld [vmem:[%s766 + $0x8] sm:$0xf]
    %877 = vst [vmem:[#allocation1] ss:$2 sm:$0xff] %v873
    %s878 = scalar_lea.vmem [#allocation1], 16
    %879 = vst [vmem:[%s878] ss:$2 sm:$0xff] %v874
    %v880 = vld.sshfl [vmem:[#allocation1] sm:$0xff pattern:$0x75316420]
    %v881 = vld.sshfl [vmem:[#allocation1 + $0x8] sm:$0xff pattern:$0x75316420]
    %v882 = vld.sshfl [vmem:[#allocation1 + $0x10] sm:$0xff pattern:$0x75316420]
    %883 = vrot.lane.b32.xlu0 %v880, 28
    %v884 = vpop.permute.xlu0 %883
    %885 = vrot.lane.b32.xlu0 %v881, 28
    %v886 = vpop.permute.xlu0 %885
    %887 = vrot.lane.b32.xlu0 %v882, 28
    %v888 = vpop.permute.xlu0 %887
    %vm889 = vcmask 228352
    %v890 = vsel %vm889, %v884, %v886
    %v891 = vsel %vm889, %v886, %v888
    %895 = vst.msk [vmem:[#allocation4 + $0x38] sm:$0xf] %vm789, %v884
    %896 = vst [vmem:[#allocation4 + $0x40] sm:$0xf] %v890
    %897 = vst.msk [vmem:[#allocation4 + $0x48] sm:$0xf] %vm792, %v891
    %v898 = vld [vmem:[#allocation2] sm:$0xff]
    %v899 = vld [vmem:[#allocation2 + $0x8] sm:$0xf]
    %s902 = scalar_lea.vmem [#allocation1], 1
    %903 = vst [vmem:[%s902] ss:$2 sm:$0xff] %v898
    %s904 = scalar_lea.vmem [#allocation1], 17
    %905 = vst [vmem:[%s904] ss:$2 sm:$0xff] %v899
    %v906 = vld.sshfl [vmem:[#allocation1] sm:$0xff pattern:$0x75316420]
    %v907 = vld.sshfl [vmem:[#allocation1 + $0x8] sm:$0xff pattern:$0x75316420]
    %v908 = vld.sshfl [vmem:[#allocation1 + $0x10] sm:$0xff pattern:$0x75316420]
    %909 = vrot.lane.b32.xlu0 %v906, 110
    %v910 = vpop.permute.xlu0 %909
    %911 = vrot.lane.b32.xlu0 %v907, 110
    %v912 = vpop.permute.xlu0 %911
    %913 = vrot.lane.b32.xlu0 %v908, 110
    %v914 = vpop.permute.xlu0 %913
    %vm915 = vcmask 900096
    %v916 = vsel %vm915, %v910, %v912
    %v917 = vsel %vm915, %v912, %v914
    %921 = vst [vmem:[#allocation4 + $0x28] sm:$0xf0] %v916
    %922 = vst [vmem:[#allocation4 + $0x30] sm:$0xf0] %v917
    %923 = vst.msk [vmem:[#allocation4 + $0x38] sm:$0xf0] %vm818, %v914
    %v924 = vld [vmem:[%s766] sm:$0xff]
    %v925 = vld [vmem:[%s766 + $0x8] sm:$0xf]
    %s928 = scalar_lea.vmem [#allocation1], 1
    %929 = vst [vmem:[%s928] ss:$2 sm:$0xff] %v924
    %s930 = scalar_lea.vmem [#allocation1], 17
    %931 = vst [vmem:[%s930] ss:$2 sm:$0xff] %v925
    %v932 = vld.sshfl [vmem:[#allocation1] sm:$0xff pattern:$0x75316420]
    %v933 = vld.sshfl [vmem:[#allocation1 + $0x8] sm:$0xff pattern:$0x75316420]
    %v934 = vld.sshfl [vmem:[#allocation1 + $0x10] sm:$0xff pattern:$0x75316420]
    %935 = vrot.lane.b32.xlu0 %v932, 12
    %v936 = vpop.permute.xlu0 %935
    %937 = vrot.lane.b32.xlu0 %v933, 12
    %v938 = vpop.permute.xlu0 %937
    %939 = vrot.lane.b32.xlu0 %v934, 12
    %v940 = vpop.permute.xlu0 %939
    %vm941 = vcmask 97280
    %v942 = vsel %vm941, %v936, %v938
    %v943 = vsel %vm941, %v938, %v940
    %947 = vst.msk [vmem:[#allocation4 + $0x38] sm:$0xf0] %vm843, %v936
    %948 = vst [vmem:[#allocation4 + $0x40] sm:$0xf0] %v942
    %949 = vst.msk [vmem:[#allocation4 + $0x48] sm:$0xf0] %vm846, %v943
    %v950 = vld [vmem:[#allocation2] sm:$0xff]
    %v951 = vld [vmem:[#allocation2 + $0x8] sm:$0xf]
    %954 = vst [vmem:[#allocation1] ss:$2 sm:$0xff] %v950
    %s955 = scalar_lea.vmem [#allocation1], 16
    %956 = vst [vmem:[%s955] ss:$2 sm:$0xff] %v951
    %v957 = vld.sshfl [vmem:[#allocation1] sm:$0xff pattern:$0x75316420]
    %v958 = vld.sshfl [vmem:[#allocation1 + $0x8] sm:$0xff pattern:$0x75316420]
    %v959 = vld.sshfl [vmem:[#allocation1 + $0x10] sm:$0xff pattern:$0x75316420]
    %960 = vrot.lane.b32.xlu0 %v957, 109
    %v961 = vpop.permute.xlu0 %960
    %962 = vrot.lane.b32.xlu0 %v958, 109
    %v963 = vpop.permute.xlu0 %962
    %964 = vrot.lane.b32.xlu0 %v959, 109
    %v965 = vpop.permute.xlu0 %964
    %vm966 = vcmask 891904
    %v967 = vsel %vm966, %v961, %v963
    %v968 = vsel %vm966, %v963, %v965
    %972 = vst [vmem:[#allocation4 + $0x50] sm:$0xf] %v967
    %973 = vst [vmem:[#allocation4 + $0x58] sm:$0xf] %v968
    %974 = vst.msk [vmem:[#allocation4 + $0x60] sm:$0xf] %vm764, %v965
    %v975 = vld [vmem:[%s766] sm:$0xff]
    %v976 = vld [vmem:[%s766 + $0x8] sm:$0xf]
    %979 = vst [vmem:[#allocation1] ss:$2 sm:$0xff] %v975
    %s980 = scalar_lea.vmem [#allocation1], 16
    %981 = vst [vmem:[%s980] ss:$2 sm:$0xff] %v976
    %v982 = vld.sshfl [vmem:[#allocation1] sm:$0xff pattern:$0x75316420]
    %v983 = vld.sshfl [vmem:[#allocation1 + $0x8] sm:$0xff pattern:$0x75316420]
    %v984 = vld.sshfl [vmem:[#allocation1 + $0x10] sm:$0xff pattern:$0x75316420]
    %985 = vrot.lane.b32.xlu0 %v982, 11
    %v986 = vpop.permute.xlu0 %985
    %987 = vrot.lane.b32.xlu0 %v983, 11
    %v988 = vpop.permute.xlu0 %987
    %989 = vrot.lane.b32.xlu0 %v984, 11
    %v990 = vpop.permute.xlu0 %989
    %vm991 = vcmask 89088
    %v992 = vsel %vm991, %v986, %v988
    %v993 = vsel %vm991, %v988, %v990
    %997 = vst.msk [vmem:[#allocation4 + $0x60] sm:$0xf] %vm789, %v986
    %998 = vst [vmem:[#allocation4 + $0x68] sm:$0xf] %v992
    %999 = vst.msk [vmem:[#allocation4 + $0x70] sm:$0xf] %vm792, %v993
    %v1000 = vld [vmem:[#allocation2] sm:$0xff]
    %v1001 = vld [vmem:[#allocation2 + $0x8] sm:$0xf]
    %s1004 = scalar_lea.vmem [#allocation1], 1
    %1005 = vst [vmem:[%s1004] ss:$2 sm:$0xff] %v1000
    %s1006 = scalar_lea.vmem [#allocation1], 17
    %1007 = vst [vmem:[%s1006] ss:$2 sm:$0xff] %v1001
    %v1008 = vld.sshfl [vmem:[#allocation1] sm:$0xff pattern:$0x75316420]
    %v1009 = vld.sshfl [vmem:[#allocation1 + $0x8] sm:$0xff pattern:$0x75316420]
    %v1010 = vld.sshfl [vmem:[#allocation1 + $0x10] sm:$0xff pattern:$0x75316420]
    %1011 = vrot.lane.b32.xlu0 %v1008, 108
    %v1012 = vpop.permute.xlu0 %1011
    %1013 = vrot.lane.b32.xlu0 %v1009, 108
    %v1014 = vpop.permute.xlu0 %1013
    %1015 = vrot.lane.b32.xlu0 %v1010, 108
    %v1016 = vpop.permute.xlu0 %1015
    %vm1017 = vcmask 883712
    %v1018 = vsel %vm1017, %v1012, %v1014
    %v1019 = vsel %vm1017, %v1014, %v1016
    %1023 = vst [vmem:[#allocation4 + $0x50] sm:$0xf0] %v1018
    %1024 = vst [vmem:[#allocation4 + $0x58] sm:$0xf0] %v1019
    %1025 = vst.msk [vmem:[#allocation4 + $0x60] sm:$0xf0] %vm818, %v1016
    %v1026 = vld [vmem:[%s766] sm:$0xff]
    %v1027 = vld [vmem:[%s766 + $0x8] sm:$0xf]
    %s1030 = scalar_lea.vmem [#allocation1], 1
    %1031 = vst [vmem:[%s1030] ss:$2 sm:$0xff] %v1026
    %s1032 = scalar_lea.vmem [#allocation1], 17
    %1033 = vst [vmem:[%s1032] ss:$2 sm:$0xff] %v1027
    %v1034 = vld.sshfl [vmem:[#allocation1] sm:$0xff pattern:$0x75316420]
    %v1035 = vld.sshfl [vmem:[#allocation1 + $0x8] sm:$0xff pattern:$0x75316420]
    %v1036 = vld.sshfl [vmem:[#allocation1 + $0x10] sm:$0xff pattern:$0x75316420]
    %1037 = vrot.lane.b32.xlu0 %v1034, 10
    %v1038 = vpop.permute.xlu0 %1037
    %1039 = vrot.lane.b32.xlu0 %v1035, 10
    %v1040 = vpop.permute.xlu0 %1039
    %1041 = vrot.lane.b32.xlu0 %v1036, 10
    %v1042 = vpop.permute.xlu0 %1041
    %vm1043 = vcmask 80896
    %v1044 = vsel %vm1043, %v1038, %v1040
    %v1045 = vsel %vm1043, %v1040, %v1042
    %1049 = vst.msk [vmem:[#allocation4 + $0x60] sm:$0xf0] %vm843, %v1038
    %1050 = vst [vmem:[#allocation4 + $0x68] sm:$0xf0] %v1044
    %1051 = vst.msk [vmem:[#allocation4 + $0x70] sm:$0xf0] %vm846, %v1045
    %v1052 = vld [vmem:[#allocation2] sm:$0xff]
    %v1053 = vld [vmem:[#allocation2 + $0x8] sm:$0xf]
    %1056 = vst [vmem:[#allocation1] ss:$2 sm:$0xff] %v1052
    %s1057 = scalar_lea.vmem [#allocation1], 16
    %1058 = vst [vmem:[%s1057] ss:$2 sm:$0xff] %v1053
    %v1059 = vld.sshfl [vmem:[#allocation1] sm:$0xff pattern:$0x75316420]
    %v1060 = vld.sshfl [vmem:[#allocation1 + $0x8] sm:$0xff pattern:$0x75316420]
    %v1061 = vld.sshfl [vmem:[#allocation1 + $0x10] sm:$0xff pattern:$0x75316420]
    %1062 = vrot.lane.b32.xlu0 %v1059, 92
    %v1063 = vpop.permute.xlu0 %1062
    %1064 = vrot.lane.b32.xlu0 %v1060, 92
    %v1065 = vpop.permute.xlu0 %1064
    %1066 = vrot.lane.b32.xlu0 %v1061, 92
    %v1067 = vpop.permute.xlu0 %1066
    %vm1068 = vcmask 752640
    %v1069 = vsel %vm1068, %v1063, %v1065
    %v1070 = vsel %vm1068, %v1065, %v1067
    %1074 = vst [vmem:[#allocation4 + $0x78] sm:$0xf] %v1069
    %1075 = vst [vmem:[#allocation4 + $0x80] sm:$0xf] %v1070
    %1076 = vst.msk [vmem:[#allocation4 + $0x88] sm:$0xf] %vm764, %v1067
    %v1077 = vld [vmem:[%s766] sm:$0xff]
    %v1078 = vld [vmem:[%s766 + $0x8] sm:$0xf]
    %1081 = vst [vmem:[#allocation1] ss:$2 sm:$0xff] %v1077
    %s1082 = scalar_lea.vmem [#allocation1], 16
    %1083 = vst [vmem:[%s1082] ss:$2 sm:$0xff] %v1078
    %v1084 = vld.sshfl [vmem:[#allocation1] sm:$0xff pattern:$0x75316420]
    %v1085 = vld.sshfl [vmem:[#allocation1 + $0x8] sm:$0xff pattern:$0x75316420]
    %v1086 = vld.sshfl [vmem:[#allocation1 + $0x10] sm:$0xff pattern:$0x75316420]
    %1087 = vrot.lane.b32.xlu0 %v1084, 122
    %v1088 = vpop.permute.xlu0 %1087
    %1089 = vrot.lane.b32.xlu0 %v1085, 122
    %v1090 = vpop.permute.xlu0 %1089
    %1091 = vrot.lane.b32.xlu0 %v1086, 122
    %v1092 = vpop.permute.xlu0 %1091
    %vm1093 = vcmask 998400
    %v1094 = vsel %vm1093, %v1088, %v1090
    %v1095 = vsel %vm1093, %v1090, %v1092
    %1099 = vst.msk [vmem:[#allocation4 + $0x88] sm:$0xf] %vm789, %v1094
    %1100 = vst [vmem:[#allocation4 + $0x90] sm:$0xf] %v1095
    %1101 = vst.msk [vmem:[#allocation4 + $0x98] sm:$0xf] %vm792, %v1092
    %v1102 = vld [vmem:[#allocation2] sm:$0xff]
    %v1103 = vld [vmem:[#allocation2 + $0x8] sm:$0xf]
    %s1106 = scalar_lea.vmem [#allocation1], 1
    %1107 = vst [vmem:[%s1106] ss:$2 sm:$0xff] %v1102
    %s1108 = scalar_lea.vmem [#allocation1], 17
    %1109 = vst [vmem:[%s1108] ss:$2 sm:$0xff] %v1103
    %v1110 = vld.sshfl [vmem:[#allocation1] sm:$0xff pattern:$0x75316420]
    %v1111 = vld.sshfl [vmem:[#allocation1 + $0x8] sm:$0xff pattern:$0x75316420]
    %v1112 = vld.sshfl [vmem:[#allocation1 + $0x10] sm:$0xff pattern:$0x75316420]
    %1113 = vrot.lane.b32.xlu0 %v1110, 91
    %v1114 = vpop.permute.xlu0 %1113
    %1115 = vrot.lane.b32.xlu0 %v1111, 91
    %v1116 = vpop.permute.xlu0 %1115
    %1117 = vrot.lane.b32.xlu0 %v1112, 91
    %v1118 = vpop.permute.xlu0 %1117
    %vm1119 = vcmask 744448
    %v1120 = vsel %vm1119, %v1114, %v1116
    %v1121 = vsel %vm1119, %v1116, %v1118
    %1125 = vst [vmem:[#allocation4 + $0x78] sm:$0xf0] %v1120
    %1126 = vst [vmem:[#allocation4 + $0x80] sm:$0xf0] %v1121
    %1127 = vst.msk [vmem:[#allocation4 + $0x88] sm:$0xf0] %vm818, %v1118
    %v1128 = vld [vmem:[%s766] sm:$0xff]
    %v1129 = vld [vmem:[%s766 + $0x8] sm:$0xf]
    %s1132 = scalar_lea.vmem [#allocation1], 1
    %1133 = vst [vmem:[%s1132] ss:$2 sm:$0xff] %v1128
    %s1134 = scalar_lea.vmem [#allocation1], 17
    %1135 = vst [vmem:[%s1134] ss:$2 sm:$0xff] %v1129
    %v1136 = vld.sshfl [vmem:[#allocation1] sm:$0xff pattern:$0x75316420]
    %v1137 = vld.sshfl [vmem:[#allocation1 + $0x8] sm:$0xff pattern:$0x75316420]
    %v1138 = vld.sshfl [vmem:[#allocation1 + $0x10] sm:$0xff pattern:$0x75316420]
    %1139 = vrot.lane.b32.xlu0 %v1136, 121
    %v1140 = vpop.permute.xlu0 %1139
    %1141 = vrot.lane.b32.xlu0 %v1137, 121
    %v1142 = vpop.permute.xlu0 %1141
    %1143 = vrot.lane.b32.xlu0 %v1138, 121
    %v1144 = vpop.permute.xlu0 %1143
    %vm1145 = vcmask 990208
    %v1146 = vsel %vm1145, %v1140, %v1142
    %v1147 = vsel %vm1145, %v1142, %v1144
    %1151 = vst.msk [vmem:[#allocation4 + $0x88] sm:$0xf0] %vm843, %v1146
    %1152 = vst [vmem:[#allocation4 + $0x90] sm:$0xf0] %v1147
    %1153 = vst.msk [vmem:[#allocation4 + $0x98] sm:$0xf0] %vm846, %v1144
    %v1154 = vld [vmem:[#allocation2] sm:$0xff]
    %v1155 = vld [vmem:[#allocation2 + $0x8] sm:$0xf]
    %1158 = vst [vmem:[#allocation1] ss:$2 sm:$0xff] %v1154
    %s1159 = scalar_lea.vmem [#allocation1], 16
    %1160 = vst [vmem:[%s1159] ss:$2 sm:$0xff] %v1155
    %v1161 = vld.sshfl [vmem:[#allocation1] sm:$0xff pattern:$0x75316420]
    %v1162 = vld.sshfl [vmem:[#allocation1 + $0x8] sm:$0xff pattern:$0x75316420]
    %v1163 = vld.sshfl [vmem:[#allocation1 + $0x10] sm:$0xff pattern:$0x75316420]
    %1164 = vrot.lane.b32.xlu0 %v1161, 90
    %v1165 = vpop.permute.xlu0 %1164
    %1166 = vrot.lane.b32.xlu0 %v1162, 90
    %v1167 = vpop.permute.xlu0 %1166
    %1168 = vrot.lane.b32.xlu0 %v1163, 90
    %v1169 = vpop.permute.xlu0 %1168
    %vm1170 = vcmask 736256
    %v1171 = vsel %vm1170, %v1165, %v1167
    %v1172 = vsel %vm1170, %v1167, %v1169
    %1176 = vst [vmem:[#allocation4 + $0xa0] sm:$0xf] %v1171
    %1177 = vst [vmem:[#allocation4 + $0xa8] sm:$0xf] %v1172
    %1178 = vst.msk [vmem:[#allocation4 + $0xb0] sm:$0xf] %vm764, %v1169
    %v1179 = vld [vmem:[%s766] sm:$0xff]
    %v1180 = vld [vmem:[%s766 + $0x8] sm:$0xf]
    %1183 = vst [vmem:[#allocation1] ss:$2 sm:$0xff] %v1179
    %s1184 = scalar_lea.vmem [#allocation1], 16
    %1185 = vst [vmem:[%s1184] ss:$2 sm:$0xff] %v1180
    %v1186 = vld.sshfl [vmem:[#allocation1] sm:$0xff pattern:$0x75316420]
    %v1187 = vld.sshfl [vmem:[#allocation1 + $0x8] sm:$0xff pattern:$0x75316420]
    %v1188 = vld.sshfl [vmem:[#allocation1 + $0x10] sm:$0xff pattern:$0x75316420]
    %1189 = vrot.lane.b32.xlu0 %v1186, 120
    %v1190 = vpop.permute.xlu0 %1189
    %1191 = vrot.lane.b32.xlu0 %v1187, 120
    %v1192 = vpop.permute.xlu0 %1191
    %1193 = vrot.lane.b32.xlu0 %v1188, 120
    %v1194 = vpop.permute.xlu0 %1193
    %vm1195 = vcmask 982016
    %v1196 = vsel %vm1195, %v1190, %v1192
    %v1197 = vsel %vm1195, %v1192, %v1194
    %1201 = vst.msk [vmem:[#allocation4 + $0xb0] sm:$0xf] %vm789, %v1196
    %1202 = vst [vmem:[#allocation4 + $0xb8] sm:$0xf] %v1197
    %1203 = vst.msk [vmem:[#allocation4 + $0xc0] sm:$0xf] %vm792, %v1194
    %v1204 = vld [vmem:[%s2] sm:$0xff]
    %v1205 = vld [vmem:[#allocation4] sm:$0xff]
    %v1206 = vld [vmem:[#allocation4 + $0x8] sm:$0xff]
    %v1207 = vld [vmem:[#allocation4 + $0x10] sm:$0xff]
    %v1208 = vld [vmem:[#allocation4 + $0x18] sm:$0xff]
    %v1209 = vld [vmem:[#allocation4 + $0x20] sm:$0xff]
    %v1210 = vld [vmem:[#allocation4 + $0x28] sm:$0xff]
    %v1211 = vld [vmem:[#allocation4 + $0x30] sm:$0xff]
    %v1212 = vld [vmem:[#allocation4 + $0x38] sm:$0xff]
    %v1213 = vld [vmem:[#allocation4 + $0x40] sm:$0xff]
    %v1214 = vld [vmem:[#allocation4 + $0x48] sm:$0xff]
    %v1215 = vld [vmem:[#allocation4 + $0x50] sm:$0xff]
    %v1216 = vld [vmem:[#allocation4 + $0x58] sm:$0xff]
    %v1217 = vld [vmem:[#allocation4 + $0x60] sm:$0xff]
    %v1218 = vld [vmem:[#allocation4 + $0x68] sm:$0xff]
    %v1219 = vld [vmem:[#allocation4 + $0x70] sm:$0xff]
    %v1220 = vld [vmem:[#allocation4 + $0x78] sm:$0xff]
    %v1221 = vld [vmem:[#allocation4 + $0x80] sm:$0xff]
    %v1222 = vld [vmem:[#allocation4 + $0x88] sm:$0xff]
    %v1223 = vld [vmem:[#allocation4 + $0x90] sm:$0xff]
    %v1224 = vld [vmem:[#allocation4 + $0x98] sm:$0xff]
    %v1225 = vld [vmem:[#allocation4 + $0xa0] sm:$0xf]
    %v1226 = vld [vmem:[#allocation4 + $0xa8] sm:$0xf]
    %v1227 = vld [vmem:[#allocation4 + $0xb0] sm:$0xf]
    %v1228 = vld [vmem:[#allocation4 + $0xb8] sm:$0xf]
    %v1229 = vld [vmem:[#allocation4 + $0xc0] sm:$0xf]
    %v1230 = vld [vmem:[%s3] sm:$0xff]
    %1232 = vset.pattern.permute.xlu0 0
    %1233 = vperm.xlu0 %1232, %v1230
    %v1234 = vpop.permute.xlu0 %1233
    %vm1236 = vcmask 293888
    %v1238 = vsel %vm1236, %v1204, 0
    %vm1240 = vcmask 1043456
    %v1242 = vsel %vm1240, %v1225, 0
    %v1245 = vsel %vm1240, %v1226, 0
    %v1248 = vsel %vm1240, %v1227, 0
    %v1251 = vsel %vm1240, %v1228, 0
    %v1254 = vsel %vm1240, %v1229, 0
    %1256 = vmatpush.msra.mxu0 0.0
    %1257 = vmatpush.msra.mxu0 0.0
    %1258 = vmatpush.msra.mxu0 0.0
    %1259 = vmatpush.msra.mxu0 0.0
    %1260 = vmatpush.msra.mxu0 0.0
    %1261 = vmatpush.msra.mxu0 0.0
    %1262 = vmatpush.msra.mxu0 0.0
    %1263 = vmatpush.msra.mxu0 0.0
    %1264 = vmatpush.msra.mxu0 0.0
    %1265 = vmatpush.msra.mxu0 0.0
    %1266 = vmatpush.msra.mxu0 0.0
    %1267 = vmatpush.msra.mxu0 %v1242
    %1268 = vmatpush.msra.mxu0 %v1220
    %1269 = vmatpush.msra.mxu0 %v1215
    %1270 = vmatpush.msra.mxu0 %v1210
    %1271 = vmatpush.msra.mxu0 %v1205
    %1272 = vmatmul.f32.gmra.mxu0 %v1238
    %v1273 = vpop.f32.mrf.mxu0
    %v1274 = vadd.f32 %v1234, %v1273
    %1275 = vdwg.mxu0
    %1276 = vmatpush.msra.mxu0 0.0
    %1277 = vmatpush.msra.mxu0 0.0
    %1278 = vmatpush.msra.mxu0 0.0
    %1279 = vmatpush.msra.mxu0 0.0
    %1280 = vmatpush.msra.mxu0 0.0
    %1281 = vmatpush.msra.mxu0 0.0
    %1282 = vmatpush.msra.mxu0 0.0
    %1283 = vmatpush.msra.mxu0 0.0
    %1284 = vmatpush.msra.mxu0 0.0
    %1285 = vmatpush.msra.mxu0 0.0
    %1286 = vmatpush.msra.mxu0 0.0
    %1287 = vmatpush.msra.mxu0 %v1245
    %1288 = vmatpush.msra.mxu0 %v1221
    %1289 = vmatpush.msra.mxu0 %v1216
    %1290 = vmatpush.msra.mxu0 %v1211
    %1291 = vmatpush.msra.mxu0 %v1206
    %1292 = vmatmul.f32.gmra.mxu0 %v1238
    %v1293 = vpop.f32.mrf.mxu0
    %v1294 = vadd.f32 %v1234, %v1293
    %1295 = vdwg.mxu0
    %1296 = vmatpush.msra.mxu0 0.0
    %1297 = vmatpush.msra.mxu0 0.0
    %1298 = vmatpush.msra.mxu0 0.0
    %1299 = vmatpush.msra.mxu0 0.0
    %1300 = vmatpush.msra.mxu0 0.0
    %1301 = vmatpush.msra.mxu0 0.0
    %1302 = vmatpush.msra.mxu0 0.0
    %1303 = vmatpush.msra.mxu0 0.0
    %1304 = vmatpush.msra.mxu0 0.0
    %1305 = vmatpush.msra.mxu0 0.0
    %1306 = vmatpush.msra.mxu0 0.0
    %1307 = vmatpush.msra.mxu0 %v1248
    %1308 = vmatpush.msra.mxu0 %v1222
    %1309 = vmatpush.msra.mxu0 %v1217
    %1310 = vmatpush.msra.mxu0 %v1212
    %1311 = vmatpush.msra.mxu0 %v1207
    %1312 = vmatmul.f32.gmra.mxu0 %v1238
    %v1313 = vpop.f32.mrf.mxu0
    %v1314 = vadd.f32 %v1234, %v1313
    %1315 = vdwg.mxu0
    %1316 = vmatpush.msra.mxu0 0.0
    %1317 = vmatpush.msra.mxu0 0.0
    %1318 = vmatpush.msra.mxu0 0.0
    %1319 = vmatpush.msra.mxu0 0.0
    %1320 = vmatpush.msra.mxu0 0.0
    %1321 = vmatpush.msra.mxu0 0.0
    %1322 = vmatpush.msra.mxu0 0.0
    %1323 = vmatpush.msra.mxu0 0.0
    %1324 = vmatpush.msra.mxu0 0.0
    %1325 = vmatpush.msra.mxu0 0.0
    %1326 = vmatpush.msra.mxu0 0.0
    %1327 = vmatpush.msra.mxu0 %v1251
    %1328 = vmatpush.msra.mxu0 %v1223
    %1329 = vmatpush.msra.mxu0 %v1218
    %1330 = vmatpush.msra.mxu0 %v1213
    %1331 = vmatpush.msra.mxu0 %v1208
    %1332 = vmatmul.f32.gmra.mxu0 %v1238
    %v1333 = vpop.f32.mrf.mxu0
    %v1334 = vadd.f32 %v1234, %v1333
    %1335 = vdwg.mxu0
    %1336 = vmatpush.msra.mxu0 0.0
    %1337 = vmatpush.msra.mxu0 0.0
    %1338 = vmatpush.msra.mxu0 0.0
    %1339 = vmatpush.msra.mxu0 0.0
    %1340 = vmatpush.msra.mxu0 0.0
    %1341 = vmatpush.msra.mxu0 0.0
    %1342 = vmatpush.msra.mxu0 0.0
    %1343 = vmatpush.msra.mxu0 0.0
    %1344 = vmatpush.msra.mxu0 0.0
    %1345 = vmatpush.msra.mxu0 0.0
    %1346 = vmatpush.msra.mxu0 0.0
    %1347 = vmatpush.msra.mxu0 %v1254
    %1348 = vmatpush.msra.mxu0 %v1224
    %1349 = vmatpush.msra.mxu0 %v1219
    %1350 = vmatpush.msra.mxu0 %v1214
    %1351 = vmatpush.msra.mxu0 %v1209
    %1352 = vmatmul.f32.gmra.mxu0 %v1238
    %v1353 = vpop.f32.mrf.mxu0
    %v1354 = vadd.f32 %v1234, %v1353
    %1355 = vdwg.mxu0
    %v1356 = vmax.f32 %v1274, 0.0
    %v1357 = vmax.f32 %v1294, 0.0
    %v1358 = vmax.f32 %v1314, 0.0
    %v1359 = vmax.f32 %v1334, 0.0
    %v1360 = vmax.f32 %v1354, 0.0
    %v1361 = vld [vmem:[%s1] sm:$0x1f]
    %v1363 = vperm.slane %v1361, 0
    %v1364 = vperm.slane %v1361, 1
    %v1365 = vperm.slane %v1361, 2
    %v1366 = vperm.slane %v1361, 3
    %v1367 = vperm.slane %v1361, 4
    %v1373 = vmul.f32 %v1356, %v1363
    %v1374 = vmul.f32 %v1357, %v1364
    %v1375 = vmul.f32 %v1358, %v1365
    %v1376 = vmul.f32 %v1359, %v1366
    %v1377 = vmul.f32 %v1360, %v1367
    %1378 = vst [vmem:[#allocation6] sm:$0xff] %v1373
    %1379 = vst [vmem:[#allocation6 + $0x8] sm:$0xff] %v1374
    %1380 = vst [vmem:[#allocation6 + $0x10] sm:$0xff] %v1375
    %1381 = vst [vmem:[#allocation6 + $0x18] sm:$0xff] %v1376
    %vm1382 = vcmask 490496
    %1383 = vst.msk [vmem:[#allocation6 + $0x20] sm:$0xff] %vm1382, %v1377
    %1384 = vst [vmem:[#allocation3] sm:$0xff] 0.0
    %1385 = vst [vmem:[#allocation3 + $0x8] sm:$0xff] 0.0
    %vm1386 = vcmask 556032
    %1387 = vst.msk [vmem:[#allocation3 + $0x10] sm:$0xff] %vm1386, 0.0
    %1388 = vst [vmem:[#allocation3 + $0x18] sm:$0xff] 0.0
    %1389 = vst [vmem:[#allocation3 + $0x20] sm:$0xff] 0.0
    %1390 = vst.msk [vmem:[#allocation3 + $0x28] sm:$0xff] %vm1386, 0.0
    %v1391 = vld [vmem:[#allocation6] sm:$0xff]
    %v1392 = vld [vmem:[#allocation6 + $0x8] sm:$0xff]
    %v1393 = vld [vmem:[#allocation6 + $0x10] sm:$0xff]
    %1397 = vrot.lane.b32.xlu0 %v1391, 19
    %v1398 = vpop.permute.xlu0 %1397
    %1399 = vrot.lane.b32.xlu0 %v1392, 19
    %v1400 = vpop.permute.xlu0 %1399
    %1401 = vrot.lane.b32.xlu0 %v1393, 19
    %v1402 = vpop.permute.xlu0 %1401
    %vm1403 = vcmask 154624
    %v1404 = vsel %vm1403, %v1398, %v1400
    %v1405 = vsel %vm1403, %v1400, %v1402
    %vm1409 = vcmask 1047704
    %1410 = vst.msk [vmem:[#allocation3] sm:$0xff] %vm1409, %v1398
    %1411 = vst [vmem:[#allocation3 + $0x8] sm:$0xff] %v1404
    %vm1412 = vcmask 400384
    %1413 = vst.msk [vmem:[#allocation3 + $0x10] sm:$0xff] %vm1412, %v1405
    %v1414 = vld [vmem:[#allocation6 + $0x10] sm:$0xff]
    %v1415 = vld [vmem:[#allocation6 + $0x18] sm:$0xff]
    %v1416 = vld [vmem:[#allocation6 + $0x20] sm:$0xff]
    %1420 = vrot.lane.b32.xlu0 %v1414, 117
    %v1421 = vpop.permute.xlu0 %1420
    %1422 = vrot.lane.b32.xlu0 %v1415, 117
    %v1423 = vpop.permute.xlu0 %1422
    %1424 = vrot.lane.b32.xlu0 %v1416, 117
    %v1425 = vpop.permute.xlu0 %1424
    %vm1426 = vcmask 957440
    %v1427 = vsel %vm1426, %v1421, %v1423
    %v1428 = vsel %vm1426, %v1423, %v1425
    %s1432 = scalar_lea.vmem [#allocation3], 24
    %1433 = vst.msk [vmem:[%s1432] sm:$0xff] %vm1409, %v1427
    %1434 = vst [vmem:[%s1432 + $0x8] sm:$0xff] %v1428
    %1435 = vst.msk [vmem:[%s1432 + $0x10] sm:$0xff] %vm1412, %v1425
    %v1436 = vld [vmem:[#allocation3] sm:$0xff]
    %v1437 = vld [vmem:[#allocation3 + $0x8] sm:$0xff]
    %v1438 = vld [vmem:[#allocation3 + $0x10] sm:$0xff]
    %1439 = vst [vmem:[#allocation5] sm:$0xff] %v1436
    %1440 = vst [vmem:[#allocation5 + $0x8] sm:$0xff] %v1437
    %1441 = vst.msk [vmem:[#allocation5 + $0x10] sm:$0xff] %vm783, %v1438
    %v1442 = vld [vmem:[%s1432] sm:$0xff]
    %v1443 = vld [vmem:[%s1432 + $0x8] sm:$0xff]
    %v1444 = vld [vmem:[%s1432 + $0x10] sm:$0xff]
    %1448 = vrot.lane.b32.xlu0 %v1442, 30
    %v1449 = vpop.permute.xlu0 %1448
    %1450 = vrot.lane.b32.xlu0 %v1443, 30
    %v1451 = vpop.permute.xlu0 %1450
    %1452 = vrot.lane.b32.xlu0 %v1444, 30
    %v1453 = vpop.permute.xlu0 %1452
    %v1454 = vsel %vm783, %v1449, %v1451
    %v1455 = vsel %vm783, %v1451, %v1453
    %vm1459 = vcmask 1047792
    %1460 = vst.msk [vmem:[#allocation5 + $0x10] sm:$0xff] %vm1459, %v1449
    %1461 = vst [vmem:[#allocation5 + $0x18] sm:$0xff] %v1454
    %1462 = vst.msk [vmem:[#allocation5 + $0x20] sm:$0xff] %vm1382, %v1455
    %v1463 = vld [vmem:[#allocation3] sm:$0xff]
    %v1464 = vld [vmem:[#allocation3 + $0x8] sm:$0xff]
    %v1465 = vld [vmem:[#allocation3 + $0x10] sm:$0xff]
    %1469 = vrot.lane.b32.xlu0 %v1463, 127
    %v1470 = vpop.permute.xlu0 %1469
    %1471 = vrot.lane.b32.xlu0 %v1464, 127
    %v1472 = vpop.permute.xlu0 %1471
    %1473 = vrot.lane.b32.xlu0 %v1465, 127
    %v1474 = vpop.permute.xlu0 %1473
    %v1475 = vsel %vm345, %v1470, %v1472
    %v1476 = vsel %vm345, %v1472, %v1474
    %1480 = vst [vmem:[#allocation5 + $0x28] sm:$0xff] %v1475
    %1481 = vst [vmem:[#allocation5 + $0x30] sm:$0xff] %v1476
    %1482 = vst.msk [vmem:[#allocation5 + $0x38] sm:$0xff] %vm783, %v1474
    %v1483 = vld [vmem:[%s1432] sm:$0xff]
    %v1484 = vld [vmem:[%s1432 + $0x8] sm:$0xff]
    %v1485 = vld [vmem:[%s1432 + $0x10] sm:$0xff]
    %1489 = vrot.lane.b32.xlu0 %v1483, 29
    %v1490 = vpop.permute.xlu0 %1489
    %1491 = vrot.lane.b32.xlu0 %v1484, 29
    %v1492 = vpop.permute.xlu0 %1491
    %1493 = vrot.lane.b32.xlu0 %v1485, 29
    %v1494 = vpop.permute.xlu0 %1493
    %v1495 = vsel %vm837, %v1490, %v1492
    %v1496 = vsel %vm837, %v1492, %v1494
    %1500 = vst.msk [vmem:[#allocation5 + $0x38] sm:$0xff] %vm1459, %v1490
    %1501 = vst [vmem:[#allocation5 + $0x40] sm:$0xff] %v1495
    %1502 = vst.msk [vmem:[#allocation5 + $0x48] sm:$0xff] %vm1382, %v1496
    %v1503 = vld [vmem:[#allocation3] sm:$0xff]
    %v1504 = vld [vmem:[#allocation3 + $0x8] sm:$0xff]
    %v1505 = vld [vmem:[#allocation3 + $0x10] sm:$0xff]
    %1509 = vrot.lane.b32.xlu0 %v1503, 126
    %v1510 = vpop.permute.xlu0 %1509
    %1511 = vrot.lane.b32.xlu0 %v1504, 126
    %v1512 = vpop.permute.xlu0 %1511
    %1513 = vrot.lane.b32.xlu0 %v1505, 126
    %v1514 = vpop.permute.xlu0 %1513
    %v1515 = vsel %vm864, %v1510, %v1512
    %v1516 = vsel %vm864, %v1512, %v1514
    %1520 = vst [vmem:[#allocation5 + $0x50] sm:$0xff] %v1515
    %1521 = vst [vmem:[#allocation5 + $0x58] sm:$0xff] %v1516
    %1522 = vst.msk [vmem:[#allocation5 + $0x60] sm:$0xff] %vm783, %v1514
    %v1523 = vld [vmem:[%s1432] sm:$0xff]
    %v1524 = vld [vmem:[%s1432 + $0x8] sm:$0xff]
    %v1525 = vld [vmem:[%s1432 + $0x10] sm:$0xff]
    %1529 = vrot.lane.b32.xlu0 %v1523, 28
    %v1530 = vpop.permute.xlu0 %1529
    %1531 = vrot.lane.b32.xlu0 %v1524, 28
    %v1532 = vpop.permute.xlu0 %1531
    %1533 = vrot.lane.b32.xlu0 %v1525, 28
    %v1534 = vpop.permute.xlu0 %1533
    %v1535 = vsel %vm889, %v1530, %v1532
    %v1536 = vsel %vm889, %v1532, %v1534
    %1540 = vst.msk [vmem:[#allocation5 + $0x60] sm:$0xff] %vm1459, %v1530
    %1541 = vst [vmem:[#allocation5 + $0x68] sm:$0xff] %v1535
    %1542 = vst.msk [vmem:[#allocation5 + $0x70] sm:$0xff] %vm1382, %v1536
    %v1543 = vld [vmem:[#allocation3] sm:$0xff]
    %v1544 = vld [vmem:[#allocation3 + $0x8] sm:$0xff]
    %v1545 = vld [vmem:[#allocation3 + $0x10] sm:$0xff]
    %1549 = vrot.lane.b32.xlu0 %v1543, 110
    %v1550 = vpop.permute.xlu0 %1549
    %1551 = vrot.lane.b32.xlu0 %v1544, 110
    %v1552 = vpop.permute.xlu0 %1551
    %1553 = vrot.lane.b32.xlu0 %v1545, 110
    %v1554 = vpop.permute.xlu0 %1553
    %v1555 = vsel %vm915, %v1550, %v1552
    %v1556 = vsel %vm915, %v1552, %v1554
    %1560 = vst [vmem:[#allocation5 + $0x78] sm:$0xff] %v1555
    %1561 = vst [vmem:[#allocation5 + $0x80] sm:$0xff] %v1556
    %1562 = vst.msk [vmem:[#allocation5 + $0x88] sm:$0xff] %vm783, %v1554
    %v1563 = vld [vmem:[%s1432] sm:$0xff]
    %v1564 = vld [vmem:[%s1432 + $0x8] sm:$0xff]
    %v1565 = vld [vmem:[%s1432 + $0x10] sm:$0xff]
    %1569 = vrot.lane.b32.xlu0 %v1563, 12
    %v1570 = vpop.permute.xlu0 %1569
    %1571 = vrot.lane.b32.xlu0 %v1564, 12
    %v1572 = vpop.permute.xlu0 %1571
    %1573 = vrot.lane.b32.xlu0 %v1565, 12
    %v1574 = vpop.permute.xlu0 %1573
    %v1575 = vsel %vm941, %v1570, %v1572
    %v1576 = vsel %vm941, %v1572, %v1574
    %1580 = vst.msk [vmem:[#allocation5 + $0x88] sm:$0xff] %vm1459, %v1570
    %1581 = vst [vmem:[#allocation5 + $0x90] sm:$0xff] %v1575
    %1582 = vst.msk [vmem:[#allocation5 + $0x98] sm:$0xff] %vm1382, %v1576
    %v1583 = vld [vmem:[#allocation3] sm:$0xff]
    %v1584 = vld [vmem:[#allocation3 + $0x8] sm:$0xff]
    %v1585 = vld [vmem:[#allocation3 + $0x10] sm:$0xff]
    %1589 = vrot.lane.b32.xlu0 %v1583, 109
    %v1590 = vpop.permute.xlu0 %1589
    %1591 = vrot.lane.b32.xlu0 %v1584, 109
    %v1592 = vpop.permute.xlu0 %1591
    %1593 = vrot.lane.b32.xlu0 %v1585, 109
    %v1594 = vpop.permute.xlu0 %1593
    %v1595 = vsel %vm966, %v1590, %v1592
    %v1596 = vsel %vm966, %v1592, %v1594
    %1600 = vst [vmem:[#allocation5 + $0xa0] sm:$0xff] %v1595
    %1601 = vst [vmem:[#allocation5 + $0xa8] sm:$0xff] %v1596
    %1602 = vst.msk [vmem:[#allocation5 + $0xb0] sm:$0xff] %vm783, %v1594
    %v1603 = vld [vmem:[%s1432] sm:$0xff]
    %v1604 = vld [vmem:[%s1432 + $0x8] sm:$0xff]
    %v1605 = vld [vmem:[%s1432 + $0x10] sm:$0xff]
    %1609 = vrot.lane.b32.xlu0 %v1603, 11
    %v1610 = vpop.permute.xlu0 %1609
    %1611 = vrot.lane.b32.xlu0 %v1604, 11
    %v1612 = vpop.permute.xlu0 %1611
    %1613 = vrot.lane.b32.xlu0 %v1605, 11
    %v1614 = vpop.permute.xlu0 %1613
    %v1615 = vsel %vm991, %v1610, %v1612
    %v1616 = vsel %vm991, %v1612, %v1614
    %1620 = vst.msk [vmem:[#allocation5 + $0xb0] sm:$0xff] %vm1459, %v1610
    %1621 = vst [vmem:[#allocation5 + $0xb8] sm:$0xff] %v1615
    %1622 = vst.msk [vmem:[#allocation5 + $0xc0] sm:$0xff] %vm1382, %v1616
    %v1623 = vld [vmem:[#allocation3] sm:$0xff]
    %v1624 = vld [vmem:[#allocation3 + $0x8] sm:$0xff]
    %v1625 = vld [vmem:[#allocation3 + $0x10] sm:$0xff]
    %1629 = vrot.lane.b32.xlu0 %v1623, 108
    %v1630 = vpop.permute.xlu0 %1629
    %1631 = vrot.lane.b32.xlu0 %v1624, 108
    %v1632 = vpop.permute.xlu0 %1631
    %1633 = vrot.lane.b32.xlu0 %v1625, 108
    %v1634 = vpop.permute.xlu0 %1633
    %v1635 = vsel %vm1017, %v1630, %v1632
    %v1636 = vsel %vm1017, %v1632, %v1634
    %1640 = vst [vmem:[#allocation5 + $0xc8] sm:$0xff] %v1635
    %1641 = vst [vmem:[#allocation5 + $0xd0] sm:$0xff] %v1636
    %1642 = vst.msk [vmem:[#allocation5 + $0xd8] sm:$0xff] %vm783, %v1634
    %v1643 = vld [vmem:[%s1432] sm:$0xff]
    %v1644 = vld [vmem:[%s1432 + $0x8] sm:$0xff]
    %v1645 = vld [vmem:[%s1432 + $0x10] sm:$0xff]
    %1649 = vrot.lane.b32.xlu0 %v1643, 10
    %v1650 = vpop.permute.xlu0 %1649
    %1651 = vrot.lane.b32.xlu0 %v1644, 10
    %v1652 = vpop.permute.xlu0 %1651
    %1653 = vrot.lane.b32.xlu0 %v1645, 10
    %v1654 = vpop.permute.xlu0 %1653
    %v1655 = vsel %vm1043, %v1650, %v1652
    %v1656 = vsel %vm1043, %v1652, %v1654
    %1660 = vst.msk [vmem:[#allocation5 + $0xd8] sm:$0xff] %vm1459, %v1650
    %1661 = vst [vmem:[#allocation5 + $0xe0] sm:$0xff] %v1655
    %1662 = vst.msk [vmem:[#allocation5 + $0xe8] sm:$0xff] %vm1382, %v1656
    %v1663 = vld [vmem:[#allocation3] sm:$0xff]
    %v1664 = vld [vmem:[#allocation3 + $0x8] sm:$0xff]
    %v1665 = vld [vmem:[#allocation3 + $0x10] sm:$0xff]
    %1669 = vrot.lane.b32.xlu0 %v1663, 92
    %v1670 = vpop.permute.xlu0 %1669
    %1671 = vrot.lane.b32.xlu0 %v1664, 92
    %v1672 = vpop.permute.xlu0 %1671
    %1673 = vrot.lane.b32.xlu0 %v1665, 92
    %v1674 = vpop.permute.xlu0 %1673
    %v1675 = vsel %vm1068, %v1670, %v1672
    %v1676 = vsel %vm1068, %v1672, %v1674
    %1680 = vst [vmem:[#allocation5 + $0xf0] sm:$0xff] %v1675
    %1681 = vst [vmem:[#allocation5 + $0xf8] sm:$0xff] %v1676
    %1682 = vst.msk [vmem:[#allocation5 + $0x100] sm:$0xff] %vm783, %v1674
    %v1683 = vld [vmem:[%s1432] sm:$0xff]
    %v1684 = vld [vmem:[%s1432 + $0x8] sm:$0xff]
    %v1685 = vld [vmem:[%s1432 + $0x10] sm:$0xff]
    %1689 = vrot.lane.b32.xlu0 %v1683, 122
    %v1690 = vpop.permute.xlu0 %1689
    %1691 = vrot.lane.b32.xlu0 %v1684, 122
    %v1692 = vpop.permute.xlu0 %1691
    %1693 = vrot.lane.b32.xlu0 %v1685, 122
    %v1694 = vpop.permute.xlu0 %1693
    %v1695 = vsel %vm1093, %v1690, %v1692
    %v1696 = vsel %vm1093, %v1692, %v1694
    %1700 = vst.msk [vmem:[#allocation5 + $0x100] sm:$0xff] %vm1459, %v1695
    %1701 = vst [vmem:[#allocation5 + $0x108] sm:$0xff] %v1696
    %1702 = vst.msk [vmem:[#allocation5 + $0x110] sm:$0xff] %vm1382, %v1694
    %v1703 = vld [vmem:[#allocation3] sm:$0xff]
    %v1704 = vld [vmem:[#allocation3 + $0x8] sm:$0xff]
    %v1705 = vld [vmem:[#allocation3 + $0x10] sm:$0xff]
    %1709 = vrot.lane.b32.xlu0 %v1703, 91
    %v1710 = vpop.permute.xlu0 %1709
    %1711 = vrot.lane.b32.xlu0 %v1704, 91
    %v1712 = vpop.permute.xlu0 %1711
    %1713 = vrot.lane.b32.xlu0 %v1705, 91
    %v1714 = vpop.permute.xlu0 %1713
    %v1715 = vsel %vm1119, %v1710, %v1712
    %v1716 = vsel %vm1119, %v1712, %v1714
    %1720 = vst [vmem:[#allocation5 + $0x118] sm:$0xff] %v1715
    %1721 = vst [vmem:[#allocation5 + $0x120] sm:$0xff] %v1716
    %1722 = vst.msk [vmem:[#allocation5 + $0x128] sm:$0xff] %vm783, %v1714
    %v1723 = vld [vmem:[%s1432] sm:$0xff]
    %v1724 = vld [vmem:[%s1432 + $0x8] sm:$0xff]
    %v1725 = vld [vmem:[%s1432 + $0x10] sm:$0xff]
    %1729 = vrot.lane.b32.xlu0 %v1723, 121
    %v1730 = vpop.permute.xlu0 %1729
    %1731 = vrot.lane.b32.xlu0 %v1724, 121
    %v1732 = vpop.permute.xlu0 %1731
    %1733 = vrot.lane.b32.xlu0 %v1725, 121
    %v1734 = vpop.permute.xlu0 %1733
    %v1735 = vsel %vm1145, %v1730, %v1732
    %v1736 = vsel %vm1145, %v1732, %v1734
    %1740 = vst.msk [vmem:[#allocation5 + $0x128] sm:$0xff] %vm1459, %v1735
    %1741 = vst [vmem:[#allocation5 + $0x130] sm:$0xff] %v1736
    %1742 = vst.msk [vmem:[#allocation5 + $0x138] sm:$0xff] %vm1382, %v1734
    %v1743 = vld [vmem:[#allocation3] sm:$0xff]
    %v1744 = vld [vmem:[#allocation3 + $0x8] sm:$0xff]
    %v1745 = vld [vmem:[#allocation3 + $0x10] sm:$0xff]
    %1749 = vrot.lane.b32.xlu0 %v1743, 90
    %v1750 = vpop.permute.xlu0 %1749
    %1751 = vrot.lane.b32.xlu0 %v1744, 90
    %v1752 = vpop.permute.xlu0 %1751
    %1753 = vrot.lane.b32.xlu0 %v1745, 90
    %v1754 = vpop.permute.xlu0 %1753
    %v1755 = vsel %vm1170, %v1750, %v1752
    %v1756 = vsel %vm1170, %v1752, %v1754
    %1760 = vst [vmem:[#allocation5 + $0x140] sm:$0xff] %v1755
    %1761 = vst [vmem:[#allocation5 + $0x148] sm:$0xff] %v1756
    %1762 = vst.msk [vmem:[#allocation5 + $0x150] sm:$0xff] %vm783, %v1754
    %v1763 = vld [vmem:[%s1432] sm:$0xff]
    %v1764 = vld [vmem:[%s1432 + $0x8] sm:$0xff]
    %v1765 = vld [vmem:[%s1432 + $0x10] sm:$0xff]
    %1769 = vrot.lane.b32.xlu0 %v1763, 120
    %v1770 = vpop.permute.xlu0 %1769
    %1771 = vrot.lane.b32.xlu0 %v1764, 120
    %v1772 = vpop.permute.xlu0 %1771
    %1773 = vrot.lane.b32.xlu0 %v1765, 120
    %v1774 = vpop.permute.xlu0 %1773
    %v1775 = vsel %vm1195, %v1770, %v1772
    %v1776 = vsel %vm1195, %v1772, %v1774
    %1780 = vst.msk [vmem:[#allocation5 + $0x150] sm:$0xff] %vm1459, %v1775
    %1781 = vst [vmem:[#allocation5 + $0x158] sm:$0xff] %v1776
    %1782 = vst.msk [vmem:[#allocation5 + $0x160] sm:$0xff] %vm1382, %v1774
    %v1783 = vld [vmem:[%s4] sm:$0xff]
    %v1784 = vld [vmem:[#allocation5] sm:$0xff]
    %v1785 = vld [vmem:[#allocation5 + $0x8] sm:$0xff]
    %v1786 = vld [vmem:[#allocation5 + $0x10] sm:$0xff]
    %v1787 = vld [vmem:[#allocation5 + $0x18] sm:$0xff]
    %v1788 = vld [vmem:[#allocation5 + $0x20] sm:$0xff]
    %v1789 = vld [vmem:[#allocation5 + $0x28] sm:$0xff]
    %v1790 = vld [vmem:[#allocation5 + $0x30] sm:$0xff]
    %v1791 = vld [vmem:[#allocation5 + $0x38] sm:$0xff]
    %v1792 = vld [vmem:[#allocation5 + $0x40] sm:$0xff]
    %v1793 = vld [vmem:[#allocation5 + $0x48] sm:$0xff]
    %v1794 = vld [vmem:[#allocation5 + $0x50] sm:$0xff]
    %v1795 = vld [vmem:[#allocation5 + $0x58] sm:$0xff]
    %v1796 = vld [vmem:[#allocation5 + $0x60] sm:$0xff]
    %v1797 = vld [vmem:[#allocation5 + $0x68] sm:$0xff]
    %v1798 = vld [vmem:[#allocation5 + $0x70] sm:$0xff]
    %v1799 = vld [vmem:[#allocation5 + $0x78] sm:$0xff]
    %v1800 = vld [vmem:[#allocation5 + $0x80] sm:$0xff]
    %v1801 = vld [vmem:[#allocation5 + $0x88] sm:$0xff]
    %v1802 = vld [vmem:[#allocation5 + $0x90] sm:$0xff]
    %v1803 = vld [vmem:[#allocation5 + $0x98] sm:$0xff]
    %v1804 = vld [vmem:[#allocation5 + $0xa0] sm:$0xff]
    %v1805 = vld [vmem:[#allocation5 + $0xa8] sm:$0xff]
    %v1806 = vld [vmem:[#allocation5 + $0xb0] sm:$0xff]
    %v1807 = vld [vmem:[#allocation5 + $0xb8] sm:$0xff]
    %v1808 = vld [vmem:[#allocation5 + $0xc0] sm:$0xff]
    %v1809 = vld [vmem:[#allocation5 + $0xc8] sm:$0xff]
    %v1810 = vld [vmem:[#allocation5 + $0xd0] sm:$0xff]
    %v1811 = vld [vmem:[#allocation5 + $0xd8] sm:$0xff]
    %v1812 = vld [vmem:[#allocation5 + $0xe0] sm:$0xff]
    %v1813 = vld [vmem:[#allocation5 + $0xe8] sm:$0xff]
    %v1814 = vld [vmem:[#allocation5 + $0xf0] sm:$0xff]
    %v1815 = vld [vmem:[#allocation5 + $0xf8] sm:$0xff]
    %v1816 = vld [vmem:[#allocation5 + $0x100] sm:$0xff]
    %v1817 = vld [vmem:[#allocation5 + $0x108] sm:$0xff]
    %v1818 = vld [vmem:[#allocation5 + $0x110] sm:$0xff]
    %v1819 = vld [vmem:[#allocation5 + $0x118] sm:$0xff]
    %v1820 = vld [vmem:[#allocation5 + $0x120] sm:$0xff]
    %v1821 = vld [vmem:[#allocation5 + $0x128] sm:$0xff]
    %v1822 = vld [vmem:[#allocation5 + $0x130] sm:$0xff]
    %v1823 = vld [vmem:[#allocation5 + $0x138] sm:$0xff]
    %v1824 = vld [vmem:[#allocation5 + $0x140] sm:$0xff]
    %v1825 = vld [vmem:[#allocation5 + $0x148] sm:$0xff]
    %v1826 = vld [vmem:[#allocation5 + $0x150] sm:$0xff]
    %v1827 = vld [vmem:[#allocation5 + $0x158] sm:$0xff]
    %v1828 = vld [vmem:[#allocation5 + $0x160] sm:$0xff]
    %v1829 = vld [vmem:[%s5] sm:$0xff]
    %1831 = vset.pattern.permute.xlu0 0
    %1832 = vperm.xlu0 %1831, %v1829
    %v1833 = vpop.permute.xlu0 %1832
    %vm1835 = vcmask 588800
    %v1837 = vsel %vm1835, %v1783, 0
    %1839 = vmatpush.msra.mxu0 0.0
    %1840 = vmatpush.msra.mxu0 0.0
    %1841 = vmatpush.msra.mxu0 0.0
    %1842 = vmatpush.msra.mxu0 0.0
    %1843 = vmatpush.msra.mxu0 0.0
    %1844 = vmatpush.msra.mxu0 0.0
    %1845 = vmatpush.msra.mxu0 0.0
    %1846 = vmatpush.msra.mxu0 %v1824
    %1847 = vmatpush.msra.mxu0 %v1819
    %1848 = vmatpush.msra.mxu0 %v1814
    %1849 = vmatpush.msra.mxu0 %v1809
    %1850 = vmatpush.msra.mxu0 %v1804
    %1851 = vmatpush.msra.mxu0 %v1799
    %1852 = vmatpush.msra.mxu0 %v1794
    %1853 = vmatpush.msra.mxu0 %v1789
    %1854 = vmatpush.msra.mxu0 %v1784
    %1855 = vmatmul.f32.gmra.mxu0 %v1837
    %v1856 = vpop.f32.mrf.mxu0
    %v1857 = vadd.f32 %v1833, %v1856
    %1858 = vdwg.mxu0
    %1859 = vmatpush.msra.mxu0 0.0
    %1860 = vmatpush.msra.mxu0 0.0
    %1861 = vmatpush.msra.mxu0 0.0
    %1862 = vmatpush.msra.mxu0 0.0
    %1863 = vmatpush.msra.mxu0 0.0
    %1864 = vmatpush.msra.mxu0 0.0
    %1865 = vmatpush.msra.mxu0 0.0
    %1866 = vmatpush.msra.mxu0 %v1825
    %1867 = vmatpush.msra.mxu0 %v1820
    %1868 = vmatpush.msra.mxu0 %v1815
    %1869 = vmatpush.msra.mxu0 %v1810
    %1870 = vmatpush.msra.mxu0 %v1805
    %1871 = vmatpush.msra.mxu0 %v1800
    %1872 = vmatpush.msra.mxu0 %v1795
    %1873 = vmatpush.msra.mxu0 %v1790
    %1874 = vmatpush.msra.mxu0 %v1785
    %1875 = vmatmul.f32.gmra.mxu0 %v1837
    %v1876 = vpop.f32.mrf.mxu0
    %v1877 = vadd.f32 %v1833, %v1876
    %1878 = vdwg.mxu0
    %1879 = vmatpush.msra.mxu0 0.0
    %1880 = vmatpush.msra.mxu0 0.0
    %1881 = vmatpush.msra.mxu0 0.0
    %1882 = vmatpush.msra.mxu0 0.0
    %1883 = vmatpush.msra.mxu0 0.0
    %1884 = vmatpush.msra.mxu0 0.0
    %1885 = vmatpush.msra.mxu0 0.0
    %1886 = vmatpush.msra.mxu0 %v1826
    %1887 = vmatpush.msra.mxu0 %v1821
    %1888 = vmatpush.msra.mxu0 %v1816
    %1889 = vmatpush.msra.mxu0 %v1811
    %1890 = vmatpush.msra.mxu0 %v1806
    %1891 = vmatpush.msra.mxu0 %v1801
    %1892 = vmatpush.msra.mxu0 %v1796
    %1893 = vmatpush.msra.mxu0 %v1791
    %1894 = vmatpush.msra.mxu0 %v1786
    %1895 = vmatmul.f32.gmra.mxu0 %v1837
    %v1896 = vpop.f32.mrf.mxu0
    %v1897 = vadd.f32 %v1833, %v1896
    %1898 = vdwg.mxu0
    %1899 = vmatpush.msra.mxu0 0.0
    %1900 = vmatpush.msra.mxu0 0.0
    %1901 = vmatpush.msra.mxu0 0.0
    %1902 = vmatpush.msra.mxu0 0.0
    %1903 = vmatpush.msra.mxu0 0.0
    %1904 = vmatpush.msra.mxu0 0.0
    %1905 = vmatpush.msra.mxu0 0.0
    %1906 = vmatpush.msra.mxu0 %v1827
    %1907 = vmatpush.msra.mxu0 %v1822
    %1908 = vmatpush.msra.mxu0 %v1817
    %1909 = vmatpush.msra.mxu0 %v1812
    %1910 = vmatpush.msra.mxu0 %v1807
    %1911 = vmatpush.msra.mxu0 %v1802
    %1912 = vmatpush.msra.mxu0 %v1797
    %1913 = vmatpush.msra.mxu0 %v1792
    %1914 = vmatpush.msra.mxu0 %v1787
    %1915 = vmatmul.f32.gmra.mxu0 %v1837
    %v1916 = vpop.f32.mrf.mxu0
    %v1917 = vadd.f32 %v1833, %v1916
    %1918 = vdwg.mxu0
    %1919 = vmatpush.msra.mxu0 0.0
    %1920 = vmatpush.msra.mxu0 0.0
    %1921 = vmatpush.msra.mxu0 0.0
    %1922 = vmatpush.msra.mxu0 0.0
    %1923 = vmatpush.msra.mxu0 0.0
    %1924 = vmatpush.msra.mxu0 0.0
    %1925 = vmatpush.msra.mxu0 0.0
    %1926 = vmatpush.msra.mxu0 %v1828
    %1927 = vmatpush.msra.mxu0 %v1823
    %1928 = vmatpush.msra.mxu0 %v1818
    %1929 = vmatpush.msra.mxu0 %v1813
    %1930 = vmatpush.msra.mxu0 %v1808
    %1931 = vmatpush.msra.mxu0 %v1803
    %1932 = vmatpush.msra.mxu0 %v1798
    %1933 = vmatpush.msra.mxu0 %v1793
    %1934 = vmatpush.msra.mxu0 %v1788
    %1935 = vmatmul.f32.gmra.mxu0 %v1837
    %v1936 = vpop.f32.mrf.mxu0
    %v1937 = vadd.f32 %v1833, %v1936
    %1938 = vdwg.mxu0
    %v1939 = vmax.f32 %v1857, 0.0
    %v1940 = vmax.f32 %v1877, 0.0
    %v1941 = vmax.f32 %v1897, 0.0
    %v1942 = vmax.f32 %v1917, 0.0
    %v1943 = vmax.f32 %v1937, 0.0
    %1944 = vst [vmem:[#allocation7] sm:$0xff] %v1939
    %1945 = vst [vmem:[#allocation7 + $0x8] sm:$0xff] %v1940
    %1946 = vst [vmem:[#allocation7 + $0x10] sm:$0xff] %v1941
    %1947 = vst [vmem:[#allocation7 + $0x18] sm:$0xff] %v1942
    %1948 = vst.msk [vmem:[#allocation7 + $0x20] sm:$0xff] %vm1382, %v1943
    %v1949 = vld [vmem:[#allocation7] sm:$0xff]
    %v1950 = vld [vmem:[#allocation7 + $0x8] sm:$0xff]
    %v1951 = vld [vmem:[#allocation7 + $0x10] sm:$0xff]
    %1955 = vrot.lane.b32.xlu0 %v1949, 127
    %v1956 = vpop.permute.xlu0 %1955
    %1957 = vrot.lane.b32.xlu0 %v1950, 127
    %v1958 = vpop.permute.xlu0 %1957
    %1959 = vrot.lane.b32.xlu0 %v1951, 127
    %v1960 = vpop.permute.xlu0 %1959
    %v1961 = vsel %vm345, %v1956, %v1958
    %v1962 = vsel %vm345, %v1958, %v1960
    %v1966 = vmax.f32 %v1949, %v1961
    %v1967 = vmax.f32 %v1950, %v1962
    %v1968 = vmax.f32 %v1951, %v1960
    %1969 = vrot.lane.b32.xlu0 %v1949, 110
    %v1970 = vpop.permute.xlu0 %1969
    %1971 = vrot.lane.b32.xlu0 %v1950, 110
    %v1972 = vpop.permute.xlu0 %1971
    %1973 = vrot.lane.b32.xlu0 %v1951, 110
    %v1974 = vpop.permute.xlu0 %1973
    %v1975 = vsel %vm915, %v1970, %v1972
    %v1976 = vsel %vm915, %v1972, %v1974
    %v1980 = vmax.f32 %v1966, %v1975
    %v1981 = vmax.f32 %v1967, %v1976
    %v1982 = vmax.f32 %v1968, %v1974
    %1983 = vrot.lane.b32.xlu0 %v1949, 109
    %v1984 = vpop.permute.xlu0 %1983
    %1985 = vrot.lane.b32.xlu0 %v1950, 109
    %v1986 = vpop.permute.xlu0 %1985
    %1987 = vrot.lane.b32.xlu0 %v1951, 109
    %v1988 = vpop.permute.xlu0 %1987
    %v1989 = vsel %vm966, %v1984, %v1986
    %v1990 = vsel %vm966, %v1986, %v1988
    %v1994 = vmax.f32 %v1980, %v1989
    %v1995 = vmax.f32 %v1981, %v1990
    %v1996 = vmax.f32 %v1982, %v1988
    %v1997 = vld [vmem:[%s7] sm:$0x1]
    %v1998 = vld [vmem:[%s6] sm:$0xff]
    %v1999 = vld [vmem:[%s6 + $0x8] sm:$0xff]
    %v2000 = vld [vmem:[%s6 + $0x10] sm:$0xff]
    %v2001 = vld [vmem:[%s6 + $0x18] sm:$0xff]
    %v2002 = vld [vmem:[%s6 + $0x20] sm:$0xff]
    %v2003 = vld [vmem:[%s6 + $0x28] sm:$0xff]
    %v2004 = vld [vmem:[%s6 + $0x30] sm:$0xff]
    %v2005 = vld [vmem:[%s6 + $0x38] sm:$0xff]
    %v2006 = vld [vmem:[%s6 + $0x40] sm:$0xff]
    %v2007 = vld [vmem:[%s6 + $0x48] sm:$0xff]
    %v2008 = vld [vmem:[%s6 + $0x50] sm:$0xff]
    %v2009 = vld [vmem:[%s6 + $0x58] sm:$0xff]
    %v2010 = vld [vmem:[%s6 + $0x60] sm:$0xff]
    %v2011 = vld [vmem:[%s6 + $0x68] sm:$0xff]
    %v2012 = vld [vmem:[%s6 + $0x70] sm:$0xff]
    %v2013 = vld [vmem:[%s6 + $0x78] sm:$0xff]
    %v2014 = vld [vmem:[%s6 + $0x80] sm:$0xff]
    %v2015 = vld [vmem:[%s6 + $0x88] sm:$0xff]
    %v2016 = vld [vmem:[%s6 + $0x90] sm:$0xff]
    %v2017 = vld [vmem:[%s6 + $0x98] sm:$0xff]
    %v2018 = vld [vmem:[%s6 + $0xa0] sm:$0xff]
    %v2019 = vld [vmem:[%s6 + $0xa8] sm:$0xff]
    %v2020 = vld [vmem:[%s6 + $0xb0] sm:$0xff]
    %v2021 = vld [vmem:[%s6 + $0xb8] sm:$0xff]
    %v2022 = vld [vmem:[%s6 + $0xc0] sm:$0xff]
    %v2023 = vld [vmem:[%s6 + $0xc8] sm:$0xff]
    %v2024 = vld [vmem:[%s6 + $0xd0] sm:$0xff]
    %v2025 = vld [vmem:[%s6 + $0xd8] sm:$0xff]
    %v2026 = vld [vmem:[%s6 + $0xe0] sm:$0xff]
    %v2027 = vld [vmem:[%s6 + $0xe8] sm:$0xff]
    %v2028 = vld [vmem:[%s6 + $0xf0] sm:$0xff]
    %v2029 = vld [vmem:[%s6 + $0xf8] sm:$0xff]
    %v2030 = vld [vmem:[%s6 + $0x100] sm:$0xff]
    %v2031 = vld [vmem:[%s6 + $0x108] sm:$0x7]
    %v2033 = vsel %vm991, %v1996, 0
    %vm2035 = vcmask 1042432
    %v2037 = vsel %vm2035, %v2031, 0
    %2039 = vmatpush.msra.mxu0 %v2013
    %2040 = vmatpush.msra.mxu0 %v2012
    %2041 = vmatpush.msra.mxu0 %v2011
    %2042 = vmatpush.msra.mxu0 %v2010
    %2043 = vmatpush.msra.mxu0 %v2009
    %2044 = vmatpush.msra.mxu0 %v2008
    %2045 = vmatpush.msra.mxu0 %v2007
    %2046 = vmatpush.msra.mxu0 %v2006
    %2047 = vmatpush.msra.mxu0 %v2005
    %2048 = vmatpush.msra.mxu0 %v2004
    %2049 = vmatpush.msra.mxu0 %v2003
    %2050 = vmatpush.msra.mxu0 %v2002
    %2051 = vmatpush.msra.mxu0 %v2001
    %2052 = vmatpush.msra.mxu0 %v2000
    %2053 = vmatpush.msra.mxu0 %v1999
    %2054 = vmatpush.msra.mxu0 %v1998
    %2055 = vmatmul.f32.gmra.mxu0 %v1994
    %v2056 = vpop.f32.mrf.mxu0
    %v2057 = vadd.f32 0.0, %v2056
    %2058 = vdwg.mxu0
    %2059 = vmatpush.msra.mxu0 %v2029
    %2060 = vmatpush.msra.mxu0 %v2028
    %2061 = vmatpush.msra.mxu0 %v2027
    %2062 = vmatpush.msra.mxu0 %v2026
    %2063 = vmatpush.msra.mxu0 %v2025
    %2064 = vmatpush.msra.mxu0 %v2024
    %2065 = vmatpush.msra.mxu0 %v2023
    %2066 = vmatpush.msra.mxu0 %v2022
    %2067 = vmatpush.msra.mxu0 %v2021
    %2068 = vmatpush.msra.mxu0 %v2020
    %2069 = vmatpush.msra.mxu0 %v2019
    %2070 = vmatpush.msra.mxu0 %v2018
    %2071 = vmatpush.msra.mxu0 %v2017
    %2072 = vmatpush.msra.mxu0 %v2016
    %2073 = vmatpush.msra.mxu0 %v2015
    %2074 = vmatpush.msra.mxu0 %v2014
    %2075 = vmatmul.f32.gmra.mxu0 %v1995
    %v2076 = vpop.f32.mrf.mxu0
    %v2077 = vadd.f32 %v2057, %v2076
    %2078 = vdwg.mxu0
    %2079 = vmatpush.msra.mxu0 0.0
    %2080 = vmatpush.msra.mxu0 0.0
    %2081 = vmatpush.msra.mxu0 0.0
    %2082 = vmatpush.msra.mxu0 0.0
    %2083 = vmatpush.msra.mxu0 0.0
    %2084 = vmatpush.msra.mxu0 0.0
    %2085 = vmatpush.msra.mxu0 0.0
    %2086 = vmatpush.msra.mxu0 0.0
    %2087 = vmatpush.msra.mxu0 0.0
    %2088 = vmatpush.msra.mxu0 0.0
    %2089 = vmatpush.msra.mxu0 0.0
    %2090 = vmatpush.msra.mxu0 0.0
    %2091 = vmatpush.msra.mxu0 0.0
    %2092 = vmatpush.msra.mxu0 0.0
    %2093 = vmatpush.msra.mxu0 %v2037
    %2094 = vmatpush.msra.mxu0 %v2030
    %2095 = vmatmul.f32.gmra.mxu0 %v2033
    %v2096 = vpop.f32.mrf.mxu0
    %v2097 = vadd.f32 %v2077, %v2096
    %2098 = vdwg.mxu0
    %v2099 = vadd.f32 %v1997, %v2097
    %s2100 = scalar_lea.vmem %s6, 272
    %v2101 = vld [vmem:[%s2100] sm:$0xff]
    %v2102 = vld [vmem:[%s2100 + $0x8] sm:$0xff]
    %v2103 = vld [vmem:[%s2100 + $0x10] sm:$0xff]
    %v2104 = vld [vmem:[%s2100 + $0x18] sm:$0xff]
    %v2105 = vld [vmem:[%s2100 + $0x20] sm:$0xff]
    %v2106 = vld [vmem:[%s2100 + $0x28] sm:$0xff]
    %v2107 = vld [vmem:[%s2100 + $0x30] sm:$0xff]
    %v2108 = vld [vmem:[%s2100 + $0x38] sm:$0xff]
    %v2109 = vld [vmem:[%s2100 + $0x40] sm:$0xff]
    %v2110 = vld [vmem:[%s2100 + $0x48] sm:$0xff]
    %v2111 = vld [vmem:[%s2100 + $0x50] sm:$0xff]
    %v2112 = vld [vmem:[%s2100 + $0x58] sm:$0xff]
    %v2113 = vld [vmem:[%s2100 + $0x60] sm:$0xff]
    %v2114 = vld [vmem:[%s2100 + $0x68] sm:$0xff]
    %v2115 = vld [vmem:[%s2100 + $0x70] sm:$0xff]
    %v2116 = vld [vmem:[%s2100 + $0x78] sm:$0xff]
    %v2117 = vld [vmem:[%s2100 + $0x80] sm:$0xff]
    %v2118 = vld [vmem:[%s2100 + $0x88] sm:$0xff]
    %v2119 = vld [vmem:[%s2100 + $0x90] sm:$0xff]
    %v2120 = vld [vmem:[%s2100 + $0x98] sm:$0xff]
    %v2121 = vld [vmem:[%s2100 + $0xa0] sm:$0xff]
    %v2122 = vld [vmem:[%s2100 + $0xa8] sm:$0xff]
    %v2123 = vld [vmem:[%s2100 + $0xb0] sm:$0xff]
    %v2124 = vld [vmem:[%s2100 + $0xb8] sm:$0xff]
    %v2125 = vld [vmem:[%s2100 + $0xc0] sm:$0xff]
    %v2126 = vld [vmem:[%s2100 + $0xc8] sm:$0xff]
    %v2127 = vld [vmem:[%s2100 + $0xd0] sm:$0xff]
    %v2128 = vld [vmem:[%s2100 + $0xd8] sm:$0xff]
    %v2129 = vld [vmem:[%s2100 + $0xe0] sm:$0xff]
    %v2130 = vld [vmem:[%s2100 + $0xe8] sm:$0xff]
    %v2131 = vld [vmem:[%s2100 + $0xf0] sm:$0xff]
    %v2132 = vld [vmem:[%s2100 + $0xf8] sm:$0xff]
    %v2133 = vld [vmem:[%s2100 + $0x100] sm:$0xff]
    %v2134 = vld [vmem:[%s2100 + $0x108] sm:$0x7]
    %v2137 = vrot.slane %v1994, 1
    %v2138 = vrot.slane %v1995, 1
    %v2139 = vrot.slane %v1996, 1
    %v2142 = vsel %vm991, %v2139, 0
    %v2145 = vsel %vm2035, %v2134, 0
    %2147 = vmatpush.msra.mxu0 %v2116
    %2148 = vmatpush.msra.mxu0 %v2115
    %2149 = vmatpush.msra.mxu0 %v2114
    %2150 = vmatpush.msra.mxu0 %v2113
    %2151 = vmatpush.msra.mxu0 %v2112
    %2152 = vmatpush.msra.mxu0 %v2111
    %2153 = vmatpush.msra.mxu0 %v2110
    %2154 = vmatpush.msra.mxu0 %v2109
    %2155 = vmatpush.msra.mxu0 %v2108
    %2156 = vmatpush.msra.mxu0 %v2107
    %2157 = vmatpush.msra.mxu0 %v2106
    %2158 = vmatpush.msra.mxu0 %v2105
    %2159 = vmatpush.msra.mxu0 %v2104
    %2160 = vmatpush.msra.mxu0 %v2103
    %2161 = vmatpush.msra.mxu0 %v2102
    %2162 = vmatpush.msra.mxu0 %v2101
    %2163 = vmatmul.f32.gmra.mxu0 %v2137
    %v2164 = vpop.f32.mrf.mxu0
    %v2165 = vadd.f32 0.0, %v2164
    %2166 = vdwg.mxu0
    %2167 = vmatpush.msra.mxu0 %v2132
    %2168 = vmatpush.msra.mxu0 %v2131
    %2169 = vmatpush.msra.mxu0 %v2130
    %2170 = vmatpush.msra.mxu0 %v2129
    %2171 = vmatpush.msra.mxu0 %v2128
    %2172 = vmatpush.msra.mxu0 %v2127
    %2173 = vmatpush.msra.mxu0 %v2126
    %2174 = vmatpush.msra.mxu0 %v2125
    %2175 = vmatpush.msra.mxu0 %v2124
    %2176 = vmatpush.msra.mxu0 %v2123
    %2177 = vmatpush.msra.mxu0 %v2122
    %2178 = vmatpush.msra.mxu0 %v2121
    %2179 = vmatpush.msra.mxu0 %v2120
    %2180 = vmatpush.msra.mxu0 %v2119
    %2181 = vmatpush.msra.mxu0 %v2118
    %2182 = vmatpush.msra.mxu0 %v2117
    %2183 = vmatmul.f32.gmra.mxu0 %v2138
    %v2184 = vpop.f32.mrf.mxu0
    %v2185 = vadd.f32 %v2165, %v2184
    %2186 = vdwg.mxu0
    %2187 = vmatpush.msra.mxu0 0.0
    %2188 = vmatpush.msra.mxu0 0.0
    %2189 = vmatpush.msra.mxu0 0.0
    %2190 = vmatpush.msra.mxu0 0.0
    %2191 = vmatpush.msra.mxu0 0.0
    %2192 = vmatpush.msra.mxu0 0.0
    %2193 = vmatpush.msra.mxu0 0.0
    %2194 = vmatpush.msra.mxu0 0.0
    %2195 = vmatpush.msra.mxu0 0.0
    %2196 = vmatpush.msra.mxu0 0.0
    %2197 = vmatpush.msra.mxu0 0.0
    %2198 = vmatpush.msra.mxu0 0.0
    %2199 = vmatpush.msra.mxu0 0.0
    %2200 = vmatpush.msra.mxu0 0.0
    %2201 = vmatpush.msra.mxu0 %v2145
    %2202 = vmatpush.msra.mxu0 %v2133
    %2203 = vmatmul.f32.gmra.mxu0 %v2142
    %v2204 = vpop.f32.mrf.mxu0
    %v2205 = vadd.f32 %v2185, %v2204
    %2206 = vdwg.mxu0
    %v2207 = vadd.f32 %v2099, %v2205
    %s2208 = scalar_lea.vmem %s6, 544
    %v2209 = vld [vmem:[%s2208] sm:$0xff]
    %v2210 = vld [vmem:[%s2208 + $0x8] sm:$0xff]
    %v2211 = vld [vmem:[%s2208 + $0x10] sm:$0xff]
    %v2212 = vld [vmem:[%s2208 + $0x18] sm:$0xff]
    %v2213 = vld [vmem:[%s2208 + $0x20] sm:$0xff]
    %v2214 = vld [vmem:[%s2208 + $0x28] sm:$0xff]
    %v2215 = vld [vmem:[%s2208 + $0x30] sm:$0xff]
    %v2216 = vld [vmem:[%s2208 + $0x38] sm:$0xff]
    %v2217 = vld [vmem:[%s2208 + $0x40] sm:$0xff]
    %v2218 = vld [vmem:[%s2208 + $0x48] sm:$0xff]
    %v2219 = vld [vmem:[%s2208 + $0x50] sm:$0xff]
    %v2220 = vld [vmem:[%s2208 + $0x58] sm:$0xff]
    %v2221 = vld [vmem:[%s2208 + $0x60] sm:$0xff]
    %v2222 = vld [vmem:[%s2208 + $0x68] sm:$0xff]
    %v2223 = vld [vmem:[%s2208 + $0x70] sm:$0xff]
    %v2224 = vld [vmem:[%s2208 + $0x78] sm:$0xff]
    %v2225 = vld [vmem:[%s2208 + $0x80] sm:$0xff]
    %v2226 = vld [vmem:[%s2208 + $0x88] sm:$0xff]
    %v2227 = vld [vmem:[%s2208 + $0x90] sm:$0xff]
    %v2228 = vld [vmem:[%s2208 + $0x98] sm:$0xff]
    %v2229 = vld [vmem:[%s2208 + $0xa0] sm:$0xff]
    %v2230 = vld [vmem:[%s2208 + $0xa8] sm:$0xff]
    %v2231 = vld [vmem:[%s2208 + $0xb0] sm:$0xff]
    %v2232 = vld [vmem:[%s2208 + $0xb8] sm:$0xff]
    %v2233 = vld [vmem:[%s2208 + $0xc0] sm:$0xff]
    %v2234 = vld [vmem:[%s2208 + $0xc8] sm:$0xff]
    %v2235 = vld [vmem:[%s2208 + $0xd0] sm:$0xff]
    %v2236 = vld [vmem:[%s2208 + $0xd8] sm:$0xff]
    %v2237 = vld [vmem:[%s2208 + $0xe0] sm:$0xff]
    %v2238 = vld [vmem:[%s2208 + $0xe8] sm:$0xff]
    %v2239 = vld [vmem:[%s2208 + $0xf0] sm:$0xff]
    %v2240 = vld [vmem:[%s2208 + $0xf8] sm:$0xff]
    %v2241 = vld [vmem:[%s2208 + $0x100] sm:$0xff]
    %v2242 = vld [vmem:[%s2208 + $0x108] sm:$0x7]
    %v2243 = vrot.slane %v1994, 2
    %v2244 = vrot.slane %v1995, 2
    %v2245 = vrot.slane %v1996, 2
    %v2248 = vsel %vm991, %v2245, 0
    %v2251 = vsel %vm2035, %v2242, 0
    %2253 = vmatpush.msra.mxu0 %v2224
    %2254 = vmatpush.msra.mxu0 %v2223
    %2255 = vmatpush.msra.mxu0 %v2222
    %2256 = vmatpush.msra.mxu0 %v2221
    %2257 = vmatpush.msra.mxu0 %v2220
    %2258 = vmatpush.msra.mxu0 %v2219
    %2259 = vmatpush.msra.mxu0 %v2218
    %2260 = vmatpush.msra.mxu0 %v2217
    %2261 = vmatpush.msra.mxu0 %v2216
    %2262 = vmatpush.msra.mxu0 %v2215
    %2263 = vmatpush.msra.mxu0 %v2214
    %2264 = vmatpush.msra.mxu0 %v2213
    %2265 = vmatpush.msra.mxu0 %v2212
    %2266 = vmatpush.msra.mxu0 %v2211
    %2267 = vmatpush.msra.mxu0 %v2210
    %2268 = vmatpush.msra.mxu0 %v2209
    %2269 = vmatmul.f32.gmra.mxu0 %v2243
    %v2270 = vpop.f32.mrf.mxu0
    %v2271 = vadd.f32 0.0, %v2270
    %2272 = vdwg.mxu0
    %2273 = vmatpush.msra.mxu0 %v2240
    %2274 = vmatpush.msra.mxu0 %v2239
    %2275 = vmatpush.msra.mxu0 %v2238
    %2276 = vmatpush.msra.mxu0 %v2237
    %2277 = vmatpush.msra.mxu0 %v2236
    %2278 = vmatpush.msra.mxu0 %v2235
    %2279 = vmatpush.msra.mxu0 %v2234
    %2280 = vmatpush.msra.mxu0 %v2233
    %2281 = vmatpush.msra.mxu0 %v2232
    %2282 = vmatpush.msra.mxu0 %v2231
    %2283 = vmatpush.msra.mxu0 %v2230
    %2284 = vmatpush.msra.mxu0 %v2229
    %2285 = vmatpush.msra.mxu0 %v2228
    %2286 = vmatpush.msra.mxu0 %v2227
    %2287 = vmatpush.msra.mxu0 %v2226
    %2288 = vmatpush.msra.mxu0 %v2225
    %2289 = vmatmul.f32.gmra.mxu0 %v2244
    %v2290 = vpop.f32.mrf.mxu0
    %v2291 = vadd.f32 %v2271, %v2290
    %2292 = vdwg.mxu0
    %2293 = vmatpush.msra.mxu0 0.0
    %2294 = vmatpush.msra.mxu0 0.0
    %2295 = vmatpush.msra.mxu0 0.0
    %2296 = vmatpush.msra.mxu0 0.0
    %2297 = vmatpush.msra.mxu0 0.0
    %2298 = vmatpush.msra.mxu0 0.0
    %2299 = vmatpush.msra.mxu0 0.0
    %2300 = vmatpush.msra.mxu0 0.0
    %2301 = vmatpush.msra.mxu0 0.0
    %2302 = vmatpush.msra.mxu0 0.0
    %2303 = vmatpush.msra.mxu0 0.0
    %2304 = vmatpush.msra.mxu0 0.0
    %2305 = vmatpush.msra.mxu0 0.0
    %2306 = vmatpush.msra.mxu0 0.0
    %2307 = vmatpush.msra.mxu0 %v2251
    %2308 = vmatpush.msra.mxu0 %v2241
    %2309 = vmatmul.f32.gmra.mxu0 %v2248
    %v2310 = vpop.f32.mrf.mxu0
    %v2311 = vadd.f32 %v2291, %v2310
    %2312 = vdwg.mxu0
    %v2313 = vadd.f32 %v2207, %v2311
    %s2314 = scalar_lea.vmem %s6, 816
    %v2315 = vld [vmem:[%s2314] sm:$0xff]
    %v2316 = vld [vmem:[%s2314 + $0x8] sm:$0xff]
    %v2317 = vld [vmem:[%s2314 + $0x10] sm:$0xff]
    %v2318 = vld [vmem:[%s2314 + $0x18] sm:$0xff]
    %v2319 = vld [vmem:[%s2314 + $0x20] sm:$0xff]
    %v2320 = vld [vmem:[%s2314 + $0x28] sm:$0xff]
    %v2321 = vld [vmem:[%s2314 + $0x30] sm:$0xff]
    %v2322 = vld [vmem:[%s2314 + $0x38] sm:$0xff]
    %v2323 = vld [vmem:[%s2314 + $0x40] sm:$0xff]
    %v2324 = vld [vmem:[%s2314 + $0x48] sm:$0xff]
    %v2325 = vld [vmem:[%s2314 + $0x50] sm:$0xff]
    %v2326 = vld [vmem:[%s2314 + $0x58] sm:$0xff]
    %v2327 = vld [vmem:[%s2314 + $0x60] sm:$0xff]
    %v2328 = vld [vmem:[%s2314 + $0x68] sm:$0xff]
    %v2329 = vld [vmem:[%s2314 + $0x70] sm:$0xff]
    %v2330 = vld [vmem:[%s2314 + $0x78] sm:$0xff]
    %v2331 = vld [vmem:[%s2314 + $0x80] sm:$0xff]
    %v2332 = vld [vmem:[%s2314 + $0x88] sm:$0xff]
    %v2333 = vld [vmem:[%s2314 + $0x90] sm:$0xff]
    %v2334 = vld [vmem:[%s2314 + $0x98] sm:$0xff]
    %v2335 = vld [vmem:[%s2314 + $0xa0] sm:$0xff]
    %v2336 = vld [vmem:[%s2314 + $0xa8] sm:$0xff]
    %v2337 = vld [vmem:[%s2314 + $0xb0] sm:$0xff]
    %v2338 = vld [vmem:[%s2314 + $0xb8] sm:$0xff]
    %v2339 = vld [vmem:[%s2314 + $0xc0] sm:$0xff]
    %v2340 = vld [vmem:[%s2314 + $0xc8] sm:$0xff]
    %v2341 = vld [vmem:[%s2314 + $0xd0] sm:$0xff]
    %v2342 = vld [vmem:[%s2314 + $0xd8] sm:$0xff]
    %v2343 = vld [vmem:[%s2314 + $0xe0] sm:$0xff]
    %v2344 = vld [vmem:[%s2314 + $0xe8] sm:$0xff]
    %v2345 = vld [vmem:[%s2314 + $0xf0] sm:$0xff]
    %v2346 = vld [vmem:[%s2314 + $0xf8] sm:$0xff]
    %v2347 = vld [vmem:[%s2314 + $0x100] sm:$0xff]
    %v2348 = vld [vmem:[%s2314 + $0x108] sm:$0x7]
    %v2349 = vrot.slane %v1994, 3
    %v2350 = vrot.slane %v1995, 3
    %v2351 = vrot.slane %v1996, 3
    %v2354 = vsel %vm991, %v2351, 0
    %v2357 = vsel %vm2035, %v2348, 0
    %2359 = vmatpush.msra.mxu0 %v2330
    %2360 = vmatpush.msra.mxu0 %v2329
    %2361 = vmatpush.msra.mxu0 %v2328
    %2362 = vmatpush.msra.mxu0 %v2327
    %2363 = vmatpush.msra.mxu0 %v2326
    %2364 = vmatpush.msra.mxu0 %v2325
    %2365 = vmatpush.msra.mxu0 %v2324
    %2366 = vmatpush.msra.mxu0 %v2323
    %2367 = vmatpush.msra.mxu0 %v2322
    %2368 = vmatpush.msra.mxu0 %v2321
    %2369 = vmatpush.msra.mxu0 %v2320
    %2370 = vmatpush.msra.mxu0 %v2319
    %2371 = vmatpush.msra.mxu0 %v2318
    %2372 = vmatpush.msra.mxu0 %v2317
    %2373 = vmatpush.msra.mxu0 %v2316
    %2374 = vmatpush.msra.mxu0 %v2315
    %2375 = vmatmul.f32.gmra.mxu0 %v2349
    %v2376 = vpop.f32.mrf.mxu0
    %v2377 = vadd.f32 0.0, %v2376
    %2378 = vdwg.mxu0
    %2379 = vmatpush.msra.mxu0 %v2346
    %2380 = vmatpush.msra.mxu0 %v2345
    %2381 = vmatpush.msra.mxu0 %v2344
    %2382 = vmatpush.msra.mxu0 %v2343
    %2383 = vmatpush.msra.mxu0 %v2342
    %2384 = vmatpush.msra.mxu0 %v2341
    %2385 = vmatpush.msra.mxu0 %v2340
    %2386 = vmatpush.msra.mxu0 %v2339
    %2387 = vmatpush.msra.mxu0 %v2338
    %2388 = vmatpush.msra.mxu0 %v2337
    %2389 = vmatpush.msra.mxu0 %v2336
    %2390 = vmatpush.msra.mxu0 %v2335
    %2391 = vmatpush.msra.mxu0 %v2334
    %2392 = vmatpush.msra.mxu0 %v2333
    %2393 = vmatpush.msra.mxu0 %v2332
    %2394 = vmatpush.msra.mxu0 %v2331
    %2395 = vmatmul.f32.gmra.mxu0 %v2350
    %v2396 = vpop.f32.mrf.mxu0
    %v2397 = vadd.f32 %v2377, %v2396
    %2398 = vdwg.mxu0
    %2399 = vmatpush.msra.mxu0 0.0
    %2400 = vmatpush.msra.mxu0 0.0
    %2401 = vmatpush.msra.mxu0 0.0
    %2402 = vmatpush.msra.mxu0 0.0
    %2403 = vmatpush.msra.mxu0 0.0
    %2404 = vmatpush.msra.mxu0 0.0
    %2405 = vmatpush.msra.mxu0 0.0
    %2406 = vmatpush.msra.mxu0 0.0
    %2407 = vmatpush.msra.mxu0 0.0
    %2408 = vmatpush.msra.mxu0 0.0
    %2409 = vmatpush.msra.mxu0 0.0
    %2410 = vmatpush.msra.mxu0 0.0
    %2411 = vmatpush.msra.mxu0 0.0
    %2412 = vmatpush.msra.mxu0 0.0
    %2413 = vmatpush.msra.mxu0 %v2357
    %2414 = vmatpush.msra.mxu0 %v2347
    %2415 = vmatmul.f32.gmra.mxu0 %v2354
    %v2416 = vpop.f32.mrf.mxu0
    %v2417 = vadd.f32 %v2397, %v2416
    %2418 = vdwg.mxu0
    %v2419 = vadd.f32 %v2313, %v2417
    %s2420 = scalar_lea.vmem %s6, 1088
    %v2421 = vld [vmem:[%s2420] sm:$0xff]
    %v2422 = vld [vmem:[%s2420 + $0x8] sm:$0xff]
    %v2423 = vld [vmem:[%s2420 + $0x10] sm:$0xff]
    %v2424 = vld [vmem:[%s2420 + $0x18] sm:$0xff]
    %v2425 = vld [vmem:[%s2420 + $0x20] sm:$0xff]
    %v2426 = vld [vmem:[%s2420 + $0x28] sm:$0xff]
    %v2427 = vld [vmem:[%s2420 + $0x30] sm:$0xff]
    %v2428 = vld [vmem:[%s2420 + $0x38] sm:$0xff]
    %v2429 = vld [vmem:[%s2420 + $0x40] sm:$0xff]
    %v2430 = vld [vmem:[%s2420 + $0x48] sm:$0xff]
    %v2431 = vld [vmem:[%s2420 + $0x50] sm:$0xff]
    %v2432 = vld [vmem:[%s2420 + $0x58] sm:$0xff]
    %v2433 = vld [vmem:[%s2420 + $0x60] sm:$0xff]
    %v2434 = vld [vmem:[%s2420 + $0x68] sm:$0xff]
    %v2435 = vld [vmem:[%s2420 + $0x70] sm:$0xff]
    %v2436 = vld [vmem:[%s2420 + $0x78] sm:$0xff]
    %v2437 = vld [vmem:[%s2420 + $0x80] sm:$0xff]
    %v2438 = vld [vmem:[%s2420 + $0x88] sm:$0xff]
    %v2439 = vld [vmem:[%s2420 + $0x90] sm:$0xff]
    %v2440 = vld [vmem:[%s2420 + $0x98] sm:$0xff]
    %v2441 = vld [vmem:[%s2420 + $0xa0] sm:$0xff]
    %v2442 = vld [vmem:[%s2420 + $0xa8] sm:$0xff]
    %v2443 = vld [vmem:[%s2420 + $0xb0] sm:$0xff]
    %v2444 = vld [vmem:[%s2420 + $0xb8] sm:$0xff]
    %v2445 = vld [vmem:[%s2420 + $0xc0] sm:$0xff]
    %v2446 = vld [vmem:[%s2420 + $0xc8] sm:$0xff]
    %v2447 = vld [vmem:[%s2420 + $0xd0] sm:$0xff]
    %v2448 = vld [vmem:[%s2420 + $0xd8] sm:$0xff]
    %v2449 = vld [vmem:[%s2420 + $0xe0] sm:$0xff]
    %v2450 = vld [vmem:[%s2420 + $0xe8] sm:$0xff]
    %v2451 = vld [vmem:[%s2420 + $0xf0] sm:$0xff]
    %v2452 = vld [vmem:[%s2420 + $0xf8] sm:$0xff]
    %v2453 = vld [vmem:[%s2420 + $0x100] sm:$0xff]
    %v2454 = vld [vmem:[%s2420 + $0x108] sm:$0x7]
    %v2455 = vrot.slane %v1994, 4
    %v2456 = vrot.slane %v1995, 4
    %v2457 = vrot.slane %v1996, 4
    %v2460 = vsel %vm991, %v2457, 0
    %v2463 = vsel %vm2035, %v2454, 0
    %2465 = vmatpush.msra.mxu0 %v2436
    %2466 = vmatpush.msra.mxu0 %v2435
    %2467 = vmatpush.msra.mxu0 %v2434
    %2468 = vmatpush.msra.mxu0 %v2433
    %2469 = vmatpush.msra.mxu0 %v2432
    %2470 = vmatpush.msra.mxu0 %v2431
    %2471 = vmatpush.msra.mxu0 %v2430
    %2472 = vmatpush.msra.mxu0 %v2429
    %2473 = vmatpush.msra.mxu0 %v2428
    %2474 = vmatpush.msra.mxu0 %v2427
    %2475 = vmatpush.msra.mxu0 %v2426
    %2476 = vmatpush.msra.mxu0 %v2425
    %2477 = vmatpush.msra.mxu0 %v2424
    %2478 = vmatpush.msra.mxu0 %v2423
    %2479 = vmatpush.msra.mxu0 %v2422
    %2480 = vmatpush.msra.mxu0 %v2421
    %2481 = vmatmul.f32.gmra.mxu0 %v2455
    %v2482 = vpop.f32.mrf.mxu0
    %v2483 = vadd.f32 0.0, %v2482
    %2484 = vdwg.mxu0
    %2485 = vmatpush.msra.mxu0 %v2452
    %2486 = vmatpush.msra.mxu0 %v2451
    %2487 = vmatpush.msra.mxu0 %v2450
    %2488 = vmatpush.msra.mxu0 %v2449
    %2489 = vmatpush.msra.mxu0 %v2448
    %2490 = vmatpush.msra.mxu0 %v2447
    %2491 = vmatpush.msra.mxu0 %v2446
    %2492 = vmatpush.msra.mxu0 %v2445
    %2493 = vmatpush.msra.mxu0 %v2444
    %2494 = vmatpush.msra.mxu0 %v2443
    %2495 = vmatpush.msra.mxu0 %v2442
    %2496 = vmatpush.msra.mxu0 %v2441
    %2497 = vmatpush.msra.mxu0 %v2440
    %2498 = vmatpush.msra.mxu0 %v2439
    %2499 = vmatpush.msra.mxu0 %v2438
    %2500 = vmatpush.msra.mxu0 %v2437
    %2501 = vmatmul.f32.gmra.mxu0 %v2456
    %v2502 = vpop.f32.mrf.mxu0
    %v2503 = vadd.f32 %v2483, %v2502
    %2504 = vdwg.mxu0
    %2505 = vmatpush.msra.mxu0 0.0
    %2506 = vmatpush.msra.mxu0 0.0
    %2507 = vmatpush.msra.mxu0 0.0
    %2508 = vmatpush.msra.mxu0 0.0
    %2509 = vmatpush.msra.mxu0 0.0
    %2510 = vmatpush.msra.mxu0 0.0
    %2511 = vmatpush.msra.mxu0 0.0
    %2512 = vmatpush.msra.mxu0 0.0
    %2513 = vmatpush.msra.mxu0 0.0
    %2514 = vmatpush.msra.mxu0 0.0
    %2515 = vmatpush.msra.mxu0 0.0
    %2516 = vmatpush.msra.mxu0 0.0
    %2517 = vmatpush.msra.mxu0 0.0
    %2518 = vmatpush.msra.mxu0 0.0
    %2519 = vmatpush.msra.mxu0 %v2463
    %2520 = vmatpush.msra.mxu0 %v2453
    %2521 = vmatmul.f32.gmra.mxu0 %v2460
    %v2522 = vpop.f32.mrf.mxu0
    %v2523 = vadd.f32 %v2503, %v2522
    %2524 = vdwg.mxu0
    %v2525 = vadd.f32 %v2419, %v2523
    %s2526 = scalar_lea.vmem %s6, 1360
    %v2527 = vld [vmem:[%s2526] sm:$0xff]
    %v2528 = vld [vmem:[%s2526 + $0x8] sm:$0xff]
    %v2529 = vld [vmem:[%s2526 + $0x10] sm:$0xff]
    %v2530 = vld [vmem:[%s2526 + $0x18] sm:$0xff]
    %v2531 = vld [vmem:[%s2526 + $0x20] sm:$0xff]
    %v2532 = vld [vmem:[%s2526 + $0x28] sm:$0xff]
    %v2533 = vld [vmem:[%s2526 + $0x30] sm:$0xff]
    %v2534 = vld [vmem:[%s2526 + $0x38] sm:$0xff]
    %v2535 = vld [vmem:[%s2526 + $0x40] sm:$0xff]
    %v2536 = vld [vmem:[%s2526 + $0x48] sm:$0xff]
    %v2537 = vld [vmem:[%s2526 + $0x50] sm:$0xff]
    %v2538 = vld [vmem:[%s2526 + $0x58] sm:$0xff]
    %v2539 = vld [vmem:[%s2526 + $0x60] sm:$0xff]
    %v2540 = vld [vmem:[%s2526 + $0x68] sm:$0xff]
    %v2541 = vld [vmem:[%s2526 + $0x70] sm:$0xff]
    %v2542 = vld [vmem:[%s2526 + $0x78] sm:$0xff]
    %v2543 = vld [vmem:[%s2526 + $0x80] sm:$0xff]
    %v2544 = vld [vmem:[%s2526 + $0x88] sm:$0xff]
    %v2545 = vld [vmem:[%s2526 + $0x90] sm:$0xff]
    %v2546 = vld [vmem:[%s2526 + $0x98] sm:$0xff]
    %v2547 = vld [vmem:[%s2526 + $0xa0] sm:$0xff]
    %v2548 = vld [vmem:[%s2526 + $0xa8] sm:$0xff]
    %v2549 = vld [vmem:[%s2526 + $0xb0] sm:$0xff]
    %v2550 = vld [vmem:[%s2526 + $0xb8] sm:$0xff]
    %v2551 = vld [vmem:[%s2526 + $0xc0] sm:$0xff]
    %v2552 = vld [vmem:[%s2526 + $0xc8] sm:$0xff]
    %v2553 = vld [vmem:[%s2526 + $0xd0] sm:$0xff]
    %v2554 = vld [vmem:[%s2526 + $0xd8] sm:$0xff]
    %v2555 = vld [vmem:[%s2526 + $0xe0] sm:$0xff]
    %v2556 = vld [vmem:[%s2526 + $0xe8] sm:$0xff]
    %v2557 = vld [vmem:[%s2526 + $0xf0] sm:$0xff]
    %v2558 = vld [vmem:[%s2526 + $0xf8] sm:$0xff]
    %v2559 = vld [vmem:[%s2526 + $0x100] sm:$0xff]
    %v2560 = vld [vmem:[%s2526 + $0x108] sm:$0x7]
    %v2561 = vrot.slane %v1994, 5
    %v2562 = vrot.slane %v1995, 5
    %v2563 = vrot.slane %v1996, 5
    %v2566 = vsel %vm991, %v2563, 0
    %v2569 = vsel %vm2035, %v2560, 0
    %2571 = vmatpush.msra.mxu0 %v2542
    %2572 = vmatpush.msra.mxu0 %v2541
    %2573 = vmatpush.msra.mxu0 %v2540
    %2574 = vmatpush.msra.mxu0 %v2539
    %2575 = vmatpush.msra.mxu0 %v2538
    %2576 = vmatpush.msra.mxu0 %v2537
    %2577 = vmatpush.msra.mxu0 %v2536
    %2578 = vmatpush.msra.mxu0 %v2535
    %2579 = vmatpush.msra.mxu0 %v2534
    %2580 = vmatpush.msra.mxu0 %v2533
    %2581 = vmatpush.msra.mxu0 %v2532
    %2582 = vmatpush.msra.mxu0 %v2531
    %2583 = vmatpush.msra.mxu0 %v2530
    %2584 = vmatpush.msra.mxu0 %v2529
    %2585 = vmatpush.msra.mxu0 %v2528
    %2586 = vmatpush.msra.mxu0 %v2527
    %2587 = vmatmul.f32.gmra.mxu0 %v2561
    %v2588 = vpop.f32.mrf.mxu0
    %v2589 = vadd.f32 0.0, %v2588
    %2590 = vdwg.mxu0
    %2591 = vmatpush.msra.mxu0 %v2558
    %2592 = vmatpush.msra.mxu0 %v2557
    %2593 = vmatpush.msra.mxu0 %v2556
    %2594 = vmatpush.msra.mxu0 %v2555
    %2595 = vmatpush.msra.mxu0 %v2554
    %2596 = vmatpush.msra.mxu0 %v2553
    %2597 = vmatpush.msra.mxu0 %v2552
    %2598 = vmatpush.msra.mxu0 %v2551
    %2599 = vmatpush.msra.mxu0 %v2550
    %2600 = vmatpush.msra.mxu0 %v2549
    %2601 = vmatpush.msra.mxu0 %v2548
    %2602 = vmatpush.msra.mxu0 %v2547
    %2603 = vmatpush.msra.mxu0 %v2546
    %2604 = vmatpush.msra.mxu0 %v2545
    %2605 = vmatpush.msra.mxu0 %v2544
    %2606 = vmatpush.msra.mxu0 %v2543
    %2607 = vmatmul.f32.gmra.mxu0 %v2562
    %v2608 = vpop.f32.mrf.mxu0
    %v2609 = vadd.f32 %v2589, %v2608
    %2610 = vdwg.mxu0
    %2611 = vmatpush.msra.mxu0 0.0
    %2612 = vmatpush.msra.mxu0 0.0
    %2613 = vmatpush.msra.mxu0 0.0
    %2614 = vmatpush.msra.mxu0 0.0
    %2615 = vmatpush.msra.mxu0 0.0
    %2616 = vmatpush.msra.mxu0 0.0
    %2617 = vmatpush.msra.mxu0 0.0
    %2618 = vmatpush.msra.mxu0 0.0
    %2619 = vmatpush.msra.mxu0 0.0
    %2620 = vmatpush.msra.mxu0 0.0
    %2621 = vmatpush.msra.mxu0 0.0
    %2622 = vmatpush.msra.mxu0 0.0
    %2623 = vmatpush.msra.mxu0 0.0
    %2624 = vmatpush.msra.mxu0 0.0
    %2625 = vmatpush.msra.mxu0 %v2569
    %2626 = vmatpush.msra.mxu0 %v2559
    %2627 = vmatmul.f32.gmra.mxu0 %v2566
    %v2628 = vpop.f32.mrf.mxu0
    %v2629 = vadd.f32 %v2609, %v2628
    %2630 = vdwg.mxu0
    %v2631 = vadd.f32 %v2525, %v2629
    %s2632 = scalar_lea.vmem %s6, 1632
    %v2633 = vld [vmem:[%s2632] sm:$0xff]
    %v2634 = vld [vmem:[%s2632 + $0x8] sm:$0xff]
    %v2635 = vld [vmem:[%s2632 + $0x10] sm:$0xff]
    %v2636 = vld [vmem:[%s2632 + $0x18] sm:$0xff]
    %v2637 = vld [vmem:[%s2632 + $0x20] sm:$0xff]
    %v2638 = vld [vmem:[%s2632 + $0x28] sm:$0xff]
    %v2639 = vld [vmem:[%s2632 + $0x30] sm:$0xff]
    %v2640 = vld [vmem:[%s2632 + $0x38] sm:$0xff]
    %v2641 = vld [vmem:[%s2632 + $0x40] sm:$0xff]
    %v2642 = vld [vmem:[%s2632 + $0x48] sm:$0xff]
    %v2643 = vld [vmem:[%s2632 + $0x50] sm:$0xff]
    %v2644 = vld [vmem:[%s2632 + $0x58] sm:$0xff]
    %v2645 = vld [vmem:[%s2632 + $0x60] sm:$0xff]
    %v2646 = vld [vmem:[%s2632 + $0x68] sm:$0xff]
    %v2647 = vld [vmem:[%s2632 + $0x70] sm:$0xff]
    %v2648 = vld [vmem:[%s2632 + $0x78] sm:$0xff]
    %v2649 = vld [vmem:[%s2632 + $0x80] sm:$0xff]
    %v2650 = vld [vmem:[%s2632 + $0x88] sm:$0xff]
    %v2651 = vld [vmem:[%s2632 + $0x90] sm:$0xff]
    %v2652 = vld [vmem:[%s2632 + $0x98] sm:$0xff]
    %v2653 = vld [vmem:[%s2632 + $0xa0] sm:$0xff]
    %v2654 = vld [vmem:[%s2632 + $0xa8] sm:$0xff]
    %v2655 = vld [vmem:[%s2632 + $0xb0] sm:$0xff]
    %v2656 = vld [vmem:[%s2632 + $0xb8] sm:$0xff]
    %v2657 = vld [vmem:[%s2632 + $0xc0] sm:$0xff]
    %v2658 = vld [vmem:[%s2632 + $0xc8] sm:$0xff]
    %v2659 = vld [vmem:[%s2632 + $0xd0] sm:$0xff]
    %v2660 = vld [vmem:[%s2632 + $0xd8] sm:$0xff]
    %v2661 = vld [vmem:[%s2632 + $0xe0] sm:$0xff]
    %v2662 = vld [vmem:[%s2632 + $0xe8] sm:$0xff]
    %v2663 = vld [vmem:[%s2632 + $0xf0] sm:$0xff]
    %v2664 = vld [vmem:[%s2632 + $0xf8] sm:$0xff]
    %v2665 = vld [vmem:[%s2632 + $0x100] sm:$0xff]
    %v2666 = vld [vmem:[%s2632 + $0x108] sm:$0x7]
    %v2667 = vrot.slane %v1994, 6
    %v2668 = vrot.slane %v1995, 6
    %v2669 = vrot.slane %v1996, 6
    %v2672 = vsel %vm991, %v2669, 0
    %v2675 = vsel %vm2035, %v2666, 0
    %2677 = vmatpush.msra.mxu0 %v2648
    %2678 = vmatpush.msra.mxu0 %v2647
    %2679 = vmatpush.msra.mxu0 %v2646
    %2680 = vmatpush.msra.mxu0 %v2645
    %2681 = vmatpush.msra.mxu0 %v2644
    %2682 = vmatpush.msra.mxu0 %v2643
    %2683 = vmatpush.msra.mxu0 %v2642
    %2684 = vmatpush.msra.mxu0 %v2641
    %2685 = vmatpush.msra.mxu0 %v2640
    %2686 = vmatpush.msra.mxu0 %v2639
    %2687 = vmatpush.msra.mxu0 %v2638
    %2688 = vmatpush.msra.mxu0 %v2637
    %2689 = vmatpush.msra.mxu0 %v2636
    %2690 = vmatpush.msra.mxu0 %v2635
    %2691 = vmatpush.msra.mxu0 %v2634
    %2692 = vmatpush.msra.mxu0 %v2633
    %2693 = vmatmul.f32.gmra.mxu0 %v2667
    %v2694 = vpop.f32.mrf.mxu0
    %v2695 = vadd.f32 0.0, %v2694
    %2696 = vdwg.mxu0
    %2697 = vmatpush.msra.mxu0 %v2664
    %2698 = vmatpush.msra.mxu0 %v2663
    %2699 = vmatpush.msra.mxu0 %v2662
    %2700 = vmatpush.msra.mxu0 %v2661
    %2701 = vmatpush.msra.mxu0 %v2660
    %2702 = vmatpush.msra.mxu0 %v2659
    %2703 = vmatpush.msra.mxu0 %v2658
    %2704 = vmatpush.msra.mxu0 %v2657
    %2705 = vmatpush.msra.mxu0 %v2656
    %2706 = vmatpush.msra.mxu0 %v2655
    %2707 = vmatpush.msra.mxu0 %v2654
    %2708 = vmatpush.msra.mxu0 %v2653
    %2709 = vmatpush.msra.mxu0 %v2652
    %2710 = vmatpush.msra.mxu0 %v2651
    %2711 = vmatpush.msra.mxu0 %v2650
    %2712 = vmatpush.msra.mxu0 %v2649
    %2713 = vmatmul.f32.gmra.mxu0 %v2668
    %v2714 = vpop.f32.mrf.mxu0
    %v2715 = vadd.f32 %v2695, %v2714
    %2716 = vdwg.mxu0
    %2717 = vmatpush.msra.mxu0 0.0
    %2718 = vmatpush.msra.mxu0 0.0
    %2719 = vmatpush.msra.mxu0 0.0
    %2720 = vmatpush.msra.mxu0 0.0
    %2721 = vmatpush.msra.mxu0 0.0
    %2722 = vmatpush.msra.mxu0 0.0
    %2723 = vmatpush.msra.mxu0 0.0
    %2724 = vmatpush.msra.mxu0 0.0
    %2725 = vmatpush.msra.mxu0 0.0
    %2726 = vmatpush.msra.mxu0 0.0
    %2727 = vmatpush.msra.mxu0 0.0
    %2728 = vmatpush.msra.mxu0 0.0
    %2729 = vmatpush.msra.mxu0 0.0
    %2730 = vmatpush.msra.mxu0 0.0
    %2731 = vmatpush.msra.mxu0 %v2675
    %2732 = vmatpush.msra.mxu0 %v2665
    %2733 = vmatmul.f32.gmra.mxu0 %v2672
    %v2734 = vpop.f32.mrf.mxu0
    %v2735 = vadd.f32 %v2715, %v2734
    %2736 = vdwg.mxu0
    %v2737 = vadd.f32 %v2631, %v2735
    %s2738 = scalar_lea.vmem %s6, 1904
    %v2739 = vld [vmem:[%s2738] sm:$0xff]
    %v2740 = vld [vmem:[%s2738 + $0x8] sm:$0xff]
    %v2741 = vld [vmem:[%s2738 + $0x10] sm:$0xff]
    %v2742 = vld [vmem:[%s2738 + $0x18] sm:$0xff]
    %v2743 = vld [vmem:[%s2738 + $0x20] sm:$0xff]
    %v2744 = vld [vmem:[%s2738 + $0x28] sm:$0xff]
    %v2745 = vld [vmem:[%s2738 + $0x30] sm:$0xff]
    %v2746 = vld [vmem:[%s2738 + $0x38] sm:$0xff]
    %v2747 = vld [vmem:[%s2738 + $0x40] sm:$0xff]
    %v2748 = vld [vmem:[%s2738 + $0x48] sm:$0xff]
    %v2749 = vld [vmem:[%s2738 + $0x50] sm:$0xff]
    %v2750 = vld [vmem:[%s2738 + $0x58] sm:$0xff]
    %v2751 = vld [vmem:[%s2738 + $0x60] sm:$0xff]
    %v2752 = vld [vmem:[%s2738 + $0x68] sm:$0xff]
    %v2753 = vld [vmem:[%s2738 + $0x70] sm:$0xff]
    %v2754 = vld [vmem:[%s2738 + $0x78] sm:$0xff]
    %v2755 = vld [vmem:[%s2738 + $0x80] sm:$0xff]
    %v2756 = vld [vmem:[%s2738 + $0x88] sm:$0xff]
    %v2757 = vld [vmem:[%s2738 + $0x90] sm:$0xff]
    %v2758 = vld [vmem:[%s2738 + $0x98] sm:$0xff]
    %v2759 = vld [vmem:[%s2738 + $0xa0] sm:$0xff]
    %v2760 = vld [vmem:[%s2738 + $0xa8] sm:$0xff]
    %v2761 = vld [vmem:[%s2738 + $0xb0] sm:$0xff]
    %v2762 = vld [vmem:[%s2738 + $0xb8] sm:$0xff]
    %v2763 = vld [vmem:[%s2738 + $0xc0] sm:$0xff]
    %v2764 = vld [vmem:[%s2738 + $0xc8] sm:$0xff]
    %v2765 = vld [vmem:[%s2738 + $0xd0] sm:$0xff]
    %v2766 = vld [vmem:[%s2738 + $0xd8] sm:$0xff]
    %v2767 = vld [vmem:[%s2738 + $0xe0] sm:$0xff]
    %v2768 = vld [vmem:[%s2738 + $0xe8] sm:$0xff]
    %v2769 = vld [vmem:[%s2738 + $0xf0] sm:$0xff]
    %v2770 = vld [vmem:[%s2738 + $0xf8] sm:$0xff]
    %v2771 = vld [vmem:[%s2738 + $0x100] sm:$0xff]
    %v2772 = vld [vmem:[%s2738 + $0x108] sm:$0x7]
    %v2773 = vrot.slane %v1994, 7
    %v2774 = vrot.slane %v1995, 7
    %v2775 = vrot.slane %v1996, 7
    %v2778 = vsel %vm991, %v2775, 0
    %v2781 = vsel %vm2035, %v2772, 0
    %2783 = vmatpush.msra.mxu0 %v2754
    %2784 = vmatpush.msra.mxu0 %v2753
    %2785 = vmatpush.msra.mxu0 %v2752
    %2786 = vmatpush.msra.mxu0 %v2751
    %2787 = vmatpush.msra.mxu0 %v2750
    %2788 = vmatpush.msra.mxu0 %v2749
    %2789 = vmatpush.msra.mxu0 %v2748
    %2790 = vmatpush.msra.mxu0 %v2747
    %2791 = vmatpush.msra.mxu0 %v2746
    %2792 = vmatpush.msra.mxu0 %v2745
    %2793 = vmatpush.msra.mxu0 %v2744
    %2794 = vmatpush.msra.mxu0 %v2743
    %2795 = vmatpush.msra.mxu0 %v2742
    %2796 = vmatpush.msra.mxu0 %v2741
    %2797 = vmatpush.msra.mxu0 %v2740
    %2798 = vmatpush.msra.mxu0 %v2739
    %2799 = vmatmul.f32.gmra.mxu0 %v2773
    %v2800 = vpop.f32.mrf.mxu0
    %v2801 = vadd.f32 0.0, %v2800
    %2802 = vdwg.mxu0
    %2803 = vmatpush.msra.mxu0 %v2770
    %2804 = vmatpush.msra.mxu0 %v2769
    %2805 = vmatpush.msra.mxu0 %v2768
    %2806 = vmatpush.msra.mxu0 %v2767
    %2807 = vmatpush.msra.mxu0 %v2766
    %2808 = vmatpush.msra.mxu0 %v2765
    %2809 = vmatpush.msra.mxu0 %v2764
    %2810 = vmatpush.msra.mxu0 %v2763
    %2811 = vmatpush.msra.mxu0 %v2762
    %2812 = vmatpush.msra.mxu0 %v2761
    %2813 = vmatpush.msra.mxu0 %v2760
    %2814 = vmatpush.msra.mxu0 %v2759
    %2815 = vmatpush.msra.mxu0 %v2758
    %2816 = vmatpush.msra.mxu0 %v2757
    %2817 = vmatpush.msra.mxu0 %v2756
    %2818 = vmatpush.msra.mxu0 %v2755
    %2819 = vmatmul.f32.gmra.mxu0 %v2774
    %v2820 = vpop.f32.mrf.mxu0
    %v2821 = vadd.f32 %v2801, %v2820
    %2822 = vdwg.mxu0
    %2823 = vmatpush.msra.mxu0 0.0
    %2824 = vmatpush.msra.mxu0 0.0
    %2825 = vmatpush.msra.mxu0 0.0
    %2826 = vmatpush.msra.mxu0 0.0
    %2827 = vmatpush.msra.mxu0 0.0
    %2828 = vmatpush.msra.mxu0 0.0
    %2829 = vmatpush.msra.mxu0 0.0
    %2830 = vmatpush.msra.mxu0 0.0
    %2831 = vmatpush.msra.mxu0 0.0
    %2832 = vmatpush.msra.mxu0 0.0
    %2833 = vmatpush.msra.mxu0 0.0
    %2834 = vmatpush.msra.mxu0 0.0
    %2835 = vmatpush.msra.mxu0 0.0
    %2836 = vmatpush.msra.mxu0 0.0
    %2837 = vmatpush.msra.mxu0 %v2781
    %2838 = vmatpush.msra.mxu0 %v2771
    %2839 = vmatmul.f32.gmra.mxu0 %v2778
    %v2840 = vpop.f32.mrf.mxu0
    %v2841 = vadd.f32 %v2821, %v2840
    %2842 = vdwg.mxu0
    %v2843 = vadd.f32 %v2737, %v2841
    %v2844 = vmax.f32 %v2843, 0.0
    %v2845 = vld [vmem:[%s8] sm:$0xff]
    %v2846 = vld [vmem:[%s8 + $0x8] sm:$0xff]
    %v2847 = vld [vmem:[%s8 + $0x10] sm:$0xff]
    %v2848 = vld [vmem:[%s8 + $0x18] sm:$0xff]
    %v2849 = vld [vmem:[%s9] sm:$0x1]
    %vm2850 = vcmask 261120
    %v2852 = vsel %vm2850, %v2844, 0
    %2854 = vmatpush.msra.mxu0 0.0
    %2855 = vmatpush.msra.mxu0 0.0
    %2856 = vmatpush.msra.mxu0 0.0
    %2857 = vmatpush.msra.mxu0 0.0
    %2858 = vmatpush.msra.mxu0 0.0
    %2859 = vmatpush.msra.mxu0 0.0
    %2860 = vmatpush.msra.mxu0 0.0
    %2861 = vmatpush.msra.mxu0 0.0
    %2862 = vmatpush.msra.mxu0 0.0
    %2863 = vmatpush.msra.mxu0 0.0
    %2864 = vmatpush.msra.mxu0 0.0
    %2865 = vmatpush.msra.mxu0 0.0
    %2866 = vmatpush.msra.mxu0 %v2848
    %2867 = vmatpush.msra.mxu0 %v2847
    %2868 = vmatpush.msra.mxu0 %v2846
    %2869 = vmatpush.msra.mxu0 %v2845
    %2870 = vmatmul.f32.gmra.mxu0 %v2852
    %v2871 = vpop.f32.mrf.mxu0
    %v2872 = vadd.f32 %v2849, %v2871
    %2873 = vdwg.mxu0
    %vm2874 = vcmask 73728
    %2875 = vst.msk [vmem:[#allocation8] sm:$0x1] %vm2874, %v2872
    %v2876 = vld [vmem:[#allocation7 + $0x10] sm:$0xff]
    %v2877 = vld [vmem:[#allocation7 + $0x18] sm:$0xff]
    %v2878 = vld [vmem:[#allocation7 + $0x20] sm:$0xff]
    %2882 = vrot.lane.b32.xlu0 %v2876, 127
    %v2883 = vpop.permute.xlu0 %2882
    %2884 = vrot.lane.b32.xlu0 %v2877, 127
    %v2885 = vpop.permute.xlu0 %2884
    %2886 = vrot.lane.b32.xlu0 %v2878, 127
    %v2887 = vpop.permute.xlu0 %2886
    %v2888 = vsel %vm345, %v2883, %v2885
    %v2889 = vsel %vm345, %v2885, %v2887
    %v2893 = vmax.f32 %v2876, %v2888
    %v2894 = vmax.f32 %v2877, %v2889
    %v2895 = vmax.f32 %v2878, %v2887
    %2896 = vrot.lane.b32.xlu0 %v2876, 110
    %v2897 = vpop.permute.xlu0 %2896
    %2898 = vrot.lane.b32.xlu0 %v2877, 110
    %v2899 = vpop.permute.xlu0 %2898
    %2900 = vrot.lane.b32.xlu0 %v2878, 110
    %v2901 = vpop.permute.xlu0 %2900
    %v2902 = vsel %vm915, %v2897, %v2899
    %v2903 = vsel %vm915, %v2899, %v2901
    %v2907 = vmax.f32 %v2893, %v2902
    %v2908 = vmax.f32 %v2894, %v2903
    %v2909 = vmax.f32 %v2895, %v2901
    %2910 = vrot.lane.b32.xlu0 %v2876, 109
    %v2911 = vpop.permute.xlu0 %2910
    %2912 = vrot.lane.b32.xlu0 %v2877, 109
    %v2913 = vpop.permute.xlu0 %2912
    %2914 = vrot.lane.b32.xlu0 %v2878, 109
    %v2915 = vpop.permute.xlu0 %2914
    %v2916 = vsel %vm966, %v2911, %v2913
    %v2917 = vsel %vm966, %v2913, %v2915
    %v2921 = vmax.f32 %v2907, %v2916
    %v2922 = vmax.f32 %v2908, %v2917
    %v2923 = vmax.f32 %v2909, %v2915
    %v2924 = vld [vmem:[%s7] sm:$0x1]
    %v2925 = vld [vmem:[%s6] sm:$0xff]
    %v2926 = vld [vmem:[%s6 + $0x8] sm:$0xff]
    %v2927 = vld [vmem:[%s6 + $0x10] sm:$0xff]
    %v2928 = vld [vmem:[%s6 + $0x18] sm:$0xff]
    %v2929 = vld [vmem:[%s6 + $0x20] sm:$0xff]
    %v2930 = vld [vmem:[%s6 + $0x28] sm:$0xff]
    %v2931 = vld [vmem:[%s6 + $0x30] sm:$0xff]
    %v2932 = vld [vmem:[%s6 + $0x38] sm:$0xff]
    %v2933 = vld [vmem:[%s6 + $0x40] sm:$0xff]
    %v2934 = vld [vmem:[%s6 + $0x48] sm:$0xff]
    %v2935 = vld [vmem:[%s6 + $0x50] sm:$0xff]
    %v2936 = vld [vmem:[%s6 + $0x58] sm:$0xff]
    %v2937 = vld [vmem:[%s6 + $0x60] sm:$0xff]
    %v2938 = vld [vmem:[%s6 + $0x68] sm:$0xff]
    %v2939 = vld [vmem:[%s6 + $0x70] sm:$0xff]
    %v2940 = vld [vmem:[%s6 + $0x78] sm:$0xff]
    %v2941 = vld [vmem:[%s6 + $0x80] sm:$0xff]
    %v2942 = vld [vmem:[%s6 + $0x88] sm:$0xff]
    %v2943 = vld [vmem:[%s6 + $0x90] sm:$0xff]
    %v2944 = vld [vmem:[%s6 + $0x98] sm:$0xff]
    %v2945 = vld [vmem:[%s6 + $0xa0] sm:$0xff]
    %v2946 = vld [vmem:[%s6 + $0xa8] sm:$0xff]
    %v2947 = vld [vmem:[%s6 + $0xb0] sm:$0xff]
    %v2948 = vld [vmem:[%s6 + $0xb8] sm:$0xff]
    %v2949 = vld [vmem:[%s6 + $0xc0] sm:$0xff]
    %v2950 = vld [vmem:[%s6 + $0xc8] sm:$0xff]
    %v2951 = vld [vmem:[%s6 + $0xd0] sm:$0xff]
    %v2952 = vld [vmem:[%s6 + $0xd8] sm:$0xff]
    %v2953 = vld [vmem:[%s6 + $0xe0] sm:$0xff]
    %v2954 = vld [vmem:[%s6 + $0xe8] sm:$0xff]
    %v2955 = vld [vmem:[%s6 + $0xf0] sm:$0xff]
    %v2956 = vld [vmem:[%s6 + $0xf8] sm:$0xff]
    %v2957 = vld [vmem:[%s6 + $0x100] sm:$0xff]
    %v2958 = vld [vmem:[%s6 + $0x108] sm:$0x7]
    %2962 = vrot.lane.b32.xlu0 %v2921, 98
    %v2963 = vpop.permute.xlu0 %2962
    %2964 = vrot.lane.b32.xlu0 %v2922, 98
    %v2965 = vpop.permute.xlu0 %2964
    %2966 = vrot.lane.b32.xlu0 %v2923, 98
    %v2967 = vpop.permute.xlu0 %2966
    %vm2968 = vcmask 801792
    %v2969 = vsel %vm2968, %v2963, %v2965
    %v2970 = vsel %vm2968, %v2965, %v2967
    %v2973 = vsel %vm991, %v2967, 0
    %v2976 = vsel %vm2035, %v2958, 0
    %2978 = vmatpush.msra.mxu0 %v2940
    %2979 = vmatpush.msra.mxu0 %v2939
    %2980 = vmatpush.msra.mxu0 %v2938
    %2981 = vmatpush.msra.mxu0 %v2937
    %2982 = vmatpush.msra.mxu0 %v2936
    %2983 = vmatpush.msra.mxu0 %v2935
    %2984 = vmatpush.msra.mxu0 %v2934
    %2985 = vmatpush.msra.mxu0 %v2933
    %2986 = vmatpush.msra.mxu0 %v2932
    %2987 = vmatpush.msra.mxu0 %v2931
    %2988 = vmatpush.msra.mxu0 %v2930
    %2989 = vmatpush.msra.mxu0 %v2929
    %2990 = vmatpush.msra.mxu0 %v2928
    %2991 = vmatpush.msra.mxu0 %v2927
    %2992 = vmatpush.msra.mxu0 %v2926
    %2993 = vmatpush.msra.mxu0 %v2925
    %2994 = vmatmul.f32.gmra.mxu0 %v2969
    %v2995 = vpop.f32.mrf.mxu0
    %v2996 = vadd.f32 0.0, %v2995
    %2997 = vdwg.mxu0
    %2998 = vmatpush.msra.mxu0 %v2956
    %2999 = vmatpush.msra.mxu0 %v2955
    %3000 = vmatpush.msra.mxu0 %v2954
    %3001 = vmatpush.msra.mxu0 %v2953
    %3002 = vmatpush.msra.mxu0 %v2952
    %3003 = vmatpush.msra.mxu0 %v2951
    %3004 = vmatpush.msra.mxu0 %v2950
    %3005 = vmatpush.msra.mxu0 %v2949
    %3006 = vmatpush.msra.mxu0 %v2948
    %3007 = vmatpush.msra.mxu0 %v2947
    %3008 = vmatpush.msra.mxu0 %v2946
    %3009 = vmatpush.msra.mxu0 %v2945
    %3010 = vmatpush.msra.mxu0 %v2944
    %3011 = vmatpush.msra.mxu0 %v2943
    %3012 = vmatpush.msra.mxu0 %v2942
    %3013 = vmatpush.msra.mxu0 %v2941
    %3014 = vmatmul.f32.gmra.mxu0 %v2970
    %v3015 = vpop.f32.mrf.mxu0
    %v3016 = vadd.f32 %v2996, %v3015
    %3017 = vdwg.mxu0
    %3018 = vmatpush.msra.mxu0 0.0
    %3019 = vmatpush.msra.mxu0 0.0
    %3020 = vmatpush.msra.mxu0 0.0
    %3021 = vmatpush.msra.mxu0 0.0
    %3022 = vmatpush.msra.mxu0 0.0
    %3023 = vmatpush.msra.mxu0 0.0
    %3024 = vmatpush.msra.mxu0 0.0
    %3025 = vmatpush.msra.mxu0 0.0
    %3026 = vmatpush.msra.mxu0 0.0
    %3027 = vmatpush.msra.mxu0 0.0
    %3028 = vmatpush.msra.mxu0 0.0
    %3029 = vmatpush.msra.mxu0 0.0
    %3030 = vmatpush.msra.mxu0 0.0
    %3031 = vmatpush.msra.mxu0 0.0
    %3032 = vmatpush.msra.mxu0 %v2976
    %3033 = vmatpush.msra.mxu0 %v2957
    %3034 = vmatmul.f32.gmra.mxu0 %v2973
    %v3035 = vpop.f32.mrf.mxu0
    %v3036 = vadd.f32 %v3016, %v3035
    %3037 = vdwg.mxu0
    %v3038 = vadd.f32 %v2924, %v3036
    %v3039 = vld [vmem:[%s2100] sm:$0xff]
    %v3040 = vld [vmem:[%s2100 + $0x8] sm:$0xff]
    %v3041 = vld [vmem:[%s2100 + $0x10] sm:$0xff]
    %v3042 = vld [vmem:[%s2100 + $0x18] sm:$0xff]
    %v3043 = vld [vmem:[%s2100 + $0x20] sm:$0xff]
    %v3044 = vld [vmem:[%s2100 + $0x28] sm:$0xff]
    %v3045 = vld [vmem:[%s2100 + $0x30] sm:$0xff]
    %v3046 = vld [vmem:[%s2100 + $0x38] sm:$0xff]
    %v3047 = vld [vmem:[%s2100 + $0x40] sm:$0xff]
    %v3048 = vld [vmem:[%s2100 + $0x48] sm:$0xff]
    %v3049 = vld [vmem:[%s2100 + $0x50] sm:$0xff]
    %v3050 = vld [vmem:[%s2100 + $0x58] sm:$0xff]
    %v3051 = vld [vmem:[%s2100 + $0x60] sm:$0xff]
    %v3052 = vld [vmem:[%s2100 + $0x68] sm:$0xff]
    %v3053 = vld [vmem:[%s2100 + $0x70] sm:$0xff]
    %v3054 = vld [vmem:[%s2100 + $0x78] sm:$0xff]
    %v3055 = vld [vmem:[%s2100 + $0x80] sm:$0xff]
    %v3056 = vld [vmem:[%s2100 + $0x88] sm:$0xff]
    %v3057 = vld [vmem:[%s2100 + $0x90] sm:$0xff]
    %v3058 = vld [vmem:[%s2100 + $0x98] sm:$0xff]
    %v3059 = vld [vmem:[%s2100 + $0xa0] sm:$0xff]
    %v3060 = vld [vmem:[%s2100 + $0xa8] sm:$0xff]
    %v3061 = vld [vmem:[%s2100 + $0xb0] sm:$0xff]
    %v3062 = vld [vmem:[%s2100 + $0xb8] sm:$0xff]
    %v3063 = vld [vmem:[%s2100 + $0xc0] sm:$0xff]
    %v3064 = vld [vmem:[%s2100 + $0xc8] sm:$0xff]
    %v3065 = vld [vmem:[%s2100 + $0xd0] sm:$0xff]
    %v3066 = vld [vmem:[%s2100 + $0xd8] sm:$0xff]
    %v3067 = vld [vmem:[%s2100 + $0xe0] sm:$0xff]
    %v3068 = vld [vmem:[%s2100 + $0xe8] sm:$0xff]
    %v3069 = vld [vmem:[%s2100 + $0xf0] sm:$0xff]
    %v3070 = vld [vmem:[%s2100 + $0xf8] sm:$0xff]
    %v3071 = vld [vmem:[%s2100 + $0x100] sm:$0xff]
    %v3072 = vld [vmem:[%s2100 + $0x108] sm:$0x7]
    %v3073 = vrot.slane %v2921, 1
    %v3074 = vrot.slane %v2922, 1
    %v3075 = vrot.slane %v2923, 1
    %3076 = vrot.lane.b32.xlu0 %v3073, 98
    %v3077 = vpop.permute.xlu0 %3076
    %3078 = vrot.lane.b32.xlu0 %v3074, 98
    %v3079 = vpop.permute.xlu0 %3078
    %3080 = vrot.lane.b32.xlu0 %v3075, 98
    %v3081 = vpop.permute.xlu0 %3080
    %v3082 = vsel %vm2968, %v3077, %v3079
    %v3083 = vsel %vm2968, %v3079, %v3081
    %v3086 = vsel %vm991, %v3081, 0
    %v3089 = vsel %vm2035, %v3072, 0
    %3091 = vmatpush.msra.mxu0 %v3054
    %3092 = vmatpush.msra.mxu0 %v3053
    %3093 = vmatpush.msra.mxu0 %v3052
    %3094 = vmatpush.msra.mxu0 %v3051
    %3095 = vmatpush.msra.mxu0 %v3050
    %3096 = vmatpush.msra.mxu0 %v3049
    %3097 = vmatpush.msra.mxu0 %v3048
    %3098 = vmatpush.msra.mxu0 %v3047
    %3099 = vmatpush.msra.mxu0 %v3046
    %3100 = vmatpush.msra.mxu0 %v3045
    %3101 = vmatpush.msra.mxu0 %v3044
    %3102 = vmatpush.msra.mxu0 %v3043
    %3103 = vmatpush.msra.mxu0 %v3042
    %3104 = vmatpush.msra.mxu0 %v3041
    %3105 = vmatpush.msra.mxu0 %v3040
    %3106 = vmatpush.msra.mxu0 %v3039
    %3107 = vmatmul.f32.gmra.mxu0 %v3082
    %v3108 = vpop.f32.mrf.mxu0
    %v3109 = vadd.f32 0.0, %v3108
    %3110 = vdwg.mxu0
    %3111 = vmatpush.msra.mxu0 %v3070
    %3112 = vmatpush.msra.mxu0 %v3069
    %3113 = vmatpush.msra.mxu0 %v3068
    %3114 = vmatpush.msra.mxu0 %v3067
    %3115 = vmatpush.msra.mxu0 %v3066
    %3116 = vmatpush.msra.mxu0 %v3065
    %3117 = vmatpush.msra.mxu0 %v3064
    %3118 = vmatpush.msra.mxu0 %v3063
    %3119 = vmatpush.msra.mxu0 %v3062
    %3120 = vmatpush.msra.mxu0 %v3061
    %3121 = vmatpush.msra.mxu0 %v3060
    %3122 = vmatpush.msra.mxu0 %v3059
    %3123 = vmatpush.msra.mxu0 %v3058
    %3124 = vmatpush.msra.mxu0 %v3057
    %3125 = vmatpush.msra.mxu0 %v3056
    %3126 = vmatpush.msra.mxu0 %v3055
    %3127 = vmatmul.f32.gmra.mxu0 %v3083
    %v3128 = vpop.f32.mrf.mxu0
    %v3129 = vadd.f32 %v3109, %v3128
    %3130 = vdwg.mxu0
    %3131 = vmatpush.msra.mxu0 0.0
    %3132 = vmatpush.msra.mxu0 0.0
    %3133 = vmatpush.msra.mxu0 0.0
    %3134 = vmatpush.msra.mxu0 0.0
    %3135 = vmatpush.msra.mxu0 0.0
    %3136 = vmatpush.msra.mxu0 0.0
    %3137 = vmatpush.msra.mxu0 0.0
    %3138 = vmatpush.msra.mxu0 0.0
    %3139 = vmatpush.msra.mxu0 0.0
    %3140 = vmatpush.msra.mxu0 0.0
    %3141 = vmatpush.msra.mxu0 0.0
    %3142 = vmatpush.msra.mxu0 0.0
    %3143 = vmatpush.msra.mxu0 0.0
    %3144 = vmatpush.msra.mxu0 0.0
    %3145 = vmatpush.msra.mxu0 %v3089
    %3146 = vmatpush.msra.mxu0 %v3071
    %3147 = vmatmul.f32.gmra.mxu0 %v3086
    %v3148 = vpop.f32.mrf.mxu0
    %v3149 = vadd.f32 %v3129, %v3148
    %3150 = vdwg.mxu0
    %v3151 = vadd.f32 %v3038, %v3149
    %v3152 = vld [vmem:[%s2208] sm:$0xff]
    %v3153 = vld [vmem:[%s2208 + $0x8] sm:$0xff]
    %v3154 = vld [vmem:[%s2208 + $0x10] sm:$0xff]
    %v3155 = vld [vmem:[%s2208 + $0x18] sm:$0xff]
    %v3156 = vld [vmem:[%s2208 + $0x20] sm:$0xff]
    %v3157 = vld [vmem:[%s2208 + $0x28] sm:$0xff]
    %v3158 = vld [vmem:[%s2208 + $0x30] sm:$0xff]
    %v3159 = vld [vmem:[%s2208 + $0x38] sm:$0xff]
    %v3160 = vld [vmem:[%s2208 + $0x40] sm:$0xff]
    %v3161 = vld [vmem:[%s2208 + $0x48] sm:$0xff]
    %v3162 = vld [vmem:[%s2208 + $0x50] sm:$0xff]
    %v3163 = vld [vmem:[%s2208 + $0x58] sm:$0xff]
    %v3164 = vld [vmem:[%s2208 + $0x60] sm:$0xff]
    %v3165 = vld [vmem:[%s2208 + $0x68] sm:$0xff]
    %v3166 = vld [vmem:[%s2208 + $0x70] sm:$0xff]
    %v3167 = vld [vmem:[%s2208 + $0x78] sm:$0xff]
    %v3168 = vld [vmem:[%s2208 + $0x80] sm:$0xff]
    %v3169 = vld [vmem:[%s2208 + $0x88] sm:$0xff]
    %v3170 = vld [vmem:[%s2208 + $0x90] sm:$0xff]
    %v3171 = vld [vmem:[%s2208 + $0x98] sm:$0xff]
    %v3172 = vld [vmem:[%s2208 + $0xa0] sm:$0xff]
    %v3173 = vld [vmem:[%s2208 + $0xa8] sm:$0xff]
    %v3174 = vld [vmem:[%s2208 + $0xb0] sm:$0xff]
    %v3175 = vld [vmem:[%s2208 + $0xb8] sm:$0xff]
    %v3176 = vld [vmem:[%s2208 + $0xc0] sm:$0xff]
    %v3177 = vld [vmem:[%s2208 + $0xc8] sm:$0xff]
    %v3178 = vld [vmem:[%s2208 + $0xd0] sm:$0xff]
    %v3179 = vld [vmem:[%s2208 + $0xd8] sm:$0xff]
    %v3180 = vld [vmem:[%s2208 + $0xe0] sm:$0xff]
    %v3181 = vld [vmem:[%s2208 + $0xe8] sm:$0xff]
    %v3182 = vld [vmem:[%s2208 + $0xf0] sm:$0xff]
    %v3183 = vld [vmem:[%s2208 + $0xf8] sm:$0xff]
    %v3184 = vld [vmem:[%s2208 + $0x100] sm:$0xff]
    %v3185 = vld [vmem:[%s2208 + $0x108] sm:$0x7]
    %v3186 = vrot.slane %v2921, 2
    %v3187 = vrot.slane %v2922, 2
    %v3188 = vrot.slane %v2923, 2
    %3189 = vrot.lane.b32.xlu0 %v3186, 98
    %v3190 = vpop.permute.xlu0 %3189
    %3191 = vrot.lane.b32.xlu0 %v3187, 98
    %v3192 = vpop.permute.xlu0 %3191
    %3193 = vrot.lane.b32.xlu0 %v3188, 98
    %v3194 = vpop.permute.xlu0 %3193
    %v3195 = vsel %vm2968, %v3190, %v3192
    %v3196 = vsel %vm2968, %v3192, %v3194
    %v3199 = vsel %vm991, %v3194, 0
    %v3202 = vsel %vm2035, %v3185, 0
    %3204 = vmatpush.msra.mxu0 %v3167
    %3205 = vmatpush.msra.mxu0 %v3166
    %3206 = vmatpush.msra.mxu0 %v3165
    %3207 = vmatpush.msra.mxu0 %v3164
    %3208 = vmatpush.msra.mxu0 %v3163
    %3209 = vmatpush.msra.mxu0 %v3162
    %3210 = vmatpush.msra.mxu0 %v3161
    %3211 = vmatpush.msra.mxu0 %v3160
    %3212 = vmatpush.msra.mxu0 %v3159
    %3213 = vmatpush.msra.mxu0 %v3158
    %3214 = vmatpush.msra.mxu0 %v3157
    %3215 = vmatpush.msra.mxu0 %v3156
    %3216 = vmatpush.msra.mxu0 %v3155
    %3217 = vmatpush.msra.mxu0 %v3154
    %3218 = vmatpush.msra.mxu0 %v3153
    %3219 = vmatpush.msra.mxu0 %v3152
    %3220 = vmatmul.f32.gmra.mxu0 %v3195
    %v3221 = vpop.f32.mrf.mxu0
    %v3222 = vadd.f32 0.0, %v3221
    %3223 = vdwg.mxu0
    %3224 = vmatpush.msra.mxu0 %v3183
    %3225 = vmatpush.msra.mxu0 %v3182
    %3226 = vmatpush.msra.mxu0 %v3181
    %3227 = vmatpush.msra.mxu0 %v3180
    %3228 = vmatpush.msra.mxu0 %v3179
    %3229 = vmatpush.msra.mxu0 %v3178
    %3230 = vmatpush.msra.mxu0 %v3177
    %3231 = vmatpush.msra.mxu0 %v3176
    %3232 = vmatpush.msra.mxu0 %v3175
    %3233 = vmatpush.msra.mxu0 %v3174
    %3234 = vmatpush.msra.mxu0 %v3173
    %3235 = vmatpush.msra.mxu0 %v3172
    %3236 = vmatpush.msra.mxu0 %v3171
    %3237 = vmatpush.msra.mxu0 %v3170
    %3238 = vmatpush.msra.mxu0 %v3169
    %3239 = vmatpush.msra.mxu0 %v3168
    %3240 = vmatmul.f32.gmra.mxu0 %v3196
    %v3241 = vpop.f32.mrf.mxu0
    %v3242 = vadd.f32 %v3222, %v3241
    %3243 = vdwg.mxu0
    %3244 = vmatpush.msra.mxu0 0.0
    %3245 = vmatpush.msra.mxu0 0.0
    %3246 = vmatpush.msra.mxu0 0.0
    %3247 = vmatpush.msra.mxu0 0.0
    %3248 = vmatpush.msra.mxu0 0.0
    %3249 = vmatpush.msra.mxu0 0.0
    %3250 = vmatpush.msra.mxu0 0.0
    %3251 = vmatpush.msra.mxu0 0.0
    %3252 = vmatpush.msra.mxu0 0.0
    %3253 = vmatpush.msra.mxu0 0.0
    %3254 = vmatpush.msra.mxu0 0.0
    %3255 = vmatpush.msra.mxu0 0.0
    %3256 = vmatpush.msra.mxu0 0.0
    %3257 = vmatpush.msra.mxu0 0.0
    %3258 = vmatpush.msra.mxu0 %v3202
    %3259 = vmatpush.msra.mxu0 %v3184
    %3260 = vmatmul.f32.gmra.mxu0 %v3199
    %v3261 = vpop.f32.mrf.mxu0
    %v3262 = vadd.f32 %v3242, %v3261
    %3263 = vdwg.mxu0
    %v3264 = vadd.f32 %v3151, %v3262
    %v3265 = vld [vmem:[%s2314] sm:$0xff]
    %v3266 = vld [vmem:[%s2314 + $0x8] sm:$0xff]
    %v3267 = vld [vmem:[%s2314 + $0x10] sm:$0xff]
    %v3268 = vld [vmem:[%s2314 + $0x18] sm:$0xff]
    %v3269 = vld [vmem:[%s2314 + $0x20] sm:$0xff]
    %v3270 = vld [vmem:[%s2314 + $0x28] sm:$0xff]
    %v3271 = vld [vmem:[%s2314 + $0x30] sm:$0xff]
    %v3272 = vld [vmem:[%s2314 + $0x38] sm:$0xff]
    %v3273 = vld [vmem:[%s2314 + $0x40] sm:$0xff]
    %v3274 = vld [vmem:[%s2314 + $0x48] sm:$0xff]
    %v3275 = vld [vmem:[%s2314 + $0x50] sm:$0xff]
    %v3276 = vld [vmem:[%s2314 + $0x58] sm:$0xff]
    %v3277 = vld [vmem:[%s2314 + $0x60] sm:$0xff]
    %v3278 = vld [vmem:[%s2314 + $0x68] sm:$0xff]
    %v3279 = vld [vmem:[%s2314 + $0x70] sm:$0xff]
    %v3280 = vld [vmem:[%s2314 + $0x78] sm:$0xff]
    %v3281 = vld [vmem:[%s2314 + $0x80] sm:$0xff]
    %v3282 = vld [vmem:[%s2314 + $0x88] sm:$0xff]
    %v3283 = vld [vmem:[%s2314 + $0x90] sm:$0xff]
    %v3284 = vld [vmem:[%s2314 + $0x98] sm:$0xff]
    %v3285 = vld [vmem:[%s2314 + $0xa0] sm:$0xff]
    %v3286 = vld [vmem:[%s2314 + $0xa8] sm:$0xff]
    %v3287 = vld [vmem:[%s2314 + $0xb0] sm:$0xff]
    %v3288 = vld [vmem:[%s2314 + $0xb8] sm:$0xff]
    %v3289 = vld [vmem:[%s2314 + $0xc0] sm:$0xff]
    %v3290 = vld [vmem:[%s2314 + $0xc8] sm:$0xff]
    %v3291 = vld [vmem:[%s2314 + $0xd0] sm:$0xff]
    %v3292 = vld [vmem:[%s2314 + $0xd8] sm:$0xff]
    %v3293 = vld [vmem:[%s2314 + $0xe0] sm:$0xff]
    %v3294 = vld [vmem:[%s2314 + $0xe8] sm:$0xff]
    %v3295 = vld [vmem:[%s2314 + $0xf0] sm:$0xff]
    %v3296 = vld [vmem:[%s2314 + $0xf8] sm:$0xff]
    %v3297 = vld [vmem:[%s2314 + $0x100] sm:$0xff]
    %v3298 = vld [vmem:[%s2314 + $0x108] sm:$0x7]
    %v3299 = vrot.slane %v2921, 3
    %v3300 = vrot.slane %v2922, 3
    %v3301 = vrot.slane %v2923, 3
    %3302 = vrot.lane.b32.xlu0 %v3299, 98
    %v3303 = vpop.permute.xlu0 %3302
    %3304 = vrot.lane.b32.xlu0 %v3300, 98
    %v3305 = vpop.permute.xlu0 %3304
    %3306 = vrot.lane.b32.xlu0 %v3301, 98
    %v3307 = vpop.permute.xlu0 %3306
    %v3308 = vsel %vm2968, %v3303, %v3305
    %v3309 = vsel %vm2968, %v3305, %v3307
    %v3312 = vsel %vm991, %v3307, 0
    %v3315 = vsel %vm2035, %v3298, 0
    %3317 = vmatpush.msra.mxu0 %v3280
    %3318 = vmatpush.msra.mxu0 %v3279
    %3319 = vmatpush.msra.mxu0 %v3278
    %3320 = vmatpush.msra.mxu0 %v3277
    %3321 = vmatpush.msra.mxu0 %v3276
    %3322 = vmatpush.msra.mxu0 %v3275
    %3323 = vmatpush.msra.mxu0 %v3274
    %3324 = vmatpush.msra.mxu0 %v3273
    %3325 = vmatpush.msra.mxu0 %v3272
    %3326 = vmatpush.msra.mxu0 %v3271
    %3327 = vmatpush.msra.mxu0 %v3270
    %3328 = vmatpush.msra.mxu0 %v3269
    %3329 = vmatpush.msra.mxu0 %v3268
    %3330 = vmatpush.msra.mxu0 %v3267
    %3331 = vmatpush.msra.mxu0 %v3266
    %3332 = vmatpush.msra.mxu0 %v3265
    %3333 = vmatmul.f32.gmra.mxu0 %v3308
    %v3334 = vpop.f32.mrf.mxu0
    %v3335 = vadd.f32 0.0, %v3334
    %3336 = vdwg.mxu0
    %3337 = vmatpush.msra.mxu0 %v3296
    %3338 = vmatpush.msra.mxu0 %v3295
    %3339 = vmatpush.msra.mxu0 %v3294
    %3340 = vmatpush.msra.mxu0 %v3293
    %3341 = vmatpush.msra.mxu0 %v3292
    %3342 = vmatpush.msra.mxu0 %v3291
    %3343 = vmatpush.msra.mxu0 %v3290
    %3344 = vmatpush.msra.mxu0 %v3289
    %3345 = vmatpush.msra.mxu0 %v3288
    %3346 = vmatpush.msra.mxu0 %v3287
    %3347 = vmatpush.msra.mxu0 %v3286
    %3348 = vmatpush.msra.mxu0 %v3285
    %3349 = vmatpush.msra.mxu0 %v3284
    %3350 = vmatpush.msra.mxu0 %v3283
    %3351 = vmatpush.msra.mxu0 %v3282
    %3352 = vmatpush.msra.mxu0 %v3281
    %3353 = vmatmul.f32.gmra.mxu0 %v3309
    %v3354 = vpop.f32.mrf.mxu0
    %v3355 = vadd.f32 %v3335, %v3354
    %3356 = vdwg.mxu0
    %3357 = vmatpush.msra.mxu0 0.0
    %3358 = vmatpush.msra.mxu0 0.0
    %3359 = vmatpush.msra.mxu0 0.0
    %3360 = vmatpush.msra.mxu0 0.0
    %3361 = vmatpush.msra.mxu0 0.0
    %3362 = vmatpush.msra.mxu0 0.0
    %3363 = vmatpush.msra.mxu0 0.0
    %3364 = vmatpush.msra.mxu0 0.0
    %3365 = vmatpush.msra.mxu0 0.0
    %3366 = vmatpush.msra.mxu0 0.0
    %3367 = vmatpush.msra.mxu0 0.0
    %3368 = vmatpush.msra.mxu0 0.0
    %3369 = vmatpush.msra.mxu0 0.0
    %3370 = vmatpush.msra.mxu0 0.0
    %3371 = vmatpush.msra.mxu0 %v3315
    %3372 = vmatpush.msra.mxu0 %v3297
    %3373 = vmatmul.f32.gmra.mxu0 %v3312
    %v3374 = vpop.f32.mrf.mxu0
    %v3375 = vadd.f32 %v3355, %v3374
    %3376 = vdwg.mxu0
    %v3377 = vadd.f32 %v3264, %v3375
    %v3378 = vld [vmem:[%s2420] sm:$0xff]
    %v3379 = vld [vmem:[%s2420 + $0x8] sm:$0xff]
    %v3380 = vld [vmem:[%s2420 + $0x10] sm:$0xff]
    %v3381 = vld [vmem:[%s2420 + $0x18] sm:$0xff]
    %v3382 = vld [vmem:[%s2420 + $0x20] sm:$0xff]
    %v3383 = vld [vmem:[%s2420 + $0x28] sm:$0xff]
    %v3384 = vld [vmem:[%s2420 + $0x30] sm:$0xff]
    %v3385 = vld [vmem:[%s2420 + $0x38] sm:$0xff]
    %v3386 = vld [vmem:[%s2420 + $0x40] sm:$0xff]
    %v3387 = vld [vmem:[%s2420 + $0x48] sm:$0xff]
    %v3388 = vld [vmem:[%s2420 + $0x50] sm:$0xff]
    %v3389 = vld [vmem:[%s2420 + $0x58] sm:$0xff]
    %v3390 = vld [vmem:[%s2420 + $0x60] sm:$0xff]
    %v3391 = vld [vmem:[%s2420 + $0x68] sm:$0xff]
    %v3392 = vld [vmem:[%s2420 + $0x70] sm:$0xff]
    %v3393 = vld [vmem:[%s2420 + $0x78] sm:$0xff]
    %v3394 = vld [vmem:[%s2420 + $0x80] sm:$0xff]
    %v3395 = vld [vmem:[%s2420 + $0x88] sm:$0xff]
    %v3396 = vld [vmem:[%s2420 + $0x90] sm:$0xff]
    %v3397 = vld [vmem:[%s2420 + $0x98] sm:$0xff]
    %v3398 = vld [vmem:[%s2420 + $0xa0] sm:$0xff]
    %v3399 = vld [vmem:[%s2420 + $0xa8] sm:$0xff]
    %v3400 = vld [vmem:[%s2420 + $0xb0] sm:$0xff]
    %v3401 = vld [vmem:[%s2420 + $0xb8] sm:$0xff]
    %v3402 = vld [vmem:[%s2420 + $0xc0] sm:$0xff]
    %v3403 = vld [vmem:[%s2420 + $0xc8] sm:$0xff]
    %v3404 = vld [vmem:[%s2420 + $0xd0] sm:$0xff]
    %v3405 = vld [vmem:[%s2420 + $0xd8] sm:$0xff]
    %v3406 = vld [vmem:[%s2420 + $0xe0] sm:$0xff]
    %v3407 = vld [vmem:[%s2420 + $0xe8] sm:$0xff]
    %v3408 = vld [vmem:[%s2420 + $0xf0] sm:$0xff]
    %v3409 = vld [vmem:[%s2420 + $0xf8] sm:$0xff]
    %v3410 = vld [vmem:[%s2420 + $0x100] sm:$0xff]
    %v3411 = vld [vmem:[%s2420 + $0x108] sm:$0x7]
    %v3412 = vrot.slane %v2921, 4
    %v3413 = vrot.slane %v2922, 4
    %v3414 = vrot.slane %v2923, 4
    %3415 = vrot.lane.b32.xlu0 %v3412, 98
    %v3416 = vpop.permute.xlu0 %3415
    %3417 = vrot.lane.b32.xlu0 %v3413, 98
    %v3418 = vpop.permute.xlu0 %3417
    %3419 = vrot.lane.b32.xlu0 %v3414, 98
    %v3420 = vpop.permute.xlu0 %3419
    %v3421 = vsel %vm2968, %v3416, %v3418
    %v3422 = vsel %vm2968, %v3418, %v3420
    %v3425 = vsel %vm991, %v3420, 0
    %v3428 = vsel %vm2035, %v3411, 0
    %3430 = vmatpush.msra.mxu0 %v3393
    %3431 = vmatpush.msra.mxu0 %v3392
    %3432 = vmatpush.msra.mxu0 %v3391
    %3433 = vmatpush.msra.mxu0 %v3390
    %3434 = vmatpush.msra.mxu0 %v3389
    %3435 = vmatpush.msra.mxu0 %v3388
    %3436 = vmatpush.msra.mxu0 %v3387
    %3437 = vmatpush.msra.mxu0 %v3386
    %3438 = vmatpush.msra.mxu0 %v3385
    %3439 = vmatpush.msra.mxu0 %v3384
    %3440 = vmatpush.msra.mxu0 %v3383
    %3441 = vmatpush.msra.mxu0 %v3382
    %3442 = vmatpush.msra.mxu0 %v3381
    %3443 = vmatpush.msra.mxu0 %v3380
    %3444 = vmatpush.msra.mxu0 %v3379
    %3445 = vmatpush.msra.mxu0 %v3378
    %3446 = vmatmul.f32.gmra.mxu0 %v3421
    %v3447 = vpop.f32.mrf.mxu0
    %v3448 = vadd.f32 0.0, %v3447
    %3449 = vdwg.mxu0
    %3450 = vmatpush.msra.mxu0 %v3409
    %3451 = vmatpush.msra.mxu0 %v3408
    %3452 = vmatpush.msra.mxu0 %v3407
    %3453 = vmatpush.msra.mxu0 %v3406
    %3454 = vmatpush.msra.mxu0 %v3405
    %3455 = vmatpush.msra.mxu0 %v3404
    %3456 = vmatpush.msra.mxu0 %v3403
    %3457 = vmatpush.msra.mxu0 %v3402
    %3458 = vmatpush.msra.mxu0 %v3401
    %3459 = vmatpush.msra.mxu0 %v3400
    %3460 = vmatpush.msra.mxu0 %v3399
    %3461 = vmatpush.msra.mxu0 %v3398
    %3462 = vmatpush.msra.mxu0 %v3397
    %3463 = vmatpush.msra.mxu0 %v3396
    %3464 = vmatpush.msra.mxu0 %v3395
    %3465 = vmatpush.msra.mxu0 %v3394
    %3466 = vmatmul.f32.gmra.mxu0 %v3422
    %v3467 = vpop.f32.mrf.mxu0
    %v3468 = vadd.f32 %v3448, %v3467
    %3469 = vdwg.mxu0
    %3470 = vmatpush.msra.mxu0 0.0
    %3471 = vmatpush.msra.mxu0 0.0
    %3472 = vmatpush.msra.mxu0 0.0
    %3473 = vmatpush.msra.mxu0 0.0
    %3474 = vmatpush.msra.mxu0 0.0
    %3475 = vmatpush.msra.mxu0 0.0
    %3476 = vmatpush.msra.mxu0 0.0
    %3477 = vmatpush.msra.mxu0 0.0
    %3478 = vmatpush.msra.mxu0 0.0
    %3479 = vmatpush.msra.mxu0 0.0
    %3480 = vmatpush.msra.mxu0 0.0
    %3481 = vmatpush.msra.mxu0 0.0
    %3482 = vmatpush.msra.mxu0 0.0
    %3483 = vmatpush.msra.mxu0 0.0
    %3484 = vmatpush.msra.mxu0 %v3428
    %3485 = vmatpush.msra.mxu0 %v3410
    %3486 = vmatmul.f32.gmra.mxu0 %v3425
    %v3487 = vpop.f32.mrf.mxu0
    %v3488 = vadd.f32 %v3468, %v3487
    %3489 = vdwg.mxu0
    %v3490 = vadd.f32 %v3377, %v3488
    %v3491 = vld [vmem:[%s2526] sm:$0xff]
    %v3492 = vld [vmem:[%s2526 + $0x8] sm:$0xff]
    %v3493 = vld [vmem:[%s2526 + $0x10] sm:$0xff]
    %v3494 = vld [vmem:[%s2526 + $0x18] sm:$0xff]
    %v3495 = vld [vmem:[%s2526 + $0x20] sm:$0xff]
    %v3496 = vld [vmem:[%s2526 + $0x28] sm:$0xff]
    %v3497 = vld [vmem:[%s2526 + $0x30] sm:$0xff]
    %v3498 = vld [vmem:[%s2526 + $0x38] sm:$0xff]
    %v3499 = vld [vmem:[%s2526 + $0x40] sm:$0xff]
    %v3500 = vld [vmem:[%s2526 + $0x48] sm:$0xff]
    %v3501 = vld [vmem:[%s2526 + $0x50] sm:$0xff]
    %v3502 = vld [vmem:[%s2526 + $0x58] sm:$0xff]
    %v3503 = vld [vmem:[%s2526 + $0x60] sm:$0xff]
    %v3504 = vld [vmem:[%s2526 + $0x68] sm:$0xff]
    %v3505 = vld [vmem:[%s2526 + $0x70] sm:$0xff]
    %v3506 = vld [vmem:[%s2526 + $0x78] sm:$0xff]
    %v3507 = vld [vmem:[%s2526 + $0x80] sm:$0xff]
    %v3508 = vld [vmem:[%s2526 + $0x88] sm:$0xff]
    %v3509 = vld [vmem:[%s2526 + $0x90] sm:$0xff]
    %v3510 = vld [vmem:[%s2526 + $0x98] sm:$0xff]
    %v3511 = vld [vmem:[%s2526 + $0xa0] sm:$0xff]
    %v3512 = vld [vmem:[%s2526 + $0xa8] sm:$0xff]
    %v3513 = vld [vmem:[%s2526 + $0xb0] sm:$0xff]
    %v3514 = vld [vmem:[%s2526 + $0xb8] sm:$0xff]
    %v3515 = vld [vmem:[%s2526 + $0xc0] sm:$0xff]
    %v3516 = vld [vmem:[%s2526 + $0xc8] sm:$0xff]
    %v3517 = vld [vmem:[%s2526 + $0xd0] sm:$0xff]
    %v3518 = vld [vmem:[%s2526 + $0xd8] sm:$0xff]
    %v3519 = vld [vmem:[%s2526 + $0xe0] sm:$0xff]
    %v3520 = vld [vmem:[%s2526 + $0xe8] sm:$0xff]
    %v3521 = vld [vmem:[%s2526 + $0xf0] sm:$0xff]
    %v3522 = vld [vmem:[%s2526 + $0xf8] sm:$0xff]
    %v3523 = vld [vmem:[%s2526 + $0x100] sm:$0xff]
    %v3524 = vld [vmem:[%s2526 + $0x108] sm:$0x7]
    %v3525 = vrot.slane %v2921, 5
    %v3526 = vrot.slane %v2922, 5
    %v3527 = vrot.slane %v2923, 5
    %3528 = vrot.lane.b32.xlu0 %v3525, 98
    %v3529 = vpop.permute.xlu0 %3528
    %3530 = vrot.lane.b32.xlu0 %v3526, 98
    %v3531 = vpop.permute.xlu0 %3530
    %3532 = vrot.lane.b32.xlu0 %v3527, 98
    %v3533 = vpop.permute.xlu0 %3532
    %v3534 = vsel %vm2968, %v3529, %v3531
    %v3535 = vsel %vm2968, %v3531, %v3533
    %v3538 = vsel %vm991, %v3533, 0
    %v3541 = vsel %vm2035, %v3524, 0
    %3543 = vmatpush.msra.mxu0 %v3506
    %3544 = vmatpush.msra.mxu0 %v3505
    %3545 = vmatpush.msra.mxu0 %v3504
    %3546 = vmatpush.msra.mxu0 %v3503
    %3547 = vmatpush.msra.mxu0 %v3502
    %3548 = vmatpush.msra.mxu0 %v3501
    %3549 = vmatpush.msra.mxu0 %v3500
    %3550 = vmatpush.msra.mxu0 %v3499
    %3551 = vmatpush.msra.mxu0 %v3498
    %3552 = vmatpush.msra.mxu0 %v3497
    %3553 = vmatpush.msra.mxu0 %v3496
    %3554 = vmatpush.msra.mxu0 %v3495
    %3555 = vmatpush.msra.mxu0 %v3494
    %3556 = vmatpush.msra.mxu0 %v3493
    %3557 = vmatpush.msra.mxu0 %v3492
    %3558 = vmatpush.msra.mxu0 %v3491
    %3559 = vmatmul.f32.gmra.mxu0 %v3534
    %v3560 = vpop.f32.mrf.mxu0
    %v3561 = vadd.f32 0.0, %v3560
    %3562 = vdwg.mxu0
    %3563 = vmatpush.msra.mxu0 %v3522
    %3564 = vmatpush.msra.mxu0 %v3521
    %3565 = vmatpush.msra.mxu0 %v3520
    %3566 = vmatpush.msra.mxu0 %v3519
    %3567 = vmatpush.msra.mxu0 %v3518
    %3568 = vmatpush.msra.mxu0 %v3517
    %3569 = vmatpush.msra.mxu0 %v3516
    %3570 = vmatpush.msra.mxu0 %v3515
    %3571 = vmatpush.msra.mxu0 %v3514
    %3572 = vmatpush.msra.mxu0 %v3513
    %3573 = vmatpush.msra.mxu0 %v3512
    %3574 = vmatpush.msra.mxu0 %v3511
    %3575 = vmatpush.msra.mxu0 %v3510
    %3576 = vmatpush.msra.mxu0 %v3509
    %3577 = vmatpush.msra.mxu0 %v3508
    %3578 = vmatpush.msra.mxu0 %v3507
    %3579 = vmatmul.f32.gmra.mxu0 %v3535
    %v3580 = vpop.f32.mrf.mxu0
    %v3581 = vadd.f32 %v3561, %v3580
    %3582 = vdwg.mxu0
    %3583 = vmatpush.msra.mxu0 0.0
    %3584 = vmatpush.msra.mxu0 0.0
    %3585 = vmatpush.msra.mxu0 0.0
    %3586 = vmatpush.msra.mxu0 0.0
    %3587 = vmatpush.msra.mxu0 0.0
    %3588 = vmatpush.msra.mxu0 0.0
    %3589 = vmatpush.msra.mxu0 0.0
    %3590 = vmatpush.msra.mxu0 0.0
    %3591 = vmatpush.msra.mxu0 0.0
    %3592 = vmatpush.msra.mxu0 0.0
    %3593 = vmatpush.msra.mxu0 0.0
    %3594 = vmatpush.msra.mxu0 0.0
    %3595 = vmatpush.msra.mxu0 0.0
    %3596 = vmatpush.msra.mxu0 0.0
    %3597 = vmatpush.msra.mxu0 %v3541
    %3598 = vmatpush.msra.mxu0 %v3523
    %3599 = vmatmul.f32.gmra.mxu0 %v3538
    %v3600 = vpop.f32.mrf.mxu0
    %v3601 = vadd.f32 %v3581, %v3600
    %3602 = vdwg.mxu0
    %v3603 = vadd.f32 %v3490, %v3601
    %v3604 = vld [vmem:[%s2632] sm:$0xff]
    %v3605 = vld [vmem:[%s2632 + $0x8] sm:$0xff]
    %v3606 = vld [vmem:[%s2632 + $0x10] sm:$0xff]
    %v3607 = vld [vmem:[%s2632 + $0x18] sm:$0xff]
    %v3608 = vld [vmem:[%s2632 + $0x20] sm:$0xff]
    %v3609 = vld [vmem:[%s2632 + $0x28] sm:$0xff]
    %v3610 = vld [vmem:[%s2632 + $0x30] sm:$0xff]
    %v3611 = vld [vmem:[%s2632 + $0x38] sm:$0xff]
    %v3612 = vld [vmem:[%s2632 + $0x40] sm:$0xff]
    %v3613 = vld [vmem:[%s2632 + $0x48] sm:$0xff]
    %v3614 = vld [vmem:[%s2632 + $0x50] sm:$0xff]
    %v3615 = vld [vmem:[%s2632 + $0x58] sm:$0xff]
    %v3616 = vld [vmem:[%s2632 + $0x60] sm:$0xff]
    %v3617 = vld [vmem:[%s2632 + $0x68] sm:$0xff]
    %v3618 = vld [vmem:[%s2632 + $0x70] sm:$0xff]
    %v3619 = vld [vmem:[%s2632 + $0x78] sm:$0xff]
    %v3620 = vld [vmem:[%s2632 + $0x80] sm:$0xff]
    %v3621 = vld [vmem:[%s2632 + $0x88] sm:$0xff]
    %v3622 = vld [vmem:[%s2632 + $0x90] sm:$0xff]
    %v3623 = vld [vmem:[%s2632 + $0x98] sm:$0xff]
    %v3624 = vld [vmem:[%s2632 + $0xa0] sm:$0xff]
    %v3625 = vld [vmem:[%s2632 + $0xa8] sm:$0xff]
    %v3626 = vld [vmem:[%s2632 + $0xb0] sm:$0xff]
    %v3627 = vld [vmem:[%s2632 + $0xb8] sm:$0xff]
    %v3628 = vld [vmem:[%s2632 + $0xc0] sm:$0xff]
    %v3629 = vld [vmem:[%s2632 + $0xc8] sm:$0xff]
    %v3630 = vld [vmem:[%s2632 + $0xd0] sm:$0xff]
    %v3631 = vld [vmem:[%s2632 + $0xd8] sm:$0xff]
    %v3632 = vld [vmem:[%s2632 + $0xe0] sm:$0xff]
    %v3633 = vld [vmem:[%s2632 + $0xe8] sm:$0xff]
    %v3634 = vld [vmem:[%s2632 + $0xf0] sm:$0xff]
    %v3635 = vld [vmem:[%s2632 + $0xf8] sm:$0xff]
    %v3636 = vld [vmem:[%s2632 + $0x100] sm:$0xff]
    %v3637 = vld [vmem:[%s2632 + $0x108] sm:$0x7]
    %v3638 = vrot.slane %v2921, 6
    %v3639 = vrot.slane %v2922, 6
    %v3640 = vrot.slane %v2923, 6
    %3641 = vrot.lane.b32.xlu0 %v3638, 98
    %v3642 = vpop.permute.xlu0 %3641
    %3643 = vrot.lane.b32.xlu0 %v3639, 98
    %v3644 = vpop.permute.xlu0 %3643
    %3645 = vrot.lane.b32.xlu0 %v3640, 98
    %v3646 = vpop.permute.xlu0 %3645
    %v3647 = vsel %vm2968, %v3642, %v3644
    %v3648 = vsel %vm2968, %v3644, %v3646
    %v3651 = vsel %vm991, %v3646, 0
    %v3654 = vsel %vm2035, %v3637, 0
    %3656 = vmatpush.msra.mxu0 %v3619
    %3657 = vmatpush.msra.mxu0 %v3618
    %3658 = vmatpush.msra.mxu0 %v3617
    %3659 = vmatpush.msra.mxu0 %v3616
    %3660 = vmatpush.msra.mxu0 %v3615
    %3661 = vmatpush.msra.mxu0 %v3614
    %3662 = vmatpush.msra.mxu0 %v3613
    %3663 = vmatpush.msra.mxu0 %v3612
    %3664 = vmatpush.msra.mxu0 %v3611
    %3665 = vmatpush.msra.mxu0 %v3610
    %3666 = vmatpush.msra.mxu0 %v3609
    %3667 = vmatpush.msra.mxu0 %v3608
    %3668 = vmatpush.msra.mxu0 %v3607
    %3669 = vmatpush.msra.mxu0 %v3606
    %3670 = vmatpush.msra.mxu0 %v3605
    %3671 = vmatpush.msra.mxu0 %v3604
    %3672 = vmatmul.f32.gmra.mxu0 %v3647
    %v3673 = vpop.f32.mrf.mxu0
    %v3674 = vadd.f32 0.0, %v3673
    %3675 = vdwg.mxu0
    %3676 = vmatpush.msra.mxu0 %v3635
    %3677 = vmatpush.msra.mxu0 %v3634
    %3678 = vmatpush.msra.mxu0 %v3633
    %3679 = vmatpush.msra.mxu0 %v3632
    %3680 = vmatpush.msra.mxu0 %v3631
    %3681 = vmatpush.msra.mxu0 %v3630
    %3682 = vmatpush.msra.mxu0 %v3629
    %3683 = vmatpush.msra.mxu0 %v3628
    %3684 = vmatpush.msra.mxu0 %v3627
    %3685 = vmatpush.msra.mxu0 %v3626
    %3686 = vmatpush.msra.mxu0 %v3625
    %3687 = vmatpush.msra.mxu0 %v3624
    %3688 = vmatpush.msra.mxu0 %v3623
    %3689 = vmatpush.msra.mxu0 %v3622
    %3690 = vmatpush.msra.mxu0 %v3621
    %3691 = vmatpush.msra.mxu0 %v3620
    %3692 = vmatmul.f32.gmra.mxu0 %v3648
    %v3693 = vpop.f32.mrf.mxu0
    %v3694 = vadd.f32 %v3674, %v3693
    %3695 = vdwg.mxu0
    %3696 = vmatpush.msra.mxu0 0.0
    %3697 = vmatpush.msra.mxu0 0.0
    %3698 = vmatpush.msra.mxu0 0.0
    %3699 = vmatpush.msra.mxu0 0.0
    %3700 = vmatpush.msra.mxu0 0.0
    %3701 = vmatpush.msra.mxu0 0.0
    %3702 = vmatpush.msra.mxu0 0.0
    %3703 = vmatpush.msra.mxu0 0.0
    %3704 = vmatpush.msra.mxu0 0.0
    %3705 = vmatpush.msra.mxu0 0.0
    %3706 = vmatpush.msra.mxu0 0.0
    %3707 = vmatpush.msra.mxu0 0.0
    %3708 = vmatpush.msra.mxu0 0.0
    %3709 = vmatpush.msra.mxu0 0.0
    %3710 = vmatpush.msra.mxu0 %v3654
    %3711 = vmatpush.msra.mxu0 %v3636
    %3712 = vmatmul.f32.gmra.mxu0 %v3651
    %v3713 = vpop.f32.mrf.mxu0
    %v3714 = vadd.f32 %v3694, %v3713
    %3715 = vdwg.mxu0
    %v3716 = vadd.f32 %v3603, %v3714
    %v3717 = vld [vmem:[%s2738] sm:$0xff]
    %v3718 = vld [vmem:[%s2738 + $0x8] sm:$0xff]
    %v3719 = vld [vmem:[%s2738 + $0x10] sm:$0xff]
    %v3720 = vld [vmem:[%s2738 + $0x18] sm:$0xff]
    %v3721 = vld [vmem:[%s2738 + $0x20] sm:$0xff]
    %v3722 = vld [vmem:[%s2738 + $0x28] sm:$0xff]
    %v3723 = vld [vmem:[%s2738 + $0x30] sm:$0xff]
    %v3724 = vld [vmem:[%s2738 + $0x38] sm:$0xff]
    %v3725 = vld [vmem:[%s2738 + $0x40] sm:$0xff]
    %v3726 = vld [vmem:[%s2738 + $0x48] sm:$0xff]
    %v3727 = vld [vmem:[%s2738 + $0x50] sm:$0xff]
    %v3728 = vld [vmem:[%s2738 + $0x58] sm:$0xff]
    %v3729 = vld [vmem:[%s2738 + $0x60] sm:$0xff]
    %v3730 = vld [vmem:[%s2738 + $0x68] sm:$0xff]
    %v3731 = vld [vmem:[%s2738 + $0x70] sm:$0xff]
    %v3732 = vld [vmem:[%s2738 + $0x78] sm:$0xff]
    %v3733 = vld [vmem:[%s2738 + $0x80] sm:$0xff]
    %v3734 = vld [vmem:[%s2738 + $0x88] sm:$0xff]
    %v3735 = vld [vmem:[%s2738 + $0x90] sm:$0xff]
    %v3736 = vld [vmem:[%s2738 + $0x98] sm:$0xff]
    %v3737 = vld [vmem:[%s2738 + $0xa0] sm:$0xff]
    %v3738 = vld [vmem:[%s2738 + $0xa8] sm:$0xff]
    %v3739 = vld [vmem:[%s2738 + $0xb0] sm:$0xff]
    %v3740 = vld [vmem:[%s2738 + $0xb8] sm:$0xff]
    %v3741 = vld [vmem:[%s2738 + $0xc0] sm:$0xff]
    %v3742 = vld [vmem:[%s2738 + $0xc8] sm:$0xff]
    %v3743 = vld [vmem:[%s2738 + $0xd0] sm:$0xff]
    %v3744 = vld [vmem:[%s2738 + $0xd8] sm:$0xff]
    %v3745 = vld [vmem:[%s2738 + $0xe0] sm:$0xff]
    %v3746 = vld [vmem:[%s2738 + $0xe8] sm:$0xff]
    %v3747 = vld [vmem:[%s2738 + $0xf0] sm:$0xff]
    %v3748 = vld [vmem:[%s2738 + $0xf8] sm:$0xff]
    %v3749 = vld [vmem:[%s2738 + $0x100] sm:$0xff]
    %v3750 = vld [vmem:[%s2738 + $0x108] sm:$0x7]
    %v3751 = vrot.slane %v2921, 7
    %v3752 = vrot.slane %v2922, 7
    %v3753 = vrot.slane %v2923, 7
    %3754 = vrot.lane.b32.xlu0 %v3751, 98
    %v3755 = vpop.permute.xlu0 %3754
    %3756 = vrot.lane.b32.xlu0 %v3752, 98
    %v3757 = vpop.permute.xlu0 %3756
    %3758 = vrot.lane.b32.xlu0 %v3753, 98
    %v3759 = vpop.permute.xlu0 %3758
    %v3760 = vsel %vm2968, %v3755, %v3757
    %v3761 = vsel %vm2968, %v3757, %v3759
    %v3764 = vsel %vm991, %v3759, 0
    %v3767 = vsel %vm2035, %v3750, 0
    %3769 = vmatpush.msra.mxu0 %v3732
    %3770 = vmatpush.msra.mxu0 %v3731
    %3771 = vmatpush.msra.mxu0 %v3730
    %3772 = vmatpush.msra.mxu0 %v3729
    %3773 = vmatpush.msra.mxu0 %v3728
    %3774 = vmatpush.msra.mxu0 %v3727
    %3775 = vmatpush.msra.mxu0 %v3726
    %3776 = vmatpush.msra.mxu0 %v3725
    %3777 = vmatpush.msra.mxu0 %v3724
    %3778 = vmatpush.msra.mxu0 %v3723
    %3779 = vmatpush.msra.mxu0 %v3722
    %3780 = vmatpush.msra.mxu0 %v3721
    %3781 = vmatpush.msra.mxu0 %v3720
    %3782 = vmatpush.msra.mxu0 %v3719
    %3783 = vmatpush.msra.mxu0 %v3718
    %3784 = vmatpush.msra.mxu0 %v3717
    %3785 = vmatmul.f32.gmra.mxu0 %v3760
    %v3786 = vpop.f32.mrf.mxu0
    %v3787 = vadd.f32 0.0, %v3786
    %3788 = vdwg.mxu0
    %3789 = vmatpush.msra.mxu0 %v3748
    %3790 = vmatpush.msra.mxu0 %v3747
    %3791 = vmatpush.msra.mxu0 %v3746
    %3792 = vmatpush.msra.mxu0 %v3745
    %3793 = vmatpush.msra.mxu0 %v3744
    %3794 = vmatpush.msra.mxu0 %v3743
    %3795 = vmatpush.msra.mxu0 %v3742
    %3796 = vmatpush.msra.mxu0 %v3741
    %3797 = vmatpush.msra.mxu0 %v3740
    %3798 = vmatpush.msra.mxu0 %v3739
    %3799 = vmatpush.msra.mxu0 %v3738
    %3800 = vmatpush.msra.mxu0 %v3737
    %3801 = vmatpush.msra.mxu0 %v3736
    %3802 = vmatpush.msra.mxu0 %v3735
    %3803 = vmatpush.msra.mxu0 %v3734
    %3804 = vmatpush.msra.mxu0 %v3733
    %3805 = vmatmul.f32.gmra.mxu0 %v3761
    %v3806 = vpop.f32.mrf.mxu0
    %v3807 = vadd.f32 %v3787, %v3806
    %3808 = vdwg.mxu0
    %3809 = vmatpush.msra.mxu0 0.0
    %3810 = vmatpush.msra.mxu0 0.0
    %3811 = vmatpush.msra.mxu0 0.0
    %3812 = vmatpush.msra.mxu0 0.0
    %3813 = vmatpush.msra.mxu0 0.0
    %3814 = vmatpush.msra.mxu0 0.0
    %3815 = vmatpush.msra.mxu0 0.0
    %3816 = vmatpush.msra.mxu0 0.0
    %3817 = vmatpush.msra.mxu0 0.0
    %3818 = vmatpush.msra.mxu0 0.0
    %3819 = vmatpush.msra.mxu0 0.0
    %3820 = vmatpush.msra.mxu0 0.0
    %3821 = vmatpush.msra.mxu0 0.0
    %3822 = vmatpush.msra.mxu0 0.0
    %3823 = vmatpush.msra.mxu0 %v3767
    %3824 = vmatpush.msra.mxu0 %v3749
    %3825 = vmatmul.f32.gmra.mxu0 %v3764
    %v3826 = vpop.f32.mrf.mxu0
    %v3827 = vadd.f32 %v3807, %v3826
    %3828 = vdwg.mxu0
    %v3829 = vadd.f32 %v3716, %v3827
    %v3830 = vmax.f32 %v3829, 0.0
    %v3831 = vld [vmem:[%s8] sm:$0xff]
    %v3832 = vld [vmem:[%s8 + $0x8] sm:$0xff]
    %v3833 = vld [vmem:[%s8 + $0x10] sm:$0xff]
    %v3834 = vld [vmem:[%s8 + $0x18] sm:$0xff]
    %v3835 = vld [vmem:[%s9] sm:$0x1]
    %v3837 = vsel %vm2850, %v3830, 0
    %3839 = vmatpush.msra.mxu0 0.0
    %3840 = vmatpush.msra.mxu0 0.0
    %3841 = vmatpush.msra.mxu0 0.0
    %3842 = vmatpush.msra.mxu0 0.0
    %3843 = vmatpush.msra.mxu0 0.0
    %3844 = vmatpush.msra.mxu0 0.0
    %3845 = vmatpush.msra.mxu0 0.0
    %3846 = vmatpush.msra.mxu0 0.0
    %3847 = vmatpush.msra.mxu0 0.0
    %3848 = vmatpush.msra.mxu0 0.0
    %3849 = vmatpush.msra.mxu0 0.0
    %3850 = vmatpush.msra.mxu0 0.0
    %3851 = vmatpush.msra.mxu0 %v3834
    %3852 = vmatpush.msra.mxu0 %v3833
    %3853 = vmatpush.msra.mxu0 %v3832
    %3854 = vmatpush.msra.mxu0 %v3831
    %3855 = vmatmul.f32.gmra.mxu0 %v3837
    %v3856 = vpop.f32.mrf.mxu0
    %v3857 = vadd.f32 %v3835, %v3856
    %3858 = vdwg.mxu0
    %3859 = vst.msk [vmem:[#allocation8 + $0x1] sm:$0x1] %vm2874, %v3857
    // Predicated region
    $region42: #{conv_classifier_forward.1} parent=1 // pred_check
      _
    $region43: #{conv_classifier_forward.1} parent=1 // pred_check_branch
      %3861 = sbr.rel (0) target = $region45
    $region44: #{conv_classifier_forward.1} parent=1 // pred_region
      %3863 = vsyncadd [#allocation9], 0
      %s3865 = sshll.u32 [#allocation8], 4
      %s3866 = int_to_ptr.vmem [resolvable:$true] %s3865
      %s3867 = sshll.u32 %s10, 4
      %s3868 = int_to_ptr.hbm [resolvable:$true] %s3867
      %3870 = dma.vmem_to_hbm [thread:$0]  %s3866, 32, %s3868, [#allocation9]
    $region45: #{conv_classifier_forward.1} parent=1 // pred_fallthru
      _
    // Predicated region
    $region46: #{conv_classifier_forward.1} parent=1 // pred_check
      _
    $region47: #{conv_classifier_forward.1} parent=1 // pred_check_branch
      %3872 = sbr.rel (0) target = $region49
    $region48: #{conv_classifier_forward.1} parent=1 // pred_region
      %3874 = dma.done [#allocation9], 32
    $region49: #{conv_classifier_forward.1} parent=1 // pred_fallthru
      _
    %3875 = vsyncpa [#allocation9], 1

</llo_original>
